<compile_context>
chip_gen: v7x
topology: tpu7x:2x2x1
jax: 0.10.0
libtpu: 0.0.40
codegen_flags: <defaults>
</compile_context>

<pallas_src>
import functools
import math

import jax
import jax.numpy as jnp
import numpy as np
from jax.experimental import pallas as pl
from jax.experimental.pallas import tpu as pltpu


# ---------------------------------------------------------------------------
# Geometry helpers
# ---------------------------------------------------------------------------
def _conv_geometry(h, w):
    oh1, ow1 = (h - 8) // 4 + 1, (w - 8) // 4 + 1
    oh2, ow2 = (oh1 - 4) // 2 + 1, (ow1 - 4) // 2 + 1
    oh3, ow3 = (oh2 - 3) // 1 + 1, (ow2 - 3) // 1 + 1
    return (oh1, ow1), (oh2, ow2), (oh3, ow3)


def _build_patch_indices(cin, ow3, n3, r_pad):
    """Static gather indices for the conv1 patch matrix, pre-expanded into
    (conv2 kernel offset t, conv3 kernel offset u, conv3 position q) row order.

    Row m = t*r_pad + rr, rr = u*n3 + q (rows rr >= 9*n3 are padding).
    Column k = (i*8 + j)*cin + ch  (conv1 8x8 kernel position, input channel),
    matching W1 arranged as transpose(OIHW,(2,3,1,0)).reshape(64*cin, 32).
    """
    rr = np.arange(r_pad)
    valid = rr < 9 * n3
    u = np.where(valid, rr // n3, 0)
    q = np.where(valid, rr % n3, 0)
    ui, uj = u // 3, u % 3                     # conv3 kernel offset
    qr, qc = q // ow3, q % ow3                 # conv3 output position
    c2r, c2c = qr + ui, qc + uj                # conv2 output position (r_pad,)

    t = np.arange(16)
    ti, tj = t // 4, t % 4                     # conv2 kernel offset
    c1r = (2 * c2r[None, :] + ti[:, None]).reshape(16 * r_pad)   # conv1 position
    c1c = (2 * c2c[None, :] + tj[:, None]).reshape(16 * r_pad)

    k = np.arange(64 * cin)
    f, ch = k // cin, k % cin
    i, j = f // 8, f % 8                       # conv1 kernel position
    row_idx = 4 * c1r[:, None] + i[None, :]    # (M, 64*cin) image row
    col_idx = 4 * c1c[:, None] + j[None, :]    # (M, 64*cin) image col
    ch_idx = np.broadcast_to(ch[None, :], row_idx.shape)
    return (jnp.asarray(ch_idx, jnp.int32),
            jnp.asarray(row_idx, jnp.int32),
            jnp.asarray(col_idx, jnp.int32))


# ---------------------------------------------------------------------------
# Fused Pallas kernel: conv1+conv2+conv3+FC1+FC2 for one sample per grid step
# ---------------------------------------------------------------------------
def _dqn_fused_kernel(p1e_ref, goal_ref, w1_ref, b1_ref, w2_ref, b2_ref,
                      w3_ref, b3_ref, wf1_ref, wg_ref, bf1_ref,
                      wf2_ref, bf2_ref, out_ref, *, n3, r_pad):
    f32 = jnp.float32
    w1 = w1_ref[...]                                   # (64*cin, 32)
    b1 = b1_ref[...]                                   # (1, 32)

    # ---- conv1 + conv2, fused over the 16 conv2 kernel offsets --------------
    acc2 = jnp.zeros((r_pad, 64), f32)
    for t in range(16):
        patches = p1e_ref[0, t * r_pad:(t + 1) * r_pad, :]          # (r_pad, K1)
        a1 = jnp.dot(patches, w1, preferred_element_type=f32) + b1
        a1 = jnp.maximum(a1, 0.0)                                    # conv1 ReLU
        acc2 = acc2 + jnp.dot(a1, w2_ref[t], preferred_element_type=f32)
    y2 = jnp.maximum(acc2 + b2_ref[...], 0.0)                        # conv2 ReLU

    # ---- conv3: sum over its 9 kernel offsets --------------------------------
    acc3 = jnp.zeros((n3, 64), f32)
    for u in range(9):
        acc3 = acc3 + jnp.dot(y2[u * n3:(u + 1) * n3, :], w3_ref[u],
                              preferred_element_type=f32)
    y3 = jnp.maximum(acc3 + b3_ref[...], 0.0)                        # (n3, 64)

    # ---- FC1 with split feature / goal weights -------------------------------
    h = jnp.dot(goal_ref[0], wg_ref[...], preferred_element_type=f32)  # (1,512)
    for q in range(n3):
        h = h + jnp.dot(y3[q:q + 1, :], wf1_ref[q], preferred_element_type=f32)
    h = jnp.maximum(h + bf1_ref[...], 0.0)

    # ---- FC2 (lane-padded, lane-dense output store) ---------------------------
    out = jnp.dot(h, wf2_ref[...], preferred_element_type=f32) + bf2_ref[...]
    out_ref[0] = out


# ---------------------------------------------------------------------------
# Forward wrapper
# ---------------------------------------------------------------------------
@jax.jit
def dqn_forward(params, state_and_goal):
    B, _, H, W = state_and_goal.shape
    cin = params["c1_w"].shape[1]
    A = params["fc2_w"].shape[1]
    (oh1, ow1), (oh2, ow2), (oh3, ow3) = _conv_geometry(H, W)
    assert oh3 >= 1 and ow3 >= 1, "input too small for the 8/4/3 conv stack"
    n3 = oh3 * ow3
    r_pad = ((9 * n3 + 7) // 8) * 8            # sublane-aligned rows per offset
    M = 16 * r_pad                             # expanded patch rows per sample
    K1 = 64 * cin
    NP = ((A + 127) // 128) * 128              # lane-padded output width

    # goal = state_and_goal[:, -1, 0, :3], zero-padded to 8 lanes
    goal = state_and_goal[:, -1, 0, :3]
    goal_p = jnp.pad(goal, ((0, 0), (0, 5)))[:, None, :]              # (B,1,8)

    # conv1 patch matrix (expanded) via a single gather; folds NCHW->NHWC away.
    ch_idx, row_idx, col_idx = _build_patch_indices(cin, ow3, n3, r_pad)
    p1e = state_and_goal[:, ch_idx, row_idx, col_idx]                 # (B,M,K1)

    # weights rearranged for the fused kernel (constant-folded under jit)
    w1 = jnp.transpose(params["c1_w"], (2, 3, 1, 0)).reshape(K1, 32)
    b1 = params["c1_b"].reshape(1, 32)
    w2 = jnp.transpose(params["c2_w"], (2, 3, 1, 0)).reshape(16, 32, 64)
    b2 = params["c2_b"].reshape(1, 64)
    w3 = jnp.transpose(params["c3_w"], (2, 3, 1, 0)).reshape(9, 64, 64)
    b3 = params["c3_b"].reshape(1, 64)
    # fc1 split: conv features (PyTorch flatten order c*n3+q) and goal part
    wf1 = params["fc1_w"][:64 * n3].reshape(64, n3, 512).transpose(1, 0, 2)
    wg = jnp.pad(params["fc1_w"][64 * n3:], ((0, 5), (0, 0)))         # (8, 512)
    bf1 = params["fc1_b"].reshape(1, 512)
    wf2 = jnp.pad(params["fc2_w"], ((0, 0), (0, NP - A)))             # (512, NP)
    bf2 = jnp.pad(params["fc2_b"], (0, NP - A)).reshape(1, NP)

    full2 = lambda shape: pl.BlockSpec(shape, lambda b: (0, 0))
    full3 = lambda shape: pl.BlockSpec(shape, lambda b: (0, 0, 0))

    flops_per_sample = 2 * (M * K1 * 32 + 16 * r_pad * 32 * 64
                            + 9 * n3 * 64 * 64 + n3 * 64 * 512 + 8 * 512
                            + 512 * NP)
    bytes_weights = 4 * (K1 * 32 + 16 * 32 * 64 + 9 * 64 * 64 + n3 * 64 * 512
                         + 8 * 512 + 512 * NP + 32 + 64 + 64 + 512 + NP)
    bytes_per_sample = 4 * (M * K1 + 8 + NP)

    out = pl.pallas_call(
        functools.partial(_dqn_fused_kernel, n3=n3, r_pad=r_pad),
        out_shape=jax.ShapeDtypeStruct((B, 1, NP), jnp.float32),
        grid=(B,),
        in_specs=[
            pl.BlockSpec((1, M, K1), lambda b: (b, 0, 0)),    # expanded patches
            pl.BlockSpec((1, 1, 8), lambda b: (b, 0, 0)),     # goal (padded)
            full2((K1, 32)), full2((1, 32)),                  # conv1 w, b
            full3((16, 32, 64)), full2((1, 64)),              # conv2 w, b
            full3((9, 64, 64)), full2((1, 64)),               # conv3 w, b
            full3((n3, 64, 512)), full2((8, 512)), full2((1, 512)),  # fc1
            full2((512, NP)), full2((1, NP)),                 # fc2
        ],
        out_specs=pl.BlockSpec((1, 1, NP), lambda b: (b, 0, 0)),
        compiler_params=pltpu.CompilerParams(
            dimension_semantics=("parallel",),
            vmem_limit_bytes=32 * 1024 * 1024),
        cost_estimate=pl.CostEstimate(
            flops=B * flops_per_sample,
            transcendentals=0,
            bytes_accessed=B * bytes_per_sample + bytes_weights),
    )(p1e, goal_p, w1, b1, w2, b2, w3, b3, wf1, wg, bf1, wf2, bf2)

    return out[:, 0, :A]


# ---------------------------------------------------------------------------
# Parameter init (deterministic, PyTorch-default-style uniform(-1/sqrt(fan_in)))
# ---------------------------------------------------------------------------
def _uniform(key, shape, fan_in):
    bound = 1.0 / math.sqrt(fan_in)
    return jax.random.uniform(key, shape, jnp.float32, -bound, bound)


def init_dqn_params(key, input_shape, num_actions):
    cin, H, W = input_shape
    (_, _), (_, _), (oh3, ow3) = _conv_geometry(H, W)
    conv_out_size = 64 * oh3 * ow3
    ks = jax.random.split(key, 10)
    return {
        "c1_w": _uniform(ks[0], (32, cin, 8, 8), cin * 8 * 8),
        "c1_b": _uniform(ks[1], (32,), cin * 8 * 8),
        "c2_w": _uniform(ks[2], (64, 32, 4, 4), 32 * 4 * 4),
        "c2_b": _uniform(ks[3], (64,), 32 * 4 * 4),
        "c3_w": _uniform(ks[4], (64, 64, 3, 3), 64 * 3 * 3),
        "c3_b": _uniform(ks[5], (64,), 64 * 3 * 3),
        # FC weights stored as (in, out); first 64*n3 rows = conv features,
        # last 3 rows = goal (matches torch.cat([state_flat, goal]))
        "fc1_w": _uniform(ks[6], (conv_out_size + 3, 512), conv_out_size + 3),
        "fc1_b": _uniform(ks[7], (512,), conv_out_size + 3),
        "fc2_w": _uniform(ks[8], (512, num_actions), 512),
        "fc2_b": _uniform(ks[9], (num_actions,), 512),
    }


# ---------------------------------------------------------------------------
# Pure-JAX reference (f32, HIGHEST precision) for validation
# ---------------------------------------------------------------------------
def dqn_reference(params, state_and_goal):
    state = state_and_goal[:, 0:3, :, :]
    goal = state_and_goal[:, -1, 0, :3]
    x = state
    for w, b, s in [(params["c1_w"], params["c1_b"], 4),
                    (params["c2_w"], params["c2_b"], 2),
                    (params["c3_w"], params["c3_b"], 1)]:
        x = jax.lax.conv_general_dilated(
            x, w, window_strides=(s, s), padding="VALID",
            dimension_numbers=("NCHW", "OIHW", "NCHW"),
            precision=jax.lax.Precision.HIGHEST)
        x = jnp.maximum(x + b.reshape(1, -1, 1, 1), 0.0)
    x = x.reshape(x.shape[0], -1)
    x = jnp.concatenate([x, goal], axis=1)
    x = jnp.maximum(
        jnp.dot(x, params["fc1_w"], precision=jax.lax.Precision.HIGHEST)
        + params["fc1_b"], 0.0)
    return jnp.dot(x, params["fc2_w"],
                   precision=jax.lax.Precision.HIGHEST) + params["fc2_b"]


if __name__ == "__main__":
    # 36x36 is the smallest valid input for the 8/4/3 conv stack: 36->8->3->1
    input_shape = (3, 36, 36)       # channels fed to the conv trunk
    num_actions = 6
    batch = 2

    key = jax.random.PRNGKey(0)
    k_param, k_input = jax.random.split(key)
    params = init_dqn_params(k_param, input_shape, num_actions)

    # state_and_goal carries 3 state channels + 1 goal channel -> 4 channels
    state_and_goal = jax.random.normal(
        k_input, (batch, 4, input_shape[1], input_shape[2]), jnp.float32)

    out = jax.block_until_ready(dqn_forward(params, state_and_goal))
    ref = jax.block_until_ready(dqn_reference(params, state_and_goal))

    assert out.shape == (batch, num_actions), out.shape
    assert jnp.all(jnp.isfinite(out))
    assert jnp.allclose(out, ref, rtol=1e-2, atol=1e-2), (
        float(jnp.max(jnp.abs(out - ref))))

    print("KERNEL_OK")
</pallas_src>

<mosaic_0001>
module attributes {stable_mosaic.version = 11 : i64} {
  func.func @_dqn_fused_kernel(%arg0: i32, %arg1: memref<1x256x192xf32, #tpu.memory_space<vmem>>, %arg2: memref<1x1x8xf32, #tpu.memory_space<vmem>>, %arg3: memref<192x32xf32, #tpu.memory_space<vmem>>, %arg4: memref<1x32xf32, #tpu.memory_space<vmem>>, %arg5: memref<16x32x64xf32, #tpu.memory_space<vmem>>, %arg6: memref<1x64xf32, #tpu.memory_space<vmem>>, %arg7: memref<9x64x64xf32, #tpu.memory_space<vmem>>, %arg8: memref<1x64xf32, #tpu.memory_space<vmem>>, %arg9: memref<1x64x512xf32, #tpu.memory_space<vmem>>, %arg10: memref<8x512xf32, #tpu.memory_space<vmem>>, %arg11: memref<1x512xf32, #tpu.memory_space<vmem>>, %arg12: memref<512x128xf32, #tpu.memory_space<vmem>>, %arg13: memref<1x128xf32, #tpu.memory_space<vmem>>, %arg14: memref<1x1x128xf32, #tpu.memory_space<vmem>>) attributes {dimension_semantics = [#tpu.dimension_semantics<parallel>], iteration_bounds = array<i64: 2>, scalar_prefetch = 0 : i64, scratch_operands = 0 : i64, tpu.core_type = #tpu.core_type<tc>, window_params = [{transform_indices = @transform_0, window_bounds = array<i64: 1, 256, 192>}, {transform_indices = @transform_1, window_bounds = array<i64: 1, 1, 8>}, {pipeline_mode = #tpu.pipeline_mode<synchronous>, transform_indices = @transform_2, window_bounds = array<i64: 192, 32>}, {pipeline_mode = #tpu.pipeline_mode<synchronous>, transform_indices = @transform_3, window_bounds = array<i64: 1, 32>}, {pipeline_mode = #tpu.pipeline_mode<synchronous>, transform_indices = @transform_4, window_bounds = array<i64: 16, 32, 64>}, {pipeline_mode = #tpu.pipeline_mode<synchronous>, transform_indices = @transform_5, window_bounds = array<i64: 1, 64>}, {pipeline_mode = #tpu.pipeline_mode<synchronous>, transform_indices = @transform_6, window_bounds = array<i64: 9, 64, 64>}, {pipeline_mode = #tpu.pipeline_mode<synchronous>, transform_indices = @transform_7, window_bounds = array<i64: 1, 64>}, {pipeline_mode = #tpu.pipeline_mode<synchronous>, transform_indices = @transform_8, window_bounds = array<i64: 1, 64, 512>}, {pipeline_mode = #tpu.pipeline_mode<synchronous>, transform_indices = @transform_9, window_bounds = array<i64: 8, 512>}, {pipeline_mode = #tpu.pipeline_mode<synchronous>, transform_indices = @transform_10, window_bounds = array<i64: 1, 512>}, {pipeline_mode = #tpu.pipeline_mode<synchronous>, transform_indices = @transform_11, window_bounds = array<i64: 512, 128>}, {pipeline_mode = #tpu.pipeline_mode<synchronous>, transform_indices = @transform_12, window_bounds = array<i64: 1, 128>}, {transform_indices = @transform_13, window_bounds = array<i64: 1, 1, 128>}]} {
    %c0 = arith.constant 0 : index
    %c0_0 = arith.constant 0 : index
    %0 = vector.load %arg3[%c0, %c0_0] : memref<192x32xf32, #tpu.memory_space<vmem>>, vector<192x32xf32>
    %c0_1 = arith.constant 0 : index
    %c0_2 = arith.constant 0 : index
    %1 = vector.load %arg4[%c0_1, %c0_2] : memref<1x32xf32, #tpu.memory_space<vmem>>, vector<1x32xf32>
    %cst = arith.constant 0.000000e+00 : f32
    %2 = vector.broadcast %cst : f32 to vector<16x64xf32>
    %c0_3 = arith.constant 0 : index
    %c0_4 = arith.constant 0 : index
    %c0_5 = arith.constant 0 : index
    %3 = vector.load %arg1[%c0_3, %c0_4, %c0_5] : memref<1x256x192xf32, #tpu.memory_space<vmem>>, vector<1x16x192xf32>
    %4 = vector.shape_cast %3 : vector<1x16x192xf32> to vector<16x192xf32>
    %cst_6 = arith.constant dense<0.000000e+00> : vector<16x32xf32>
    %5 = tpu.matmul %4, %0, %cst_6 {dimension_numbers = #tpu.dot_dimension_numbers<[1], [0], [0], [1], [0, 0, 1, 1], [], []>} : vector<16x192xf32>, vector<192x32xf32>, vector<16x32xf32> -> vector<16x32xf32>
    %6 = vector.broadcast %1 : vector<1x32xf32> to vector<16x32xf32>
    %7 = arith.addf %5, %6 : vector<16x32xf32>
    %cst_7 = arith.constant 0.000000e+00 : f32
    %8 = vector.broadcast %cst_7 : f32 to vector<16x32xf32>
    %9 = arith.maximumf %7, %8 : vector<16x32xf32>
    %c0_8 = arith.constant 0 : index
    %c0_9 = arith.constant 0 : index
    %c0_10 = arith.constant 0 : index
    %10 = vector.load %arg5[%c0_8, %c0_9, %c0_10] : memref<16x32x64xf32, #tpu.memory_space<vmem>>, vector<1x32x64xf32>
    %11 = vector.shape_cast %10 : vector<1x32x64xf32> to vector<32x64xf32>
    %cst_11 = arith.constant dense<0.000000e+00> : vector<16x64xf32>
    %12 = tpu.matmul %9, %11, %cst_11 {dimension_numbers = #tpu.dot_dimension_numbers<[1], [0], [0], [1], [0, 0, 1, 1], [], []>} : vector<16x32xf32>, vector<32x64xf32>, vector<16x64xf32> -> vector<16x64xf32>
    %13 = arith.addf %2, %12 : vector<16x64xf32>
    %c0_12 = arith.constant 0 : index
    %c16 = arith.constant 16 : index
    %c0_13 = arith.constant 0 : index
    %14 = vector.load %arg1[%c0_12, %c16, %c0_13] : memref<1x256x192xf32, #tpu.memory_space<vmem>>, vector<1x16x192xf32>
    %15 = vector.shape_cast %14 : vector<1x16x192xf32> to vector<16x192xf32>
    %cst_14 = arith.constant dense<0.000000e+00> : vector<16x32xf32>
    %16 = tpu.matmul %15, %0, %cst_14 {dimension_numbers = #tpu.dot_dimension_numbers<[1], [0], [0], [1], [0, 0, 1, 1], [], []>} : vector<16x192xf32>, vector<192x32xf32>, vector<16x32xf32> -> vector<16x32xf32>
    %17 = vector.broadcast %1 : vector<1x32xf32> to vector<16x32xf32>
    %18 = arith.addf %16, %17 : vector<16x32xf32>
    %cst_15 = arith.constant 0.000000e+00 : f32
    %19 = vector.broadcast %cst_15 : f32 to vector<16x32xf32>
    %20 = arith.maximumf %18, %19 : vector<16x32xf32>
    %c1 = arith.constant 1 : index
    %c0_16 = arith.constant 0 : index
    %c0_17 = arith.constant 0 : index
    %21 = vector.load %arg5[%c1, %c0_16, %c0_17] : memref<16x32x64xf32, #tpu.memory_space<vmem>>, vector<1x32x64xf32>
    %22 = vector.shape_cast %21 : vector<1x32x64xf32> to vector<32x64xf32>
    %cst_18 = arith.constant dense<0.000000e+00> : vector<16x64xf32>
    %23 = tpu.matmul %20, %22, %cst_18 {dimension_numbers = #tpu.dot_dimension_numbers<[1], [0], [0], [1], [0, 0, 1, 1], [], []>} : vector<16x32xf32>, vector<32x64xf32>, vector<16x64xf32> -> vector<16x64xf32>
    %24 = arith.addf %13, %23 : vector<16x64xf32>
    %c0_19 = arith.constant 0 : index
    %c32 = arith.constant 32 : index
    %c0_20 = arith.constant 0 : index
    %25 = vector.load %arg1[%c0_19, %c32, %c0_20] : memref<1x256x192xf32, #tpu.memory_space<vmem>>, vector<1x16x192xf32>
    %26 = vector.shape_cast %25 : vector<1x16x192xf32> to vector<16x192xf32>
    %cst_21 = arith.constant dense<0.000000e+00> : vector<16x32xf32>
    %27 = tpu.matmul %26, %0, %cst_21 {dimension_numbers = #tpu.dot_dimension_numbers<[1], [0], [0], [1], [0, 0, 1, 1], [], []>} : vector<16x192xf32>, vector<192x32xf32>, vector<16x32xf32> -> vector<16x32xf32>
    %28 = vector.broadcast %1 : vector<1x32xf32> to vector<16x32xf32>
    %29 = arith.addf %27, %28 : vector<16x32xf32>
    %cst_22 = arith.constant 0.000000e+00 : f32
    %30 = vector.broadcast %cst_22 : f32 to vector<16x32xf32>
    %31 = arith.maximumf %29, %30 : vector<16x32xf32>
    %c2 = arith.constant 2 : index
    %c0_23 = arith.constant 0 : index
    %c0_24 = arith.constant 0 : index
    %32 = vector.load %arg5[%c2, %c0_23, %c0_24] : memref<16x32x64xf32, #tpu.memory_space<vmem>>, vector<1x32x64xf32>
    %33 = vector.shape_cast %32 : vector<1x32x64xf32> to vector<32x64xf32>
    %cst_25 = arith.constant dense<0.000000e+00> : vector<16x64xf32>
    %34 = tpu.matmul %31, %33, %cst_25 {dimension_numbers = #tpu.dot_dimension_numbers<[1], [0], [0], [1], [0, 0, 1, 1], [], []>} : vector<16x32xf32>, vector<32x64xf32>, vector<16x64xf32> -> vector<16x64xf32>
    %35 = arith.addf %24, %34 : vector<16x64xf32>
    %c0_26 = arith.constant 0 : index
    %c48 = arith.constant 48 : index
    %c0_27 = arith.constant 0 : index
    %36 = vector.load %arg1[%c0_26, %c48, %c0_27] : memref<1x256x192xf32, #tpu.memory_space<vmem>>, vector<1x16x192xf32>
    %37 = vector.shape_cast %36 : vector<1x16x192xf32> to vector<16x192xf32>
    %cst_28 = arith.constant dense<0.000000e+00> : vector<16x32xf32>
    %38 = tpu.matmul %37, %0, %cst_28 {dimension_numbers = #tpu.dot_dimension_numbers<[1], [0], [0], [1], [0, 0, 1, 1], [], []>} : vector<16x192xf32>, vector<192x32xf32>, vector<16x32xf32> -> vector<16x32xf32>
    %39 = vector.broadcast %1 : vector<1x32xf32> to vector<16x32xf32>
    %40 = arith.addf %38, %39 : vector<16x32xf32>
    %cst_29 = arith.constant 0.000000e+00 : f32
    %41 = vector.broadcast %cst_29 : f32 to vector<16x32xf32>
    %42 = arith.maximumf %40, %41 : vector<16x32xf32>
    %c3 = arith.constant 3 : index
    %c0_30 = arith.constant 0 : index
    %c0_31 = arith.constant 0 : index
    %43 = vector.load %arg5[%c3, %c0_30, %c0_31] : memref<16x32x64xf32, #tpu.memory_space<vmem>>, vector<1x32x64xf32>
    %44 = vector.shape_cast %43 : vector<1x32x64xf32> to vector<32x64xf32>
    %cst_32 = arith.constant dense<0.000000e+00> : vector<16x64xf32>
    %45 = tpu.matmul %42, %44, %cst_32 {dimension_numbers = #tpu.dot_dimension_numbers<[1], [0], [0], [1], [0, 0, 1, 1], [], []>} : vector<16x32xf32>, vector<32x64xf32>, vector<16x64xf32> -> vector<16x64xf32>
    %46 = arith.addf %35, %45 : vector<16x64xf32>
    %c0_33 = arith.constant 0 : index
    %c64 = arith.constant 64 : index
    %c0_34 = arith.constant 0 : index
    %47 = vector.load %arg1[%c0_33, %c64, %c0_34] : memref<1x256x192xf32, #tpu.memory_space<vmem>>, vector<1x16x192xf32>
    %48 = vector.shape_cast %47 : vector<1x16x192xf32> to vector<16x192xf32>
    %cst_35 = arith.constant dense<0.000000e+00> : vector<16x32xf32>
    %49 = tpu.matmul %48, %0, %cst_35 {dimension_numbers = #tpu.dot_dimension_numbers<[1], [0], [0], [1], [0, 0, 1, 1], [], []>} : vector<16x192xf32>, vector<192x32xf32>, vector<16x32xf32> -> vector<16x32xf32>
    %50 = vector.broadcast %1 : vector<1x32xf32> to vector<16x32xf32>
    %51 = arith.addf %49, %50 : vector<16x32xf32>
    %cst_36 = arith.constant 0.000000e+00 : f32
    %52 = vector.broadcast %cst_36 : f32 to vector<16x32xf32>
    %53 = arith.maximumf %51, %52 : vector<16x32xf32>
    %c4 = arith.constant 4 : index
    %c0_37 = arith.constant 0 : index
    %c0_38 = arith.constant 0 : index
    %54 = vector.load %arg5[%c4, %c0_37, %c0_38] : memref<16x32x64xf32, #tpu.memory_space<vmem>>, vector<1x32x64xf32>
    %55 = vector.shape_cast %54 : vector<1x32x64xf32> to vector<32x64xf32>
    %cst_39 = arith.constant dense<0.000000e+00> : vector<16x64xf32>
    %56 = tpu.matmul %53, %55, %cst_39 {dimension_numbers = #tpu.dot_dimension_numbers<[1], [0], [0], [1], [0, 0, 1, 1], [], []>} : vector<16x32xf32>, vector<32x64xf32>, vector<16x64xf32> -> vector<16x64xf32>
    %57 = arith.addf %46, %56 : vector<16x64xf32>
    %c0_40 = arith.constant 0 : index
    %c80 = arith.constant 80 : index
    %c0_41 = arith.constant 0 : index
    %58 = vector.load %arg1[%c0_40, %c80, %c0_41] : memref<1x256x192xf32, #tpu.memory_space<vmem>>, vector<1x16x192xf32>
    %59 = vector.shape_cast %58 : vector<1x16x192xf32> to vector<16x192xf32>
    %cst_42 = arith.constant dense<0.000000e+00> : vector<16x32xf32>
    %60 = tpu.matmul %59, %0, %cst_42 {dimension_numbers = #tpu.dot_dimension_numbers<[1], [0], [0], [1], [0, 0, 1, 1], [], []>} : vector<16x192xf32>, vector<192x32xf32>, vector<16x32xf32> -> vector<16x32xf32>
    %61 = vector.broadcast %1 : vector<1x32xf32> to vector<16x32xf32>
    %62 = arith.addf %60, %61 : vector<16x32xf32>
    %cst_43 = arith.constant 0.000000e+00 : f32
    %63 = vector.broadcast %cst_43 : f32 to vector<16x32xf32>
    %64 = arith.maximumf %62, %63 : vector<16x32xf32>
    %c5 = arith.constant 5 : index
    %c0_44 = arith.constant 0 : index
    %c0_45 = arith.constant 0 : index
    %65 = vector.load %arg5[%c5, %c0_44, %c0_45] : memref<16x32x64xf32, #tpu.memory_space<vmem>>, vector<1x32x64xf32>
    %66 = vector.shape_cast %65 : vector<1x32x64xf32> to vector<32x64xf32>
    %cst_46 = arith.constant dense<0.000000e+00> : vector<16x64xf32>
    %67 = tpu.matmul %64, %66, %cst_46 {dimension_numbers = #tpu.dot_dimension_numbers<[1], [0], [0], [1], [0, 0, 1, 1], [], []>} : vector<16x32xf32>, vector<32x64xf32>, vector<16x64xf32> -> vector<16x64xf32>
    %68 = arith.addf %57, %67 : vector<16x64xf32>
    %c0_47 = arith.constant 0 : index
    %c96 = arith.constant 96 : index
    %c0_48 = arith.constant 0 : index
    %69 = vector.load %arg1[%c0_47, %c96, %c0_48] : memref<1x256x192xf32, #tpu.memory_space<vmem>>, vector<1x16x192xf32>
    %70 = vector.shape_cast %69 : vector<1x16x192xf32> to vector<16x192xf32>
    %cst_49 = arith.constant dense<0.000000e+00> : vector<16x32xf32>
    %71 = tpu.matmul %70, %0, %cst_49 {dimension_numbers = #tpu.dot_dimension_numbers<[1], [0], [0], [1], [0, 0, 1, 1], [], []>} : vector<16x192xf32>, vector<192x32xf32>, vector<16x32xf32> -> vector<16x32xf32>
    %72 = vector.broadcast %1 : vector<1x32xf32> to vector<16x32xf32>
    %73 = arith.addf %71, %72 : vector<16x32xf32>
    %cst_50 = arith.constant 0.000000e+00 : f32
    %74 = vector.broadcast %cst_50 : f32 to vector<16x32xf32>
    %75 = arith.maximumf %73, %74 : vector<16x32xf32>
    %c6 = arith.constant 6 : index
    %c0_51 = arith.constant 0 : index
    %c0_52 = arith.constant 0 : index
    %76 = vector.load %arg5[%c6, %c0_51, %c0_52] : memref<16x32x64xf32, #tpu.memory_space<vmem>>, vector<1x32x64xf32>
    %77 = vector.shape_cast %76 : vector<1x32x64xf32> to vector<32x64xf32>
    %cst_53 = arith.constant dense<0.000000e+00> : vector<16x64xf32>
    %78 = tpu.matmul %75, %77, %cst_53 {dimension_numbers = #tpu.dot_dimension_numbers<[1], [0], [0], [1], [0, 0, 1, 1], [], []>} : vector<16x32xf32>, vector<32x64xf32>, vector<16x64xf32> -> vector<16x64xf32>
    %79 = arith.addf %68, %78 : vector<16x64xf32>
    %c0_54 = arith.constant 0 : index
    %c112 = arith.constant 112 : index
    %c0_55 = arith.constant 0 : index
    %80 = vector.load %arg1[%c0_54, %c112, %c0_55] : memref<1x256x192xf32, #tpu.memory_space<vmem>>, vector<1x16x192xf32>
    %81 = vector.shape_cast %80 : vector<1x16x192xf32> to vector<16x192xf32>
    %cst_56 = arith.constant dense<0.000000e+00> : vector<16x32xf32>
    %82 = tpu.matmul %81, %0, %cst_56 {dimension_numbers = #tpu.dot_dimension_numbers<[1], [0], [0], [1], [0, 0, 1, 1], [], []>} : vector<16x192xf32>, vector<192x32xf32>, vector<16x32xf32> -> vector<16x32xf32>
    %83 = vector.broadcast %1 : vector<1x32xf32> to vector<16x32xf32>
    %84 = arith.addf %82, %83 : vector<16x32xf32>
    %cst_57 = arith.constant 0.000000e+00 : f32
    %85 = vector.broadcast %cst_57 : f32 to vector<16x32xf32>
    %86 = arith.maximumf %84, %85 : vector<16x32xf32>
    %c7 = arith.constant 7 : index
    %c0_58 = arith.constant 0 : index
    %c0_59 = arith.constant 0 : index
    %87 = vector.load %arg5[%c7, %c0_58, %c0_59] : memref<16x32x64xf32, #tpu.memory_space<vmem>>, vector<1x32x64xf32>
    %88 = vector.shape_cast %87 : vector<1x32x64xf32> to vector<32x64xf32>
    %cst_60 = arith.constant dense<0.000000e+00> : vector<16x64xf32>
    %89 = tpu.matmul %86, %88, %cst_60 {dimension_numbers = #tpu.dot_dimension_numbers<[1], [0], [0], [1], [0, 0, 1, 1], [], []>} : vector<16x32xf32>, vector<32x64xf32>, vector<16x64xf32> -> vector<16x64xf32>
    %90 = arith.addf %79, %89 : vector<16x64xf32>
    %c0_61 = arith.constant 0 : index
    %c128 = arith.constant 128 : index
    %c0_62 = arith.constant 0 : index
    %91 = vector.load %arg1[%c0_61, %c128, %c0_62] : memref<1x256x192xf32, #tpu.memory_space<vmem>>, vector<1x16x192xf32>
    %92 = vector.shape_cast %91 : vector<1x16x192xf32> to vector<16x192xf32>
    %cst_63 = arith.constant dense<0.000000e+00> : vector<16x32xf32>
    %93 = tpu.matmul %92, %0, %cst_63 {dimension_numbers = #tpu.dot_dimension_numbers<[1], [0], [0], [1], [0, 0, 1, 1], [], []>} : vector<16x192xf32>, vector<192x32xf32>, vector<16x32xf32> -> vector<16x32xf32>
    %94 = vector.broadcast %1 : vector<1x32xf32> to vector<16x32xf32>
    %95 = arith.addf %93, %94 : vector<16x32xf32>
    %cst_64 = arith.constant 0.000000e+00 : f32
    %96 = vector.broadcast %cst_64 : f32 to vector<16x32xf32>
    %97 = arith.maximumf %95, %96 : vector<16x32xf32>
    %c8 = arith.constant 8 : index
    %c0_65 = arith.constant 0 : index
    %c0_66 = arith.constant 0 : index
    %98 = vector.load %arg5[%c8, %c0_65, %c0_66] : memref<16x32x64xf32, #tpu.memory_space<vmem>>, vector<1x32x64xf32>
    %99 = vector.shape_cast %98 : vector<1x32x64xf32> to vector<32x64xf32>
    %cst_67 = arith.constant dense<0.000000e+00> : vector<16x64xf32>
    %100 = tpu.matmul %97, %99, %cst_67 {dimension_numbers = #tpu.dot_dimension_numbers<[1], [0], [0], [1], [0, 0, 1, 1], [], []>} : vector<16x32xf32>, vector<32x64xf32>, vector<16x64xf32> -> vector<16x64xf32>
    %101 = arith.addf %90, %100 : vector<16x64xf32>
    %c0_68 = arith.constant 0 : index
    %c144 = arith.constant 144 : index
    %c0_69 = arith.constant 0 : index
    %102 = vector.load %arg1[%c0_68, %c144, %c0_69] : memref<1x256x192xf32, #tpu.memory_space<vmem>>, vector<1x16x192xf32>
    %103 = vector.shape_cast %102 : vector<1x16x192xf32> to vector<16x192xf32>
    %cst_70 = arith.constant dense<0.000000e+00> : vector<16x32xf32>
    %104 = tpu.matmul %103, %0, %cst_70 {dimension_numbers = #tpu.dot_dimension_numbers<[1], [0], [0], [1], [0, 0, 1, 1], [], []>} : vector<16x192xf32>, vector<192x32xf32>, vector<16x32xf32> -> vector<16x32xf32>
    %105 = vector.broadcast %1 : vector<1x32xf32> to vector<16x32xf32>
    %106 = arith.addf %104, %105 : vector<16x32xf32>
    %cst_71 = arith.constant 0.000000e+00 : f32
    %107 = vector.broadcast %cst_71 : f32 to vector<16x32xf32>
    %108 = arith.maximumf %106, %107 : vector<16x32xf32>
    %c9 = arith.constant 9 : index
    %c0_72 = arith.constant 0 : index
    %c0_73 = arith.constant 0 : index
    %109 = vector.load %arg5[%c9, %c0_72, %c0_73] : memref<16x32x64xf32, #tpu.memory_space<vmem>>, vector<1x32x64xf32>
    %110 = vector.shape_cast %109 : vector<1x32x64xf32> to vector<32x64xf32>
    %cst_74 = arith.constant dense<0.000000e+00> : vector<16x64xf32>
    %111 = tpu.matmul %108, %110, %cst_74 {dimension_numbers = #tpu.dot_dimension_numbers<[1], [0], [0], [1], [0, 0, 1, 1], [], []>} : vector<16x32xf32>, vector<32x64xf32>, vector<16x64xf32> -> vector<16x64xf32>
    %112 = arith.addf %101, %111 : vector<16x64xf32>
    %c0_75 = arith.constant 0 : index
    %c160 = arith.constant 160 : index
    %c0_76 = arith.constant 0 : index
    %113 = vector.load %arg1[%c0_75, %c160, %c0_76] : memref<1x256x192xf32, #tpu.memory_space<vmem>>, vector<1x16x192xf32>
    %114 = vector.shape_cast %113 : vector<1x16x192xf32> to vector<16x192xf32>
    %cst_77 = arith.constant dense<0.000000e+00> : vector<16x32xf32>
    %115 = tpu.matmul %114, %0, %cst_77 {dimension_numbers = #tpu.dot_dimension_numbers<[1], [0], [0], [1], [0, 0, 1, 1], [], []>} : vector<16x192xf32>, vector<192x32xf32>, vector<16x32xf32> -> vector<16x32xf32>
    %116 = vector.broadcast %1 : vector<1x32xf32> to vector<16x32xf32>
    %117 = arith.addf %115, %116 : vector<16x32xf32>
    %cst_78 = arith.constant 0.000000e+00 : f32
    %118 = vector.broadcast %cst_78 : f32 to vector<16x32xf32>
    %119 = arith.maximumf %117, %118 : vector<16x32xf32>
    %c10 = arith.constant 10 : index
    %c0_79 = arith.constant 0 : index
    %c0_80 = arith.constant 0 : index
    %120 = vector.load %arg5[%c10, %c0_79, %c0_80] : memref<16x32x64xf32, #tpu.memory_space<vmem>>, vector<1x32x64xf32>
    %121 = vector.shape_cast %120 : vector<1x32x64xf32> to vector<32x64xf32>
    %cst_81 = arith.constant dense<0.000000e+00> : vector<16x64xf32>
    %122 = tpu.matmul %119, %121, %cst_81 {dimension_numbers = #tpu.dot_dimension_numbers<[1], [0], [0], [1], [0, 0, 1, 1], [], []>} : vector<16x32xf32>, vector<32x64xf32>, vector<16x64xf32> -> vector<16x64xf32>
    %123 = arith.addf %112, %122 : vector<16x64xf32>
    %c0_82 = arith.constant 0 : index
    %c176 = arith.constant 176 : index
    %c0_83 = arith.constant 0 : index
    %124 = vector.load %arg1[%c0_82, %c176, %c0_83] : memref<1x256x192xf32, #tpu.memory_space<vmem>>, vector<1x16x192xf32>
    %125 = vector.shape_cast %124 : vector<1x16x192xf32> to vector<16x192xf32>
    %cst_84 = arith.constant dense<0.000000e+00> : vector<16x32xf32>
    %126 = tpu.matmul %125, %0, %cst_84 {dimension_numbers = #tpu.dot_dimension_numbers<[1], [0], [0], [1], [0, 0, 1, 1], [], []>} : vector<16x192xf32>, vector<192x32xf32>, vector<16x32xf32> -> vector<16x32xf32>
    %127 = vector.broadcast %1 : vector<1x32xf32> to vector<16x32xf32>
    %128 = arith.addf %126, %127 : vector<16x32xf32>
    %cst_85 = arith.constant 0.000000e+00 : f32
    %129 = vector.broadcast %cst_85 : f32 to vector<16x32xf32>
    %130 = arith.maximumf %128, %129 : vector<16x32xf32>
    %c11 = arith.constant 11 : index
    %c0_86 = arith.constant 0 : index
    %c0_87 = arith.constant 0 : index
    %131 = vector.load %arg5[%c11, %c0_86, %c0_87] : memref<16x32x64xf32, #tpu.memory_space<vmem>>, vector<1x32x64xf32>
    %132 = vector.shape_cast %131 : vector<1x32x64xf32> to vector<32x64xf32>
    %cst_88 = arith.constant dense<0.000000e+00> : vector<16x64xf32>
    %133 = tpu.matmul %130, %132, %cst_88 {dimension_numbers = #tpu.dot_dimension_numbers<[1], [0], [0], [1], [0, 0, 1, 1], [], []>} : vector<16x32xf32>, vector<32x64xf32>, vector<16x64xf32> -> vector<16x64xf32>
    %134 = arith.addf %123, %133 : vector<16x64xf32>
    %c0_89 = arith.constant 0 : index
    %c192 = arith.constant 192 : index
    %c0_90 = arith.constant 0 : index
    %135 = vector.load %arg1[%c0_89, %c192, %c0_90] : memref<1x256x192xf32, #tpu.memory_space<vmem>>, vector<1x16x192xf32>
    %136 = vector.shape_cast %135 : vector<1x16x192xf32> to vector<16x192xf32>
    %cst_91 = arith.constant dense<0.000000e+00> : vector<16x32xf32>
    %137 = tpu.matmul %136, %0, %cst_91 {dimension_numbers = #tpu.dot_dimension_numbers<[1], [0], [0], [1], [0, 0, 1, 1], [], []>} : vector<16x192xf32>, vector<192x32xf32>, vector<16x32xf32> -> vector<16x32xf32>
    %138 = vector.broadcast %1 : vector<1x32xf32> to vector<16x32xf32>
    %139 = arith.addf %137, %138 : vector<16x32xf32>
    %cst_92 = arith.constant 0.000000e+00 : f32
    %140 = vector.broadcast %cst_92 : f32 to vector<16x32xf32>
    %141 = arith.maximumf %139, %140 : vector<16x32xf32>
    %c12 = arith.constant 12 : index
    %c0_93 = arith.constant 0 : index
    %c0_94 = arith.constant 0 : index
    %142 = vector.load %arg5[%c12, %c0_93, %c0_94] : memref<16x32x64xf32, #tpu.memory_space<vmem>>, vector<1x32x64xf32>
    %143 = vector.shape_cast %142 : vector<1x32x64xf32> to vector<32x64xf32>
    %cst_95 = arith.constant dense<0.000000e+00> : vector<16x64xf32>
    %144 = tpu.matmul %141, %143, %cst_95 {dimension_numbers = #tpu.dot_dimension_numbers<[1], [0], [0], [1], [0, 0, 1, 1], [], []>} : vector<16x32xf32>, vector<32x64xf32>, vector<16x64xf32> -> vector<16x64xf32>
    %145 = arith.addf %134, %144 : vector<16x64xf32>
    %c0_96 = arith.constant 0 : index
    %c208 = arith.constant 208 : index
    %c0_97 = arith.constant 0 : index
    %146 = vector.load %arg1[%c0_96, %c208, %c0_97] : memref<1x256x192xf32, #tpu.memory_space<vmem>>, vector<1x16x192xf32>
    %147 = vector.shape_cast %146 : vector<1x16x192xf32> to vector<16x192xf32>
    %cst_98 = arith.constant dense<0.000000e+00> : vector<16x32xf32>
    %148 = tpu.matmul %147, %0, %cst_98 {dimension_numbers = #tpu.dot_dimension_numbers<[1], [0], [0], [1], [0, 0, 1, 1], [], []>} : vector<16x192xf32>, vector<192x32xf32>, vector<16x32xf32> -> vector<16x32xf32>
    %149 = vector.broadcast %1 : vector<1x32xf32> to vector<16x32xf32>
    %150 = arith.addf %148, %149 : vector<16x32xf32>
    %cst_99 = arith.constant 0.000000e+00 : f32
    %151 = vector.broadcast %cst_99 : f32 to vector<16x32xf32>
    %152 = arith.maximumf %150, %151 : vector<16x32xf32>
    %c13 = arith.constant 13 : index
    %c0_100 = arith.constant 0 : index
    %c0_101 = arith.constant 0 : index
    %153 = vector.load %arg5[%c13, %c0_100, %c0_101] : memref<16x32x64xf32, #tpu.memory_space<vmem>>, vector<1x32x64xf32>
    %154 = vector.shape_cast %153 : vector<1x32x64xf32> to vector<32x64xf32>
    %cst_102 = arith.constant dense<0.000000e+00> : vector<16x64xf32>
    %155 = tpu.matmul %152, %154, %cst_102 {dimension_numbers = #tpu.dot_dimension_numbers<[1], [0], [0], [1], [0, 0, 1, 1], [], []>} : vector<16x32xf32>, vector<32x64xf32>, vector<16x64xf32> -> vector<16x64xf32>
    %156 = arith.addf %145, %155 : vector<16x64xf32>
    %c0_103 = arith.constant 0 : index
    %c224 = arith.constant 224 : index
    %c0_104 = arith.constant 0 : index
    %157 = vector.load %arg1[%c0_103, %c224, %c0_104] : memref<1x256x192xf32, #tpu.memory_space<vmem>>, vector<1x16x192xf32>
    %158 = vector.shape_cast %157 : vector<1x16x192xf32> to vector<16x192xf32>
    %cst_105 = arith.constant dense<0.000000e+00> : vector<16x32xf32>
    %159 = tpu.matmul %158, %0, %cst_105 {dimension_numbers = #tpu.dot_dimension_numbers<[1], [0], [0], [1], [0, 0, 1, 1], [], []>} : vector<16x192xf32>, vector<192x32xf32>, vector<16x32xf32> -> vector<16x32xf32>
    %160 = vector.broadcast %1 : vector<1x32xf32> to vector<16x32xf32>
    %161 = arith.addf %159, %160 : vector<16x32xf32>
    %cst_106 = arith.constant 0.000000e+00 : f32
    %162 = vector.broadcast %cst_106 : f32 to vector<16x32xf32>
    %163 = arith.maximumf %161, %162 : vector<16x32xf32>
    %c14 = arith.constant 14 : index
    %c0_107 = arith.constant 0 : index
    %c0_108 = arith.constant 0 : index
    %164 = vector.load %arg5[%c14, %c0_107, %c0_108] : memref<16x32x64xf32, #tpu.memory_space<vmem>>, vector<1x32x64xf32>
    %165 = vector.shape_cast %164 : vector<1x32x64xf32> to vector<32x64xf32>
    %cst_109 = arith.constant dense<0.000000e+00> : vector<16x64xf32>
    %166 = tpu.matmul %163, %165, %cst_109 {dimension_numbers = #tpu.dot_dimension_numbers<[1], [0], [0], [1], [0, 0, 1, 1], [], []>} : vector<16x32xf32>, vector<32x64xf32>, vector<16x64xf32> -> vector<16x64xf32>
    %167 = arith.addf %156, %166 : vector<16x64xf32>
    %c0_110 = arith.constant 0 : index
    %c240 = arith.constant 240 : index
    %c0_111 = arith.constant 0 : index
    %168 = vector.load %arg1[%c0_110, %c240, %c0_111] : memref<1x256x192xf32, #tpu.memory_space<vmem>>, vector<1x16x192xf32>
    %169 = vector.shape_cast %168 : vector<1x16x192xf32> to vector<16x192xf32>
    %cst_112 = arith.constant dense<0.000000e+00> : vector<16x32xf32>
    %170 = tpu.matmul %169, %0, %cst_112 {dimension_numbers = #tpu.dot_dimension_numbers<[1], [0], [0], [1], [0, 0, 1, 1], [], []>} : vector<16x192xf32>, vector<192x32xf32>, vector<16x32xf32> -> vector<16x32xf32>
    %171 = vector.broadcast %1 : vector<1x32xf32> to vector<16x32xf32>
    %172 = arith.addf %170, %171 : vector<16x32xf32>
    %cst_113 = arith.constant 0.000000e+00 : f32
    %173 = vector.broadcast %cst_113 : f32 to vector<16x32xf32>
    %174 = arith.maximumf %172, %173 : vector<16x32xf32>
    %c15 = arith.constant 15 : index
    %c0_114 = arith.constant 0 : index
    %c0_115 = arith.constant 0 : index
    %175 = vector.load %arg5[%c15, %c0_114, %c0_115] : memref<16x32x64xf32, #tpu.memory_space<vmem>>, vector<1x32x64xf32>
    %176 = vector.shape_cast %175 : vector<1x32x64xf32> to vector<32x64xf32>
    %cst_116 = arith.constant dense<0.000000e+00> : vector<16x64xf32>
    %177 = tpu.matmul %174, %176, %cst_116 {dimension_numbers = #tpu.dot_dimension_numbers<[1], [0], [0], [1], [0, 0, 1, 1], [], []>} : vector<16x32xf32>, vector<32x64xf32>, vector<16x64xf32> -> vector<16x64xf32>
    %178 = arith.addf %167, %177 : vector<16x64xf32>
    %c0_117 = arith.constant 0 : index
    %c0_118 = arith.constant 0 : index
    %179 = vector.load %arg6[%c0_117, %c0_118] : memref<1x64xf32, #tpu.memory_space<vmem>>, vector<1x64xf32>
    %180 = vector.broadcast %179 : vector<1x64xf32> to vector<16x64xf32>
    %181 = arith.addf %178, %180 : vector<16x64xf32>
    %cst_119 = arith.constant 0.000000e+00 : f32
    %182 = vector.broadcast %cst_119 : f32 to vector<16x64xf32>
    %183 = arith.maximumf %181, %182 : vector<16x64xf32>
    %cst_120 = arith.constant 0.000000e+00 : f32
    %184 = vector.broadcast %cst_120 : f32 to vector<1x64xf32>
    %185 = vector.extract_strided_slice %183 {offsets = [0, 0], sizes = [1, 64], strides = [1, 1]} : vector<16x64xf32> to vector<1x64xf32>
    %c0_121 = arith.constant 0 : index
    %c0_122 = arith.constant 0 : index
    %c0_123 = arith.constant 0 : index
    %186 = vector.load %arg7[%c0_121, %c0_122, %c0_123] : memref<9x64x64xf32, #tpu.memory_space<vmem>>, vector<1x64x64xf32>
    %187 = vector.shape_cast %186 : vector<1x64x64xf32> to vector<64x64xf32>
    %cst_124 = arith.constant dense<0.000000e+00> : vector<1x64xf32>
    %188 = tpu.matmul %185, %187, %cst_124 {dimension_numbers = #tpu.dot_dimension_numbers<[1], [0], [0], [1], [0, 0, 1, 1], [], []>} : vector<1x64xf32>, vector<64x64xf32>, vector<1x64xf32> -> vector<1x64xf32>
    %189 = arith.addf %184, %188 : vector<1x64xf32>
    %190 = vector.extract_strided_slice %183 {offsets = [1, 0], sizes = [1, 64], strides = [1, 1]} : vector<16x64xf32> to vector<1x64xf32>
    %c1_125 = arith.constant 1 : index
    %c0_126 = arith.constant 0 : index
    %c0_127 = arith.constant 0 : index
    %191 = vector.load %arg7[%c1_125, %c0_126, %c0_127] : memref<9x64x64xf32, #tpu.memory_space<vmem>>, vector<1x64x64xf32>
    %192 = vector.shape_cast %191 : vector<1x64x64xf32> to vector<64x64xf32>
    %cst_128 = arith.constant dense<0.000000e+00> : vector<1x64xf32>
    %193 = tpu.matmul %190, %192, %cst_128 {dimension_numbers = #tpu.dot_dimension_numbers<[1], [0], [0], [1], [0, 0, 1, 1], [], []>} : vector<1x64xf32>, vector<64x64xf32>, vector<1x64xf32> -> vector<1x64xf32>
    %194 = arith.addf %189, %193 : vector<1x64xf32>
    %195 = vector.extract_strided_slice %183 {offsets = [2, 0], sizes = [1, 64], strides = [1, 1]} : vector<16x64xf32> to vector<1x64xf32>
    %c2_129 = arith.constant 2 : index
    %c0_130 = arith.constant 0 : index
    %c0_131 = arith.constant 0 : index
    %196 = vector.load %arg7[%c2_129, %c0_130, %c0_131] : memref<9x64x64xf32, #tpu.memory_space<vmem>>, vector<1x64x64xf32>
    %197 = vector.shape_cast %196 : vector<1x64x64xf32> to vector<64x64xf32>
    %cst_132 = arith.constant dense<0.000000e+00> : vector<1x64xf32>
    %198 = tpu.matmul %195, %197, %cst_132 {dimension_numbers = #tpu.dot_dimension_numbers<[1], [0], [0], [1], [0, 0, 1, 1], [], []>} : vector<1x64xf32>, vector<64x64xf32>, vector<1x64xf32> -> vector<1x64xf32>
    %199 = arith.addf %194, %198 : vector<1x64xf32>
    %200 = vector.extract_strided_slice %183 {offsets = [3, 0], sizes = [1, 64], strides = [1, 1]} : vector<16x64xf32> to vector<1x64xf32>
    %c3_133 = arith.constant 3 : index
    %c0_134 = arith.constant 0 : index
    %c0_135 = arith.constant 0 : index
    %201 = vector.load %arg7[%c3_133, %c0_134, %c0_135] : memref<9x64x64xf32, #tpu.memory_space<vmem>>, vector<1x64x64xf32>
    %202 = vector.shape_cast %201 : vector<1x64x64xf32> to vector<64x64xf32>
    %cst_136 = arith.constant dense<0.000000e+00> : vector<1x64xf32>
    %203 = tpu.matmul %200, %202, %cst_136 {dimension_numbers = #tpu.dot_dimension_numbers<[1], [0], [0], [1], [0, 0, 1, 1], [], []>} : vector<1x64xf32>, vector<64x64xf32>, vector<1x64xf32> -> vector<1x64xf32>
    %204 = arith.addf %199, %203 : vector<1x64xf32>
    %205 = vector.extract_strided_slice %183 {offsets = [4, 0], sizes = [1, 64], strides = [1, 1]} : vector<16x64xf32> to vector<1x64xf32>
    %c4_137 = arith.constant 4 : index
    %c0_138 = arith.constant 0 : index
    %c0_139 = arith.constant 0 : index
    %206 = vector.load %arg7[%c4_137, %c0_138, %c0_139] : memref<9x64x64xf32, #tpu.memory_space<vmem>>, vector<1x64x64xf32>
    %207 = vector.shape_cast %206 : vector<1x64x64xf32> to vector<64x64xf32>
    %cst_140 = arith.constant dense<0.000000e+00> : vector<1x64xf32>
    %208 = tpu.matmul %205, %207, %cst_140 {dimension_numbers = #tpu.dot_dimension_numbers<[1], [0], [0], [1], [0, 0, 1, 1], [], []>} : vector<1x64xf32>, vector<64x64xf32>, vector<1x64xf32> -> vector<1x64xf32>
    %209 = arith.addf %204, %208 : vector<1x64xf32>
    %210 = vector.extract_strided_slice %183 {offsets = [5, 0], sizes = [1, 64], strides = [1, 1]} : vector<16x64xf32> to vector<1x64xf32>
    %c5_141 = arith.constant 5 : index
    %c0_142 = arith.constant 0 : index
    %c0_143 = arith.constant 0 : index
    %211 = vector.load %arg7[%c5_141, %c0_142, %c0_143] : memref<9x64x64xf32, #tpu.memory_space<vmem>>, vector<1x64x64xf32>
    %212 = vector.shape_cast %211 : vector<1x64x64xf32> to vector<64x64xf32>
    %cst_144 = arith.constant dense<0.000000e+00> : vector<1x64xf32>
    %213 = tpu.matmul %210, %212, %cst_144 {dimension_numbers = #tpu.dot_dimension_numbers<[1], [0], [0], [1], [0, 0, 1, 1], [], []>} : vector<1x64xf32>, vector<64x64xf32>, vector<1x64xf32> -> vector<1x64xf32>
    %214 = arith.addf %209, %213 : vector<1x64xf32>
    %215 = vector.extract_strided_slice %183 {offsets = [6, 0], sizes = [1, 64], strides = [1, 1]} : vector<16x64xf32> to vector<1x64xf32>
    %c6_145 = arith.constant 6 : index
    %c0_146 = arith.constant 0 : index
    %c0_147 = arith.constant 0 : index
    %216 = vector.load %arg7[%c6_145, %c0_146, %c0_147] : memref<9x64x64xf32, #tpu.memory_space<vmem>>, vector<1x64x64xf32>
    %217 = vector.shape_cast %216 : vector<1x64x64xf32> to vector<64x64xf32>
    %cst_148 = arith.constant dense<0.000000e+00> : vector<1x64xf32>
    %218 = tpu.matmul %215, %217, %cst_148 {dimension_numbers = #tpu.dot_dimension_numbers<[1], [0], [0], [1], [0, 0, 1, 1], [], []>} : vector<1x64xf32>, vector<64x64xf32>, vector<1x64xf32> -> vector<1x64xf32>
    %219 = arith.addf %214, %218 : vector<1x64xf32>
    %220 = vector.extract_strided_slice %183 {offsets = [7, 0], sizes = [1, 64], strides = [1, 1]} : vector<16x64xf32> to vector<1x64xf32>
    %c7_149 = arith.constant 7 : index
    %c0_150 = arith.constant 0 : index
    %c0_151 = arith.constant 0 : index
    %221 = vector.load %arg7[%c7_149, %c0_150, %c0_151] : memref<9x64x64xf32, #tpu.memory_space<vmem>>, vector<1x64x64xf32>
    %222 = vector.shape_cast %221 : vector<1x64x64xf32> to vector<64x64xf32>
    %cst_152 = arith.constant dense<0.000000e+00> : vector<1x64xf32>
    %223 = tpu.matmul %220, %222, %cst_152 {dimension_numbers = #tpu.dot_dimension_numbers<[1], [0], [0], [1], [0, 0, 1, 1], [], []>} : vector<1x64xf32>, vector<64x64xf32>, vector<1x64xf32> -> vector<1x64xf32>
    %224 = arith.addf %219, %223 : vector<1x64xf32>
    %225 = vector.extract_strided_slice %183 {offsets = [8, 0], sizes = [1, 64], strides = [1, 1]} : vector<16x64xf32> to vector<1x64xf32>
    %c8_153 = arith.constant 8 : index
    %c0_154 = arith.constant 0 : index
    %c0_155 = arith.constant 0 : index
    %226 = vector.load %arg7[%c8_153, %c0_154, %c0_155] : memref<9x64x64xf32, #tpu.memory_space<vmem>>, vector<1x64x64xf32>
    %227 = vector.shape_cast %226 : vector<1x64x64xf32> to vector<64x64xf32>
    %cst_156 = arith.constant dense<0.000000e+00> : vector<1x64xf32>
    %228 = tpu.matmul %225, %227, %cst_156 {dimension_numbers = #tpu.dot_dimension_numbers<[1], [0], [0], [1], [0, 0, 1, 1], [], []>} : vector<1x64xf32>, vector<64x64xf32>, vector<1x64xf32> -> vector<1x64xf32>
    %229 = arith.addf %224, %228 : vector<1x64xf32>
    %c0_157 = arith.constant 0 : index
    %c0_158 = arith.constant 0 : index
    %230 = vector.load %arg8[%c0_157, %c0_158] : memref<1x64xf32, #tpu.memory_space<vmem>>, vector<1x64xf32>
    %231 = arith.addf %229, %230 : vector<1x64xf32>
    %cst_159 = arith.constant 0.000000e+00 : f32
    %232 = vector.broadcast %cst_159 : f32 to vector<1x64xf32>
    %233 = arith.maximumf %231, %232 : vector<1x64xf32>
    %c0_160 = arith.constant 0 : index
    %c0_161 = arith.constant 0 : index
    %c0_162 = arith.constant 0 : index
    %234 = vector.load %arg2[%c0_160, %c0_161, %c0_162] : memref<1x1x8xf32, #tpu.memory_space<vmem>>, vector<1x1x8xf32>
    %235 = vector.shape_cast %234 : vector<1x1x8xf32> to vector<1x8xf32>
    %c0_163 = arith.constant 0 : index
    %c0_164 = arith.constant 0 : index
    %236 = vector.load %arg10[%c0_163, %c0_164] : memref<8x512xf32, #tpu.memory_space<vmem>>, vector<8x512xf32>
    %cst_165 = arith.constant dense<0.000000e+00> : vector<1x512xf32>
    %237 = tpu.matmul %235, %236, %cst_165 {dimension_numbers = #tpu.dot_dimension_numbers<[1], [0], [0], [1], [0, 0, 1, 1], [], []>} : vector<1x8xf32>, vector<8x512xf32>, vector<1x512xf32> -> vector<1x512xf32>
    %c0_166 = arith.constant 0 : index
    %c0_167 = arith.constant 0 : index
    %c0_168 = arith.constant 0 : index
    %238 = vector.load %arg9[%c0_166, %c0_167, %c0_168] : memref<1x64x512xf32, #tpu.memory_space<vmem>>, vector<1x64x512xf32>
    %239 = vector.shape_cast %238 : vector<1x64x512xf32> to vector<64x512xf32>
    %cst_169 = arith.constant dense<0.000000e+00> : vector<1x512xf32>
    %240 = tpu.matmul %233, %239, %cst_169 {dimension_numbers = #tpu.dot_dimension_numbers<[1], [0], [0], [1], [0, 0, 1, 1], [], []>} : vector<1x64xf32>, vector<64x512xf32>, vector<1x512xf32> -> vector<1x512xf32>
    %241 = arith.addf %237, %240 : vector<1x512xf32>
    %c0_170 = arith.constant 0 : index
    %c0_171 = arith.constant 0 : index
    %242 = vector.load %arg11[%c0_170, %c0_171] : memref<1x512xf32, #tpu.memory_space<vmem>>, vector<1x512xf32>
    %243 = arith.addf %241, %242 : vector<1x512xf32>
    %cst_172 = arith.constant 0.000000e+00 : f32
    %244 = vector.broadcast %cst_172 : f32 to vector<1x512xf32>
    %245 = arith.maximumf %243, %244 : vector<1x512xf32>
    %c0_173 = arith.constant 0 : index
    %c0_174 = arith.constant 0 : index
    %246 = vector.load %arg12[%c0_173, %c0_174] : memref<512x128xf32, #tpu.memory_space<vmem>>, vector<512x128xf32>
    %cst_175 = arith.constant dense<0.000000e+00> : vector<1x128xf32>
    %247 = tpu.matmul %245, %246, %cst_175 {dimension_numbers = #tpu.dot_dimension_numbers<[1], [0], [0], [1], [0, 0, 1, 1], [], []>} : vector<1x512xf32>, vector<512x128xf32>, vector<1x128xf32> -> vector<1x128xf32>
    %c0_176 = arith.constant 0 : index
    %c0_177 = arith.constant 0 : index
    %248 = vector.load %arg13[%c0_176, %c0_177] : memref<1x128xf32, #tpu.memory_space<vmem>>, vector<1x128xf32>
    %249 = arith.addf %247, %248 : vector<1x128xf32>
    %c0_178 = arith.constant 0 : index
    %c0_179 = arith.constant 0 : index
    %c0_180 = arith.constant 0 : index
    %250 = vector.load %arg14[%c0_178, %c0_179, %c0_180] : memref<1x1x128xf32, #tpu.memory_space<vmem>>, vector<1x1x128xf32>
    %251 = vector.shape_cast %250 : vector<1x1x128xf32> to vector<1x128xf32>
    %252 = vector.shape_cast %249 : vector<1x128xf32> to vector<1x1x128xf32>
    tpu.vector_store %arg14[%c0_178, %c0_179, %c0_180], %252 {strides = array<i32>} : memref<1x1x128xf32, #tpu.memory_space<vmem>>, vector<1x1x128xf32>,
    return
  }
  func.func @transform_0(%arg0: i32) -> (i32, i32, i32) {
    %c0_i32 = arith.constant 0 : i32
    %c0_i32_0 = arith.constant 0 : i32
    %c0_i32_1 = arith.constant 0 : i32
    return %arg0, %c0_i32, %c0_i32_0 : i32, i32, i32
  }
  func.func @transform_1(%arg0: i32) -> (i32, i32, i32) {
    %c0_i32 = arith.constant 0 : i32
    %c0_i32_0 = arith.constant 0 : i32
    %c0_i32_1 = arith.constant 0 : i32
    return %arg0, %c0_i32, %c0_i32_0 : i32, i32, i32
  }
  func.func @transform_2(%arg0: i32) -> (i32, i32) {
    %c0_i32 = arith.constant 0 : i32
    %c0_i32_0 = arith.constant 0 : i32
    %c0_i32_1 = arith.constant 0 : i32
    return %c0_i32, %c0_i32_0 : i32, i32
  }
  func.func @transform_3(%arg0: i32) -> (i32, i32) {
    %c0_i32 = arith.constant 0 : i32
    %c0_i32_0 = arith.constant 0 : i32
    %c0_i32_1 = arith.constant 0 : i32
    return %c0_i32, %c0_i32_0 : i32, i32
  }
  func.func @transform_4(%arg0: i32) -> (i32, i32, i32) {
    %c0_i32 = arith.constant 0 : i32
    %c0_i32_0 = arith.constant 0 : i32
    %c0_i32_1 = arith.constant 0 : i32
    %c0_i32_2 = arith.constant 0 : i32
    return %c0_i32, %c0_i32_0, %c0_i32_1 : i32, i32, i32
  }
  func.func @transform_5(%arg0: i32) -> (i32, i32) {
    %c0_i32 = arith.constant 0 : i32
    %c0_i32_0 = arith.constant 0 : i32
    %c0_i32_1 = arith.constant 0 : i32
    return %c0_i32, %c0_i32_0 : i32, i32
  }
  func.func @transform_6(%arg0: i32) -> (i32, i32, i32) {
    %c0_i32 = arith.constant 0 : i32
    %c0_i32_0 = arith.constant 0 : i32
    %c0_i32_1 = arith.constant 0 : i32
    %c0_i32_2 = arith.constant 0 : i32
    return %c0_i32, %c0_i32_0, %c0_i32_1 : i32, i32, i32
  }
  func.func @transform_7(%arg0: i32) -> (i32, i32) {
    %c0_i32 = arith.constant 0 : i32
    %c0_i32_0 = arith.constant 0 : i32
    %c0_i32_1 = arith.constant 0 : i32
    return %c0_i32, %c0_i32_0 : i32, i32
  }
  func.func @transform_8(%arg0: i32) -> (i32, i32, i32) {
    %c0_i32 = arith.constant 0 : i32
    %c0_i32_0 = arith.constant 0 : i32
    %c0_i32_1 = arith.constant 0 : i32
    %c0_i32_2 = arith.constant 0 : i32
    return %c0_i32, %c0_i32_0, %c0_i32_1 : i32, i32, i32
  }
  func.func @transform_9(%arg0: i32) -> (i32, i32) {
    %c0_i32 = arith.constant 0 : i32
    %c0_i32_0 = arith.constant 0 : i32
    %c0_i32_1 = arith.constant 0 : i32
    return %c0_i32, %c0_i32_0 : i32, i32
  }
  func.func @transform_10(%arg0: i32) -> (i32, i32) {
    %c0_i32 = arith.constant 0 : i32
    %c0_i32_0 = arith.constant 0 : i32
    %c0_i32_1 = arith.constant 0 : i32
    return %c0_i32, %c0_i32_0 : i32, i32
  }
  func.func @transform_11(%arg0: i32) -> (i32, i32) {
    %c0_i32 = arith.constant 0 : i32
    %c0_i32_0 = arith.constant 0 : i32
    %c0_i32_1 = arith.constant 0 : i32
    return %c0_i32, %c0_i32_0 : i32, i32
  }
  func.func @transform_12(%arg0: i32) -> (i32, i32) {
    %c0_i32 = arith.constant 0 : i32
    %c0_i32_0 = arith.constant 0 : i32
    %c0_i32_1 = arith.constant 0 : i32
    return %c0_i32, %c0_i32_0 : i32, i32
  }
  func.func @transform_13(%arg0: i32) -> (i32, i32, i32) {
    %c0_i32 = arith.constant 0 : i32
    %c0_i32_0 = arith.constant 0 : i32
    %c0_i32_1 = arith.constant 0 : i32
    return %arg0, %c0_i32, %c0_i32_0 : i32, i32, i32
  }
}

</mosaic_0001>

<llo_original>
// kernel: dqn_forward.1
$region0: #{dqn_forward.1}
  #allocation0 [shape = 'u32[]', space=smem, size = 0x4, offset = 0x4, fixed_abs, tag = 'smem constant byte address 0x4 - core index']
  #allocation1 [shape = 'u32[144,128]{1,0:T(1,128)}', space=vmem, size = 0x12000, scoped, tag = 'internal scratch']
  %s0 = inlined_call_operand.vmem [shape: f32[2,256,192], index: 0, kind: input, shape index: {}]
  %s1 = inlined_call_operand.vmem [shape: f32[2,1,8], index: 1, kind: input, shape index: {}]
  %s2 = inlined_call_operand.vmem [shape: f32[192,32], index: 2, kind: input, shape index: {}]
  %s3 = inlined_call_operand.vmem [shape: f32[1,32], index: 3, kind: input, shape index: {}]
  %s4 = inlined_call_operand.vmem [shape: f32[16,32,64], index: 4, kind: input, shape index: {}]
  %s5 = inlined_call_operand.vmem [shape: f32[1,64], index: 5, kind: input, shape index: {}]
  %s6 = inlined_call_operand.vmem [shape: f32[9,64,64], index: 6, kind: input, shape index: {}]
  %s7 = inlined_call_operand.vmem [shape: f32[1,64], index: 7, kind: input, shape index: {}]
  %s8 = inlined_call_operand.vmem [shape: f32[1,64,512], index: 8, kind: input, shape index: {}]
  %s9 = inlined_call_operand.vmem [shape: f32[8,512], index: 9, kind: input, shape index: {}]
  %s10 = inlined_call_operand.vmem [shape: f32[1,512], index: 10, kind: input, shape index: {}]
  %s11 = inlined_call_operand.vmem [shape: f32[512,128], index: 11, kind: input, shape index: {}]
  %s12 = inlined_call_operand.vmem [shape: f32[1,128], index: 12, kind: input, shape index: {}]
  %s13 = inlined_call_operand.hbm [shape: f32[2,1,128], index: 13, kind: output, shape index: {}]
  %s14 = sld [smem:[#allocation0]]
  $region85: #{dqn_forward.1} parent=0
    _
  %s16 = ssub.s32 1, %s14
  %s17 = scalar_select 0, %s16, %s14
  $region1: #{dqn_forward.1} parent=0
    #allocation2 [shape = 'u8[1024]{0}', space=vmem, size = 0x400, scoped, tag = 'output window, operand 0']
    #allocation3 [shape = 's32[2]{0}', space=sflag, size = 0x8, scoped, tag = 'scoped memory for dqn_forward.1']
    %18 = vsyncpa [#allocation3], 0
    %s19 = scalar_lea.sflag [#allocation3], 1
    %20 = vsyncpa %s19, 0
    loop: start=0, step=1, limit=4
    $region2: #{dqn_forward.1} parent=1 // loop_pre_header
      _
    $region3: #{dqn_forward.1} parent=1 // loop_header
      %s22 = sphi 0, %s26
      %p23 = scmp.ge.s32.totalorder %s22, 4
      %s32 = sphi 0, %s34
      %s35 = sphi 0, %s32
      %s36 = sphi 0, %s35
      %s52 = sphi 0, %s36
      %s58 = sphi 0, %s60
      %s61 = sphi 0, %s58
      %s62 = sphi 0, %s61
      %s78 = sphi 0, %s62
      %s82 = sphi 0, %s82
      %s84 = sphi 0, %s82
      %s85 = sphi 0, %s84
      %s99 = sphi 0, %s85
      %s103 = sphi 0, %s103
      %s105 = sphi 0, %s103
      %s106 = sphi 0, %s105
      %s120 = sphi 0, %s106
      %s124 = sphi 0, %s124
      %s126 = sphi 0, %s124
      %s127 = sphi 0, %s126
      %s141 = sphi 0, %s127
      %s145 = sphi 0, %s145
      %s147 = sphi 0, %s145
      %s148 = sphi 0, %s147
      %s162 = sphi 0, %s148
      %s166 = sphi 0, %s166
      %s168 = sphi 0, %s166
      %s169 = sphi 0, %s168
      %s183 = sphi 0, %s169
      %s187 = sphi 0, %s187
      %s189 = sphi 0, %s187
      %s190 = sphi 0, %s189
      %s204 = sphi 0, %s190
      %s208 = sphi 0, %s208
      %s210 = sphi 0, %s208
      %s211 = sphi 0, %s210
      %s225 = sphi 0, %s211
      %s229 = sphi 0, %s229
      %s231 = sphi 0, %s229
      %s232 = sphi 0, %s231
      %s246 = sphi 0, %s232
      %s250 = sphi 0, %s250
      %s252 = sphi 0, %s250
      %s253 = sphi 0, %s252
      %s267 = sphi 0, %s253
      %s271 = sphi 0, %s271
      %s273 = sphi 0, %s271
      %s274 = sphi 0, %s273
      %s288 = sphi 0, %s274
      %s292 = sphi 0, %s292
      %s294 = sphi 0, %s292
      %s295 = sphi 0, %s294
      %s309 = sphi 0, %s295
      %s315 = sphi 0, %s317
      %s318 = sphi 0, %s315
      %s319 = sphi 0, %s318
      %s335 = sphi 0, %s319
    $region4: #{dqn_forward.1} parent=1 // loop_header_branch
      %25 = sbr.rel (%p23) target = $region8
    $region5: #{dqn_forward.1} parent=1 // loop_body
      %s27 = ssub.s32 %s22, 1
      %s28 = ssub.s32 %s22, 2
      %s29 = sadd.s32 %s22, 1
      %s30 = ssub.s32 %s22, %s29
      %p31 = scmp.eq.s32.totalorder %s30, 0
      %s33 = sadd.s32 %s32, 1
      %s34 = scalar_select %p31, %s32, %s33
      %p37 = pneg %p31
      %p38 = scmp.eq.s32.totalorder %s22, 1
      %p39 = por %p37, %p38
      %p40 = scmp.ne.s32.totalorder %s32, %s35
      %p41 = scmp.eq.s32.totalorder %s22, 0
      %p42 = por %p40, %p41
      %p43 = scmp.ne.s32.totalorder %s32, %s35
      %p44 = scmp.eq.s32.totalorder %s27, 1
      %p45 = por %p43, %p44
      %p46 = scmp.ne.s32.totalorder %s35, %s36
      %p47 = scmp.eq.s32.totalorder %s27, 0
      %p48 = por %p46, %p47
      %p49 = scmp.ne.s32.totalorder %s35, %s36
      %p50 = scmp.eq.s32.totalorder %s28, 1
      %p51 = por %p49, %p50
      %p53 = scmp.ne.s32.totalorder %s36, %s52
      %p54 = scmp.eq.s32.totalorder %s28, 0
      %p55 = por %p53, %p54
      %s56 = ssub.s32 %s22, %s29
      %p57 = scmp.eq.s32.totalorder %s56, 0
      %s59 = sadd.s32 %s58, 1
      %s60 = scalar_select %p57, %s58, %s59
      %p63 = pneg %p57
      %p64 = scmp.eq.s32.totalorder %s22, 1
      %p65 = por %p63, %p64
      %p66 = scmp.ne.s32.totalorder %s58, %s61
      %p67 = scmp.eq.s32.totalorder %s22, 0
      %p68 = por %p66, %p67
      %p69 = scmp.ne.s32.totalorder %s58, %s61
      %p70 = scmp.eq.s32.totalorder %s27, 1
      %p71 = por %p69, %p70
      %p72 = scmp.ne.s32.totalorder %s61, %s62
      %p73 = scmp.eq.s32.totalorder %s27, 0
      %p74 = por %p72, %p73
      %p75 = scmp.ne.s32.totalorder %s61, %s62
      %p76 = scmp.eq.s32.totalorder %s28, 1
      %p77 = por %p75, %p76
      %p79 = scmp.ne.s32.totalorder %s62, %s78
      %p80 = scmp.eq.s32.totalorder %s28, 0
      %p81 = por %p79, %p80
      %s83 = sadd.s32 %s82, 1
      %p86 = scmp.eq.s32.totalorder %s22, 1
      %p87 = scmp.ne.s32.totalorder %s82, %s84
      %p88 = scmp.eq.s32.totalorder %s22, 0
      %p89 = por %p87, %p88
      %p90 = scmp.ne.s32.totalorder %s82, %s84
      %p91 = scmp.eq.s32.totalorder %s27, 1
      %p92 = por %p90, %p91
      %p93 = scmp.ne.s32.totalorder %s84, %s85
      %p94 = scmp.eq.s32.totalorder %s27, 0
      %p95 = por %p93, %p94
      %p96 = scmp.ne.s32.totalorder %s84, %s85
      %p97 = scmp.eq.s32.totalorder %s28, 1
      %p98 = por %p96, %p97
      %p100 = scmp.ne.s32.totalorder %s85, %s99
      %p101 = scmp.eq.s32.totalorder %s28, 0
      %p102 = por %p100, %p101
      %s104 = sadd.s32 %s103, 1
      %p107 = scmp.eq.s32.totalorder %s22, 1
      %p108 = scmp.ne.s32.totalorder %s103, %s105
      %p109 = scmp.eq.s32.totalorder %s22, 0
      %p110 = por %p108, %p109
      %p111 = scmp.ne.s32.totalorder %s103, %s105
      %p112 = scmp.eq.s32.totalorder %s27, 1
      %p113 = por %p111, %p112
      %p114 = scmp.ne.s32.totalorder %s105, %s106
      %p115 = scmp.eq.s32.totalorder %s27, 0
      %p116 = por %p114, %p115
      %p117 = scmp.ne.s32.totalorder %s105, %s106
      %p118 = scmp.eq.s32.totalorder %s28, 1
      %p119 = por %p117, %p118
      %p121 = scmp.ne.s32.totalorder %s106, %s120
      %p122 = scmp.eq.s32.totalorder %s28, 0
      %p123 = por %p121, %p122
      %s125 = sadd.s32 %s124, 1
      %p128 = scmp.eq.s32.totalorder %s22, 1
      %p129 = scmp.ne.s32.totalorder %s124, %s126
      %p130 = scmp.eq.s32.totalorder %s22, 0
      %p131 = por %p129, %p130
      %p132 = scmp.ne.s32.totalorder %s124, %s126
      %p133 = scmp.eq.s32.totalorder %s27, 1
      %p134 = por %p132, %p133
      %p135 = scmp.ne.s32.totalorder %s126, %s127
      %p136 = scmp.eq.s32.totalorder %s27, 0
      %p137 = por %p135, %p136
      %p138 = scmp.ne.s32.totalorder %s126, %s127
      %p139 = scmp.eq.s32.totalorder %s28, 1
      %p140 = por %p138, %p139
      %p142 = scmp.ne.s32.totalorder %s127, %s141
      %p143 = scmp.eq.s32.totalorder %s28, 0
      %p144 = por %p142, %p143
      %s146 = sadd.s32 %s145, 1
      %p149 = scmp.eq.s32.totalorder %s22, 1
      %p150 = scmp.ne.s32.totalorder %s145, %s147
      %p151 = scmp.eq.s32.totalorder %s22, 0
      %p152 = por %p150, %p151
      %p153 = scmp.ne.s32.totalorder %s145, %s147
      %p154 = scmp.eq.s32.totalorder %s27, 1
      %p155 = por %p153, %p154
      %p156 = scmp.ne.s32.totalorder %s147, %s148
      %p157 = scmp.eq.s32.totalorder %s27, 0
      %p158 = por %p156, %p157
      %p159 = scmp.ne.s32.totalorder %s147, %s148
      %p160 = scmp.eq.s32.totalorder %s28, 1
      %p161 = por %p159, %p160
      %p163 = scmp.ne.s32.totalorder %s148, %s162
      %p164 = scmp.eq.s32.totalorder %s28, 0
      %p165 = por %p163, %p164
      %s167 = sadd.s32 %s166, 1
      %p170 = scmp.eq.s32.totalorder %s22, 1
      %p171 = scmp.ne.s32.totalorder %s166, %s168
      %p172 = scmp.eq.s32.totalorder %s22, 0
      %p173 = por %p171, %p172
      %p174 = scmp.ne.s32.totalorder %s166, %s168
      %p175 = scmp.eq.s32.totalorder %s27, 1
      %p176 = por %p174, %p175
      %p177 = scmp.ne.s32.totalorder %s168, %s169
      %p178 = scmp.eq.s32.totalorder %s27, 0
      %p179 = por %p177, %p178
      %p180 = scmp.ne.s32.totalorder %s168, %s169
      %p181 = scmp.eq.s32.totalorder %s28, 1
      %p182 = por %p180, %p181
      %p184 = scmp.ne.s32.totalorder %s169, %s183
      %p185 = scmp.eq.s32.totalorder %s28, 0
      %p186 = por %p184, %p185
      %s188 = sadd.s32 %s187, 1
      %p191 = scmp.eq.s32.totalorder %s22, 1
      %p192 = scmp.ne.s32.totalorder %s187, %s189
      %p193 = scmp.eq.s32.totalorder %s22, 0
      %p194 = por %p192, %p193
      %p195 = scmp.ne.s32.totalorder %s187, %s189
      %p196 = scmp.eq.s32.totalorder %s27, 1
      %p197 = por %p195, %p196
      %p198 = scmp.ne.s32.totalorder %s189, %s190
      %p199 = scmp.eq.s32.totalorder %s27, 0
      %p200 = por %p198, %p199
      %p201 = scmp.ne.s32.totalorder %s189, %s190
      %p202 = scmp.eq.s32.totalorder %s28, 1
      %p203 = por %p201, %p202
      %p205 = scmp.ne.s32.totalorder %s190, %s204
      %p206 = scmp.eq.s32.totalorder %s28, 0
      %p207 = por %p205, %p206
      %s209 = sadd.s32 %s208, 1
      %p212 = scmp.eq.s32.totalorder %s22, 1
      %p213 = scmp.ne.s32.totalorder %s208, %s210
      %p214 = scmp.eq.s32.totalorder %s22, 0
      %p215 = por %p213, %p214
      %p216 = scmp.ne.s32.totalorder %s208, %s210
      %p217 = scmp.eq.s32.totalorder %s27, 1
      %p218 = por %p216, %p217
      %p219 = scmp.ne.s32.totalorder %s210, %s211
      %p220 = scmp.eq.s32.totalorder %s27, 0
      %p221 = por %p219, %p220
      %p222 = scmp.ne.s32.totalorder %s210, %s211
      %p223 = scmp.eq.s32.totalorder %s28, 1
      %p224 = por %p222, %p223
      %p226 = scmp.ne.s32.totalorder %s211, %s225
      %p227 = scmp.eq.s32.totalorder %s28, 0
      %p228 = por %p226, %p227
      %s230 = sadd.s32 %s229, 1
      %p233 = scmp.eq.s32.totalorder %s22, 1
      %p234 = scmp.ne.s32.totalorder %s229, %s231
      %p235 = scmp.eq.s32.totalorder %s22, 0
      %p236 = por %p234, %p235
      %p237 = scmp.ne.s32.totalorder %s229, %s231
      %p238 = scmp.eq.s32.totalorder %s27, 1
      %p239 = por %p237, %p238
      %p240 = scmp.ne.s32.totalorder %s231, %s232
      %p241 = scmp.eq.s32.totalorder %s27, 0
      %p242 = por %p240, %p241
      %p243 = scmp.ne.s32.totalorder %s231, %s232
      %p244 = scmp.eq.s32.totalorder %s28, 1
      %p245 = por %p243, %p244
      %p247 = scmp.ne.s32.totalorder %s232, %s246
      %p248 = scmp.eq.s32.totalorder %s28, 0
      %p249 = por %p247, %p248
      %s251 = sadd.s32 %s250, 1
      %p254 = scmp.eq.s32.totalorder %s22, 1
      %p255 = scmp.ne.s32.totalorder %s250, %s252
      %p256 = scmp.eq.s32.totalorder %s22, 0
      %p257 = por %p255, %p256
      %p258 = scmp.ne.s32.totalorder %s250, %s252
      %p259 = scmp.eq.s32.totalorder %s27, 1
      %p260 = por %p258, %p259
      %p261 = scmp.ne.s32.totalorder %s252, %s253
      %p262 = scmp.eq.s32.totalorder %s27, 0
      %p263 = por %p261, %p262
      %p264 = scmp.ne.s32.totalorder %s252, %s253
      %p265 = scmp.eq.s32.totalorder %s28, 1
      %p266 = por %p264, %p265
      %p268 = scmp.ne.s32.totalorder %s253, %s267
      %p269 = scmp.eq.s32.totalorder %s28, 0
      %p270 = por %p268, %p269
      %s272 = sadd.s32 %s271, 1
      %p275 = scmp.eq.s32.totalorder %s22, 1
      %p276 = scmp.ne.s32.totalorder %s271, %s273
      %p277 = scmp.eq.s32.totalorder %s22, 0
      %p278 = por %p276, %p277
      %p279 = scmp.ne.s32.totalorder %s271, %s273
      %p280 = scmp.eq.s32.totalorder %s27, 1
      %p281 = por %p279, %p280
      %p282 = scmp.ne.s32.totalorder %s273, %s274
      %p283 = scmp.eq.s32.totalorder %s27, 0
      %p284 = por %p282, %p283
      %p285 = scmp.ne.s32.totalorder %s273, %s274
      %p286 = scmp.eq.s32.totalorder %s28, 1
      %p287 = por %p285, %p286
      %p289 = scmp.ne.s32.totalorder %s274, %s288
      %p290 = scmp.eq.s32.totalorder %s28, 0
      %p291 = por %p289, %p290
      %s293 = sadd.s32 %s292, 1
      %p296 = scmp.eq.s32.totalorder %s22, 1
      %p297 = scmp.ne.s32.totalorder %s292, %s294
      %p298 = scmp.eq.s32.totalorder %s22, 0
      %p299 = por %p297, %p298
      %p300 = scmp.ne.s32.totalorder %s292, %s294
      %p301 = scmp.eq.s32.totalorder %s27, 1
      %p302 = por %p300, %p301
      %p303 = scmp.ne.s32.totalorder %s294, %s295
      %p304 = scmp.eq.s32.totalorder %s27, 0
      %p305 = por %p303, %p304
      %p306 = scmp.ne.s32.totalorder %s294, %s295
      %p307 = scmp.eq.s32.totalorder %s28, 1
      %p308 = por %p306, %p307
      %p310 = scmp.ne.s32.totalorder %s295, %s309
      %p311 = scmp.eq.s32.totalorder %s28, 0
      %p312 = por %p310, %p311
      %s313 = ssub.s32 %s22, %s29
      %p314 = scmp.eq.s32.totalorder %s313, 0
      %s316 = sadd.s32 %s315, 1
      %s317 = scalar_select %p314, %s315, %s316
      %p320 = pneg %p314
      %p321 = scmp.eq.s32.totalorder %s22, 1
      %p322 = por %p320, %p321
      %p323 = scmp.ne.s32.totalorder %s315, %s318
      %p324 = scmp.eq.s32.totalorder %s22, 0
      %p325 = por %p323, %p324
      %p326 = scmp.ne.s32.totalorder %s315, %s318
      %p327 = scmp.eq.s32.totalorder %s27, 1
      %p328 = por %p326, %p327
      %p329 = scmp.ne.s32.totalorder %s318, %s319
      %p330 = scmp.eq.s32.totalorder %s27, 0
      %p331 = por %p329, %p330
      %p332 = scmp.ne.s32.totalorder %s318, %s319
      %p333 = scmp.eq.s32.totalorder %s28, 1
      %p334 = por %p332, %p333
      %p336 = scmp.ne.s32.totalorder %s319, %s335
      %p337 = scmp.eq.s32.totalorder %s28, 0
      %p338 = por %p336, %p337
      %p339 = scmp.le.s32.totalorder 1, %s22
      %p340 = scmp.lt.s32.totalorder %s22, 3
      %p341 = pnand %p339, %p340
      %p342 = pneg %p341
      // Predicated region
      $region9: #{dqn_forward.1} parent=5 // pred_check
        _
      $region10: #{dqn_forward.1} parent=5 // pred_check_branch
        %344 = sbr.rel (%p341) target = $region12
      $region11: #{dqn_forward.1} parent=5 // pred_region
        %s345 = ssub.s32 %s22, 1
        // Predicated region
        $region13: #{dqn_forward.1} parent=11 // pred_check
          %p346 = pneg %p95
        $region14: #{dqn_forward.1} parent=11 // pred_check_branch
          %348 = sbr.rel (%p346) target = $region16
        $region15: #{dqn_forward.1} parent=11 // pred_region
          _
        $region16: #{dqn_forward.1} parent=11 // pred_fallthru
          _
        // Predicated region
        $region17: #{dqn_forward.1} parent=11 // pred_check
          %p349 = pneg %p116
        $region18: #{dqn_forward.1} parent=11 // pred_check_branch
          %351 = sbr.rel (%p349) target = $region20
        $region19: #{dqn_forward.1} parent=11 // pred_region
          _
        $region20: #{dqn_forward.1} parent=11 // pred_fallthru
          _
        // Predicated region
        $region21: #{dqn_forward.1} parent=11 // pred_check
          %p352 = pneg %p137
        $region22: #{dqn_forward.1} parent=11 // pred_check_branch
          %354 = sbr.rel (%p352) target = $region24
        $region23: #{dqn_forward.1} parent=11 // pred_region
          _
        $region24: #{dqn_forward.1} parent=11 // pred_fallthru
          _
        // Predicated region
        $region25: #{dqn_forward.1} parent=11 // pred_check
          %p355 = pneg %p158
        $region26: #{dqn_forward.1} parent=11 // pred_check_branch
          %357 = sbr.rel (%p355) target = $region28
        $region27: #{dqn_forward.1} parent=11 // pred_region
          _
        $region28: #{dqn_forward.1} parent=11 // pred_fallthru
          _
        // Predicated region
        $region29: #{dqn_forward.1} parent=11 // pred_check
          %p358 = pneg %p179
        $region30: #{dqn_forward.1} parent=11 // pred_check_branch
          %360 = sbr.rel (%p358) target = $region32
        $region31: #{dqn_forward.1} parent=11 // pred_region
          _
        $region32: #{dqn_forward.1} parent=11 // pred_fallthru
          _
        // Predicated region
        $region33: #{dqn_forward.1} parent=11 // pred_check
          %p361 = pneg %p200
        $region34: #{dqn_forward.1} parent=11 // pred_check_branch
          %363 = sbr.rel (%p361) target = $region36
        $region35: #{dqn_forward.1} parent=11 // pred_region
          _
        $region36: #{dqn_forward.1} parent=11 // pred_fallthru
          _
        // Predicated region
        $region37: #{dqn_forward.1} parent=11 // pred_check
          %p364 = pneg %p221
        $region38: #{dqn_forward.1} parent=11 // pred_check_branch
          %366 = sbr.rel (%p364) target = $region40
        $region39: #{dqn_forward.1} parent=11 // pred_region
          _
        $region40: #{dqn_forward.1} parent=11 // pred_fallthru
          _
        // Predicated region
        $region41: #{dqn_forward.1} parent=11 // pred_check
          %p367 = pneg %p242
        $region42: #{dqn_forward.1} parent=11 // pred_check_branch
          %369 = sbr.rel (%p367) target = $region44
        $region43: #{dqn_forward.1} parent=11 // pred_region
          _
        $region44: #{dqn_forward.1} parent=11 // pred_fallthru
          _
        // Predicated region
        $region45: #{dqn_forward.1} parent=11 // pred_check
          %p370 = pneg %p263
        $region46: #{dqn_forward.1} parent=11 // pred_check_branch
          %372 = sbr.rel (%p370) target = $region48
        $region47: #{dqn_forward.1} parent=11 // pred_region
          _
        $region48: #{dqn_forward.1} parent=11 // pred_fallthru
          _
        // Predicated region
        $region49: #{dqn_forward.1} parent=11 // pred_check
          %p373 = pneg %p284
        $region50: #{dqn_forward.1} parent=11 // pred_check_branch
          %375 = sbr.rel (%p373) target = $region52
        $region51: #{dqn_forward.1} parent=11 // pred_region
          _
        $region52: #{dqn_forward.1} parent=11 // pred_fallthru
          _
        // Predicated region
        $region53: #{dqn_forward.1} parent=11 // pred_check
          %p376 = pneg %p305
        $region54: #{dqn_forward.1} parent=11 // pred_check_branch
          %378 = sbr.rel (%p376) target = $region56
        $region55: #{dqn_forward.1} parent=11 // pred_region
          _
        $region56: #{dqn_forward.1} parent=11 // pred_fallthru
          _
      $region12: #{dqn_forward.1} parent=5 // pred_fallthru
        _
      %p379 = scmp.lt.s32.totalorder %s22, 2
      // Predicated region
      $region57: #{dqn_forward.1} parent=5 // pred_check
        %p380 = pneg %p379
      $region58: #{dqn_forward.1} parent=5 // pred_check_branch
        %382 = sbr.rel (%p380) target = $region60
      $region59: #{dqn_forward.1} parent=5 // pred_region
        // Predicated region
        $region61: #{dqn_forward.1} parent=59 // pred_check
          %p383 = pneg %p42
        $region62: #{dqn_forward.1} parent=59 // pred_check_branch
          %385 = sbr.rel (%p383) target = $region64
        $region63: #{dqn_forward.1} parent=59 // pred_region
          %p386 = scmp.lt.s32.totalorder %s22, 1
          %s387 = scalar_select %p386, %s22, 1
          %s388 = smul.addr %s387, 64
          %s389 = smul.addr %s388, 8
          %s390 = scalar_lea.vmem %s0, %s389
        $region64: #{dqn_forward.1} parent=59 // pred_fallthru
          _
        // Predicated region
        $region65: #{dqn_forward.1} parent=59 // pred_check
          %p391 = pneg %p68
        $region66: #{dqn_forward.1} parent=59 // pred_check_branch
          %393 = sbr.rel (%p391) target = $region68
        $region67: #{dqn_forward.1} parent=59 // pred_region
          %p394 = scmp.lt.s32.totalorder %s22, 1
          %s395 = scalar_select %p394, %s22, 1
          %s396 = scalar_lea.vmem %s1, %s395
        $region68: #{dqn_forward.1} parent=59 // pred_fallthru
          _
      $region60: #{dqn_forward.1} parent=5 // pred_fallthru
        _
      %p397 = scmp.le.s32.totalorder 1, %s22
      %p398 = scmp.lt.s32.totalorder %s22, 3
      %p399 = pnand %p397, %p398
      %p400 = pneg %p399
      // Predicated region
      $region69: #{dqn_forward.1} parent=5 // pred_check
        _
      $region70: #{dqn_forward.1} parent=5 // pred_check_branch
        %402 = sbr.rel (%p399) target = $region72
      $region71: #{dqn_forward.1} parent=5 // pred_region
        %s403 = ssub.s32 %s22, 1
        %p404 = scmp.lt.s32.totalorder %s27, 1
        %s405 = scalar_select %p404, %s27, 1
        %s406 = smul.addr %s405, 64
        %s407 = smul.addr %s406, 8
        %s408 = scalar_lea.vmem %s0, %s407
        %p409 = pneg %p48
        %p410 = pneg %p45
        %p411 = scmp.lt.s32.totalorder %s27, 1
        %s412 = scalar_select %p411, %s27, 1
        %s413 = scalar_lea.vmem %s1, %s412
        %p414 = pneg %p74
        %p415 = pneg %p71
        %p416 = pneg %p95
        %p417 = pneg %p92
        %p418 = pneg %p116
        %p419 = pneg %p113
        %p420 = pneg %p137
        %p421 = pneg %p134
        %p422 = pneg %p158
        %p423 = pneg %p155
        %p424 = pneg %p179
        %p425 = pneg %p176
        %p426 = pneg %p200
        %p427 = pneg %p197
        %p428 = pneg %p221
        %p429 = pneg %p218
        %p430 = pneg %p242
        %p431 = pneg %p239
        %p432 = pneg %p263
        %p433 = pneg %p260
        %p434 = pneg %p284
        %p435 = pneg %p281
        %p436 = pneg %p305
        %p437 = pneg %p302
        %p438 = pneg %p331
        %p439 = pneg %p328
        %s440 = sand.u32 %s318, 1
        %s441 = scalar_lea.sflag [#allocation3], %s440
        %s442 = sand.u32 %s318, 1
        %s443 = scalar_lea.vmem [#allocation2], %s442
        %p444 = scmp.lt.s32.totalorder %s27, 1
        %s445 = scalar_select %p444, %s27, 1
        %s446 = smul.addr %s445, 64
        %s447 = smul.addr %s446, 8
        %s448 = scalar_lea.vmem %s0, %s447
        %p449 = scmp.lt.s32.totalorder %s27, 1
        %s450 = scalar_select %p449, %s27, 1
        %s451 = scalar_lea.vmem %s1, %s450
        %v452 = vld [vmem:[%s2] sm:$0xff]
        %v453 = vld [vmem:[%s2 + $0x8] sm:$0xff]
        %v454 = vld [vmem:[%s2 + $0x10] sm:$0xff]
        %v455 = vld [vmem:[%s2 + $0x18] sm:$0xff]
        %v456 = vld [vmem:[%s2 + $0x20] sm:$0xff]
        %v457 = vld [vmem:[%s2 + $0x28] sm:$0xff]
        %v458 = vld [vmem:[%s2 + $0x30] sm:$0xff]
        %v459 = vld [vmem:[%s2 + $0x38] sm:$0xff]
        %v460 = vld [vmem:[%s2 + $0x40] sm:$0xff]
        %v461 = vld [vmem:[%s2 + $0x48] sm:$0xff]
        %v462 = vld [vmem:[%s2 + $0x50] sm:$0xff]
        %v463 = vld [vmem:[%s2 + $0x58] sm:$0xff]
        %v464 = vld [vmem:[%s2 + $0x60] sm:$0xff]
        %v465 = vld [vmem:[%s2 + $0x68] sm:$0xff]
        %v466 = vld [vmem:[%s2 + $0x70] sm:$0xff]
        %v467 = vld [vmem:[%s2 + $0x78] sm:$0xff]
        %v468 = vld [vmem:[%s2 + $0x80] sm:$0xff]
        %v469 = vld [vmem:[%s2 + $0x88] sm:$0xff]
        %v470 = vld [vmem:[%s2 + $0x90] sm:$0xff]
        %v471 = vld [vmem:[%s2 + $0x98] sm:$0xff]
        %v472 = vld [vmem:[%s2 + $0xa0] sm:$0xff]
        %v473 = vld [vmem:[%s2 + $0xa8] sm:$0xff]
        %v474 = vld [vmem:[%s2 + $0xb0] sm:$0xff]
        %v475 = vld [vmem:[%s2 + $0xb8] sm:$0xff]
        %v476 = vld [vmem:[%s3] sm:$0x1]
        %v477 = vld [vmem:[%s448] sm:$0xff]
        %v478 = vld [vmem:[%s448 + $0x8] sm:$0xff]
        %v479 = vld [vmem:[%s448 + $0x10] sm:$0xff]
        %v480 = vld [vmem:[%s448 + $0x18] sm:$0xff]
        %v482 = vlaneseq
        %v483 = vshrl.u32 %v482, 7
        %v484 = vsub.s32 0, %v483
        %v485 = vrot.slane %v476, %v484
        %vm487 = vcmask 523264
        %v489 = vsel %vm487, %v478, 0
        %v492 = vsel %vm487, %v480, 0
        %494 = vmatprep.subr.mxu0 0.0
        %495 = vmatpush1.msra.mxu0 %v452
        %496 = vmatprep.subr.mxu0 0.0
        %497 = vmatpush1.msra.mxu0 %v453
        %498 = vmatprep.subr.mxu0 0.0
        %499 = vmatpush1.msra.mxu0 %v454
        %500 = vmatprep.subr.mxu0 0.0
        %501 = vmatpush1.msra.mxu0 %v455
        %502 = vmatprep.subr.mxu0 0.0
        %503 = vmatpush1.msra.mxu0 %v456
        %504 = vmatprep.subr.mxu0 0.0
        %505 = vmatpush1.msra.mxu0 %v457
        %506 = vmatprep.subr.mxu0 0.0
        %507 = vmatpush1.msra.mxu0 %v458
        %508 = vmatprep.subr.mxu0 0.0
        %509 = vmatpush1.msra.mxu0 %v459
        %510 = vmatprep.subr.mxu0 0.0
        %511 = vmatpush1.msra.mxu0 %v460
        %512 = vmatprep.subr.mxu0 0.0
        %513 = vmatpush1.msra.mxu0 %v461
        %514 = vmatprep.subr.mxu0 0.0
        %515 = vmatpush1.msra.mxu0 %v462
        %516 = vmatprep.subr.mxu0 0.0
        %517 = vmatpush1.msra.mxu0 %v463
        %518 = vmatprep.subr.mxu0 0.0
        %519 = vmatpush1.msra.mxu0 %v464
        %520 = vmatprep.subr.mxu0 0.0
        %521 = vmatpush1.msra.mxu0 %v465
        %522 = vmatprep.subr.mxu0 0.0
        %523 = vmatpush1.msra.mxu0 %v466
        %524 = vmatprep.subr.mxu0 0.0
        %525 = vmatpush1.msra.mxu0 %v467
        %526 = vmatprep.subr.mxu0 0.0
        %527 = vmatpush1.msra.mxu0 %v468
        %528 = vmatprep.subr.mxu0 0.0
        %529 = vmatpush1.msra.mxu0 %v469
        %530 = vmatprep.subr.mxu0 0.0
        %531 = vmatpush1.msra.mxu0 %v470
        %532 = vmatprep.subr.mxu0 0.0
        %533 = vmatpush1.msra.mxu0 %v471
        %534 = vmatprep.subr.mxu0 0.0
        %535 = vmatpush1.msra.mxu0 %v472
        %536 = vmatprep.subr.mxu0 0.0
        %537 = vmatpush1.msra.mxu0 %v473
        %538 = vmatprep.subr.mxu0 0.0
        %539 = vmatpush1.msra.mxu0 %v474
        %540 = vmatprep.subr.mxu0 0.0
        %541 = vmatpush1.msra.mxu0 %v475
        %542 = vmatprep.subr.mxu0 0.0
        %543 = vmatpush1.msra.mxu0 0.0
        %544 = vmatprep.subr.mxu0 0.0
        %545 = vmatpush1.msra.mxu0 0.0
        %546 = vmatprep.subr.mxu0 0.0
        %547 = vmatpush1.msra.mxu0 0.0
        %548 = vmatprep.subr.mxu0 0.0
        %549 = vmatpush1.msra.mxu0 0.0
        %550 = vmatprep.subr.mxu0 0.0
        %551 = vmatpush1.msra.mxu0 0.0
        %552 = vmatprep.subr.mxu0 0.0
        %553 = vmatpush1.msra.mxu0 0.0
        %554 = vmatprep.subr.mxu0 0.0
        %555 = vmatpush1.msra.mxu0 0.0
        %556 = vmatprep.subr.mxu0 0.0
        %557 = vmatpush1.msra.mxu0 0.0
        %558 = vmatprep.mubr.f32.mxu0 %v489
        %559 = vmatmul.mubr.f32.gmra.mrb[0].mxu0 %v477
        %v560 = vpop.f32.mrb[0].mxu0
        %v561 = vadd.f32 %v485, %v560
        %v562 = vpop.f32.mrb[0].mxu0
        %563 = vmatprep.mubr.f32.mxu0 %v492
        %564 = vmatmul.mubr.f32.gmra.mrb[0].mxu0 %v479
        %v565 = vpop.f32.mrb[0].mxu0
        %v566 = vadd.f32 %v485, %v565
        %v567 = vpop.f32.mrb[0].mxu0
        %568 = vdwg.mxu0
        %v569 = vmax.f32 %v561, 0.0
        %v570 = vmax.f32 %v566, 0.0
        %v571 = vld [vmem:[%s4] sm:$0xff]
        %v572 = vld [vmem:[%s4 + $0x8] sm:$0xff]
        %v573 = vld [vmem:[%s4 + $0x10] sm:$0xff]
        %v574 = vld [vmem:[%s4 + $0x18] sm:$0xff]
        %v575 = vld [vmem:[%s448 + $0x20] sm:$0xff]
        %v576 = vld [vmem:[%s448 + $0x28] sm:$0xff]
        %v577 = vld [vmem:[%s448 + $0x30] sm:$0xff]
        %v578 = vld [vmem:[%s448 + $0x38] sm:$0xff]
        %v580 = vsel %vm487, %v576, 0
        %v583 = vsel %vm487, %v578, 0
        %585 = vmatprep.subr.mxu0 0.0
        %586 = vmatpush1.msra.mxu0 %v452
        %587 = vmatprep.subr.mxu0 0.0
        %588 = vmatpush1.msra.mxu0 %v453
        %589 = vmatprep.subr.mxu0 0.0
        %590 = vmatpush1.msra.mxu0 %v454
        %591 = vmatprep.subr.mxu0 0.0
        %592 = vmatpush1.msra.mxu0 %v455
        %593 = vmatprep.subr.mxu0 0.0
        %594 = vmatpush1.msra.mxu0 %v456
        %595 = vmatprep.subr.mxu0 0.0
        %596 = vmatpush1.msra.mxu0 %v457
        %597 = vmatprep.subr.mxu0 0.0
        %598 = vmatpush1.msra.mxu0 %v458
        %599 = vmatprep.subr.mxu0 0.0
        %600 = vmatpush1.msra.mxu0 %v459
        %601 = vmatprep.subr.mxu0 0.0
        %602 = vmatpush1.msra.mxu0 %v460
        %603 = vmatprep.subr.mxu0 0.0
        %604 = vmatpush1.msra.mxu0 %v461
        %605 = vmatprep.subr.mxu0 0.0
        %606 = vmatpush1.msra.mxu0 %v462
        %607 = vmatprep.subr.mxu0 0.0
        %608 = vmatpush1.msra.mxu0 %v463
        %609 = vmatprep.subr.mxu0 0.0
        %610 = vmatpush1.msra.mxu0 %v464
        %611 = vmatprep.subr.mxu0 0.0
        %612 = vmatpush1.msra.mxu0 %v465
        %613 = vmatprep.subr.mxu0 0.0
        %614 = vmatpush1.msra.mxu0 %v466
        %615 = vmatprep.subr.mxu0 0.0
        %616 = vmatpush1.msra.mxu0 %v467
        %617 = vmatprep.subr.mxu0 0.0
        %618 = vmatpush1.msra.mxu0 %v468
        %619 = vmatprep.subr.mxu0 0.0
        %620 = vmatpush1.msra.mxu0 %v469
        %621 = vmatprep.subr.mxu0 0.0
        %622 = vmatpush1.msra.mxu0 %v470
        %623 = vmatprep.subr.mxu0 0.0
        %624 = vmatpush1.msra.mxu0 %v471
        %625 = vmatprep.subr.mxu0 0.0
        %626 = vmatpush1.msra.mxu0 %v472
        %627 = vmatprep.subr.mxu0 0.0
        %628 = vmatpush1.msra.mxu0 %v473
        %629 = vmatprep.subr.mxu0 0.0
        %630 = vmatpush1.msra.mxu0 %v474
        %631 = vmatprep.subr.mxu0 0.0
        %632 = vmatpush1.msra.mxu0 %v475
        %633 = vmatprep.subr.mxu0 0.0
        %634 = vmatpush1.msra.mxu0 0.0
        %635 = vmatprep.subr.mxu0 0.0
        %636 = vmatpush1.msra.mxu0 0.0
        %637 = vmatprep.subr.mxu0 0.0
        %638 = vmatpush1.msra.mxu0 0.0
        %639 = vmatprep.subr.mxu0 0.0
        %640 = vmatpush1.msra.mxu0 0.0
        %641 = vmatprep.subr.mxu0 0.0
        %642 = vmatpush1.msra.mxu0 0.0
        %643 = vmatprep.subr.mxu0 0.0
        %644 = vmatpush1.msra.mxu0 0.0
        %645 = vmatprep.subr.mxu0 0.0
        %646 = vmatpush1.msra.mxu0 0.0
        %647 = vmatprep.subr.mxu0 0.0
        %648 = vmatpush1.msra.mxu0 0.0
        %649 = vmatprep.mubr.f32.mxu0 %v580
        %650 = vmatmul.mubr.f32.gmra.mrb[0].mxu0 %v575
        %v651 = vpop.f32.mrb[0].mxu0
        %v652 = vadd.f32 %v485, %v651
        %v653 = vpop.f32.mrb[0].mxu0
        %654 = vmatprep.mubr.f32.mxu0 %v583
        %655 = vmatmul.mubr.f32.gmra.mrb[0].mxu0 %v577
        %v656 = vpop.f32.mrb[0].mxu0
        %v657 = vadd.f32 %v485, %v656
        %v658 = vpop.f32.mrb[0].mxu0
        %659 = vdwg.mxu0
        %v660 = vmax.f32 %v652, 0.0
        %v661 = vmax.f32 %v657, 0.0
        %s662 = scalar_lea.vmem %s4, 32
        %v663 = vld [vmem:[%s662] sm:$0xff]
        %v664 = vld [vmem:[%s662 + $0x8] sm:$0xff]
        %v665 = vld [vmem:[%s662 + $0x10] sm:$0xff]
        %v666 = vld [vmem:[%s662 + $0x18] sm:$0xff]
        %vm667 = vcmask 261120
        %v669 = vsel %vm667, %v660, 0
        %v672 = vsel %vm667, %v661, 0
        %674 = vmatprep.subr.mxu0 0.0
        %675 = vmatpush1.msra.mxu0 %v663
        %676 = vmatprep.subr.mxu0 0.0
        %677 = vmatpush1.msra.mxu0 %v664
        %678 = vmatprep.subr.mxu0 0.0
        %679 = vmatpush1.msra.mxu0 %v665
        %680 = vmatprep.subr.mxu0 0.0
        %681 = vmatpush1.msra.mxu0 %v666
        %682 = vmatprep.subr.mxu0 0.0
        %683 = vmatpush1.msra.mxu0 0.0
        %684 = vmatprep.subr.mxu0 0.0
        %685 = vmatpush1.msra.mxu0 0.0
        %686 = vmatprep.subr.mxu0 0.0
        %687 = vmatpush1.msra.mxu0 0.0
        %688 = vmatprep.subr.mxu0 0.0
        %689 = vmatpush1.msra.mxu0 0.0
        %690 = vmatprep.subr.mxu0 0.0
        %691 = vmatpush1.msra.mxu0 0.0
        %692 = vmatprep.subr.mxu0 0.0
        %693 = vmatpush1.msra.mxu0 0.0
        %694 = vmatprep.subr.mxu0 0.0
        %695 = vmatpush1.msra.mxu0 0.0
        %696 = vmatprep.subr.mxu0 0.0
        %697 = vmatpush1.msra.mxu0 0.0
        %698 = vmatprep.subr.mxu0 0.0
        %699 = vmatpush1.msra.mxu0 0.0
        %700 = vmatprep.subr.mxu0 0.0
        %701 = vmatpush1.msra.mxu0 0.0
        %702 = vmatprep.subr.mxu0 0.0
        %703 = vmatpush1.msra.mxu0 0.0
        %704 = vmatprep.subr.mxu0 0.0
        %705 = vmatpush1.msra.mxu0 0.0
        %706 = vmatprep.subr.mxu0 0.0
        %707 = vmatpush1.msra.mxu0 0.0
        %708 = vmatprep.subr.mxu0 0.0
        %709 = vmatpush1.msra.mxu0 0.0
        %710 = vmatprep.subr.mxu0 0.0
        %711 = vmatpush1.msra.mxu0 0.0
        %712 = vmatprep.subr.mxu0 0.0
        %713 = vmatpush1.msra.mxu0 0.0
        %714 = vmatprep.subr.mxu0 0.0
        %715 = vmatpush1.msra.mxu0 0.0
        %716 = vmatprep.subr.mxu0 0.0
        %717 = vmatpush1.msra.mxu0 0.0
        %718 = vmatprep.subr.mxu0 0.0
        %719 = vmatpush1.msra.mxu0 0.0
        %720 = vmatprep.subr.mxu0 0.0
        %721 = vmatpush1.msra.mxu0 0.0
        %722 = vmatprep.subr.mxu0 0.0
        %723 = vmatpush1.msra.mxu0 0.0
        %724 = vmatprep.subr.mxu0 0.0
        %725 = vmatpush1.msra.mxu0 0.0
        %726 = vmatprep.subr.mxu0 0.0
        %727 = vmatpush1.msra.mxu0 0.0
        %728 = vmatprep.subr.mxu0 0.0
        %729 = vmatpush1.msra.mxu0 0.0
        %730 = vmatprep.subr.mxu0 0.0
        %731 = vmatpush1.msra.mxu0 0.0
        %732 = vmatprep.subr.mxu0 0.0
        %733 = vmatpush1.msra.mxu0 0.0
        %734 = vmatprep.subr.mxu0 0.0
        %735 = vmatpush1.msra.mxu0 0.0
        %736 = vmatprep.subr.mxu0 0.0
        %737 = vmatpush1.msra.mxu0 0.0
        %738 = vmatprep.mubr.f32.mxu0 0.0
        %739 = vmatmul.mubr.f32.gmra.mrb[0].mxu0 %v669
        %v740 = vpop.f32.mrb[0].mxu0
        %v741 = vadd.f32 0.0, %v740
        %v742 = vpop.f32.mrb[0].mxu0
        %743 = vmatprep.mubr.f32.mxu0 0.0
        %744 = vmatmul.mubr.f32.gmra.mrb[0].mxu0 %v672
        %v745 = vpop.f32.mrb[0].mxu0
        %v746 = vadd.f32 0.0, %v745
        %v747 = vpop.f32.mrb[0].mxu0
        %748 = vdwg.mxu0
        %v750 = vsel %vm667, %v569, 0
        %v753 = vsel %vm667, %v570, 0
        %755 = vmatprep.subr.mxu0 0.0
        %756 = vmatpush1.msra.mxu0 %v571
        %757 = vmatprep.subr.mxu0 0.0
        %758 = vmatpush1.msra.mxu0 %v572
        %759 = vmatprep.subr.mxu0 0.0
        %760 = vmatpush1.msra.mxu0 %v573
        %761 = vmatprep.subr.mxu0 0.0
        %762 = vmatpush1.msra.mxu0 %v574
        %763 = vmatprep.subr.mxu0 0.0
        %764 = vmatpush1.msra.mxu0 0.0
        %765 = vmatprep.subr.mxu0 0.0
        %766 = vmatpush1.msra.mxu0 0.0
        %767 = vmatprep.subr.mxu0 0.0
        %768 = vmatpush1.msra.mxu0 0.0
        %769 = vmatprep.subr.mxu0 0.0
        %770 = vmatpush1.msra.mxu0 0.0
        %771 = vmatprep.subr.mxu0 0.0
        %772 = vmatpush1.msra.mxu0 0.0
        %773 = vmatprep.subr.mxu0 0.0
        %774 = vmatpush1.msra.mxu0 0.0
        %775 = vmatprep.subr.mxu0 0.0
        %776 = vmatpush1.msra.mxu0 0.0
        %777 = vmatprep.subr.mxu0 0.0
        %778 = vmatpush1.msra.mxu0 0.0
        %779 = vmatprep.subr.mxu0 0.0
        %780 = vmatpush1.msra.mxu0 0.0
        %781 = vmatprep.subr.mxu0 0.0
        %782 = vmatpush1.msra.mxu0 0.0
        %783 = vmatprep.subr.mxu0 0.0
        %784 = vmatpush1.msra.mxu0 0.0
        %785 = vmatprep.subr.mxu0 0.0
        %786 = vmatpush1.msra.mxu0 0.0
        %787 = vmatprep.subr.mxu0 0.0
        %788 = vmatpush1.msra.mxu0 0.0
        %789 = vmatprep.subr.mxu0 0.0
        %790 = vmatpush1.msra.mxu0 0.0
        %791 = vmatprep.subr.mxu0 0.0
        %792 = vmatpush1.msra.mxu0 0.0
        %793 = vmatprep.subr.mxu0 0.0
        %794 = vmatpush1.msra.mxu0 0.0
        %795 = vmatprep.subr.mxu0 0.0
        %796 = vmatpush1.msra.mxu0 0.0
        %797 = vmatprep.subr.mxu0 0.0
        %798 = vmatpush1.msra.mxu0 0.0
        %799 = vmatprep.subr.mxu0 0.0
        %800 = vmatpush1.msra.mxu0 0.0
        %801 = vmatprep.subr.mxu0 0.0
        %802 = vmatpush1.msra.mxu0 0.0
        %803 = vmatprep.subr.mxu0 0.0
        %804 = vmatpush1.msra.mxu0 0.0
        %805 = vmatprep.subr.mxu0 0.0
        %806 = vmatpush1.msra.mxu0 0.0
        %807 = vmatprep.subr.mxu0 0.0
        %808 = vmatpush1.msra.mxu0 0.0
        %809 = vmatprep.subr.mxu0 0.0
        %810 = vmatpush1.msra.mxu0 0.0
        %811 = vmatprep.subr.mxu0 0.0
        %812 = vmatpush1.msra.mxu0 0.0
        %813 = vmatprep.subr.mxu0 0.0
        %814 = vmatpush1.msra.mxu0 0.0
        %815 = vmatprep.subr.mxu0 0.0
        %816 = vmatpush1.msra.mxu0 0.0
        %817 = vmatprep.subr.mxu0 0.0
        %818 = vmatpush1.msra.mxu0 0.0
        %819 = vmatprep.mubr.f32.mxu0 0.0
        %820 = vmatmul.mubr.f32.gmra.mrb[0].mxu0 %v750
        %v821 = vpop.f32.mrb[0].mxu0
        %v822 = vadd.f32 %v741, %v821
        %v823 = vpop.f32.mrb[0].mxu0
        %824 = vmatprep.mubr.f32.mxu0 0.0
        %825 = vmatmul.mubr.f32.gmra.mrb[0].mxu0 %v753
        %v826 = vpop.f32.mrb[0].mxu0
        %v827 = vadd.f32 %v746, %v826
        %v828 = vpop.f32.mrb[0].mxu0
        %829 = vdwg.mxu0
        %v830 = vld [vmem:[%s448 + $0x40] sm:$0xff]
        %v831 = vld [vmem:[%s448 + $0x48] sm:$0xff]
        %v832 = vld [vmem:[%s448 + $0x50] sm:$0xff]
        %v833 = vld [vmem:[%s448 + $0x58] sm:$0xff]
        %v835 = vsel %vm487, %v831, 0
        %v838 = vsel %vm487, %v833, 0
        %840 = vmatprep.subr.mxu0 0.0
        %841 = vmatpush1.msra.mxu0 %v452
        %842 = vmatprep.subr.mxu0 0.0
        %843 = vmatpush1.msra.mxu0 %v453
        %844 = vmatprep.subr.mxu0 0.0
        %845 = vmatpush1.msra.mxu0 %v454
        %846 = vmatprep.subr.mxu0 0.0
        %847 = vmatpush1.msra.mxu0 %v455
        %848 = vmatprep.subr.mxu0 0.0
        %849 = vmatpush1.msra.mxu0 %v456
        %850 = vmatprep.subr.mxu0 0.0
        %851 = vmatpush1.msra.mxu0 %v457
        %852 = vmatprep.subr.mxu0 0.0
        %853 = vmatpush1.msra.mxu0 %v458
        %854 = vmatprep.subr.mxu0 0.0
        %855 = vmatpush1.msra.mxu0 %v459
        %856 = vmatprep.subr.mxu0 0.0
        %857 = vmatpush1.msra.mxu0 %v460
        %858 = vmatprep.subr.mxu0 0.0
        %859 = vmatpush1.msra.mxu0 %v461
        %860 = vmatprep.subr.mxu0 0.0
        %861 = vmatpush1.msra.mxu0 %v462
        %862 = vmatprep.subr.mxu0 0.0
        %863 = vmatpush1.msra.mxu0 %v463
        %864 = vmatprep.subr.mxu0 0.0
        %865 = vmatpush1.msra.mxu0 %v464
        %866 = vmatprep.subr.mxu0 0.0
        %867 = vmatpush1.msra.mxu0 %v465
        %868 = vmatprep.subr.mxu0 0.0
        %869 = vmatpush1.msra.mxu0 %v466
        %870 = vmatprep.subr.mxu0 0.0
        %871 = vmatpush1.msra.mxu0 %v467
        %872 = vmatprep.subr.mxu0 0.0
        %873 = vmatpush1.msra.mxu0 %v468
        %874 = vmatprep.subr.mxu0 0.0
        %875 = vmatpush1.msra.mxu0 %v469
        %876 = vmatprep.subr.mxu0 0.0
        %877 = vmatpush1.msra.mxu0 %v470
        %878 = vmatprep.subr.mxu0 0.0
        %879 = vmatpush1.msra.mxu0 %v471
        %880 = vmatprep.subr.mxu0 0.0
        %881 = vmatpush1.msra.mxu0 %v472
        %882 = vmatprep.subr.mxu0 0.0
        %883 = vmatpush1.msra.mxu0 %v473
        %884 = vmatprep.subr.mxu0 0.0
        %885 = vmatpush1.msra.mxu0 %v474
        %886 = vmatprep.subr.mxu0 0.0
        %887 = vmatpush1.msra.mxu0 %v475
        %888 = vmatprep.subr.mxu0 0.0
        %889 = vmatpush1.msra.mxu0 0.0
        %890 = vmatprep.subr.mxu0 0.0
        %891 = vmatpush1.msra.mxu0 0.0
        %892 = vmatprep.subr.mxu0 0.0
        %893 = vmatpush1.msra.mxu0 0.0
        %894 = vmatprep.subr.mxu0 0.0
        %895 = vmatpush1.msra.mxu0 0.0
        %896 = vmatprep.subr.mxu0 0.0
        %897 = vmatpush1.msra.mxu0 0.0
        %898 = vmatprep.subr.mxu0 0.0
        %899 = vmatpush1.msra.mxu0 0.0
        %900 = vmatprep.subr.mxu0 0.0
        %901 = vmatpush1.msra.mxu0 0.0
        %902 = vmatprep.subr.mxu0 0.0
        %903 = vmatpush1.msra.mxu0 0.0
        %904 = vmatprep.mubr.f32.mxu0 %v835
        %905 = vmatmul.mubr.f32.gmra.mrb[0].mxu0 %v830
        %v906 = vpop.f32.mrb[0].mxu0
        %v907 = vadd.f32 %v485, %v906
        %v908 = vpop.f32.mrb[0].mxu0
        %909 = vmatprep.mubr.f32.mxu0 %v838
        %910 = vmatmul.mubr.f32.gmra.mrb[0].mxu0 %v832
        %v911 = vpop.f32.mrb[0].mxu0
        %v912 = vadd.f32 %v485, %v911
        %v913 = vpop.f32.mrb[0].mxu0
        %914 = vdwg.mxu0
        %v915 = vmax.f32 %v907, 0.0
        %v916 = vmax.f32 %v912, 0.0
        %s917 = scalar_lea.vmem %s4, 64
        %v918 = vld [vmem:[%s917] sm:$0xff]
        %v919 = vld [vmem:[%s917 + $0x8] sm:$0xff]
        %v920 = vld [vmem:[%s917 + $0x10] sm:$0xff]
        %v921 = vld [vmem:[%s917 + $0x18] sm:$0xff]
        %v923 = vsel %vm667, %v915, 0
        %v926 = vsel %vm667, %v916, 0
        %928 = vmatprep.subr.mxu0 0.0
        %929 = vmatpush1.msra.mxu0 %v918
        %930 = vmatprep.subr.mxu0 0.0
        %931 = vmatpush1.msra.mxu0 %v919
        %932 = vmatprep.subr.mxu0 0.0
        %933 = vmatpush1.msra.mxu0 %v920
        %934 = vmatprep.subr.mxu0 0.0
        %935 = vmatpush1.msra.mxu0 %v921
        %936 = vmatprep.subr.mxu0 0.0
        %937 = vmatpush1.msra.mxu0 0.0
        %938 = vmatprep.subr.mxu0 0.0
        %939 = vmatpush1.msra.mxu0 0.0
        %940 = vmatprep.subr.mxu0 0.0
        %941 = vmatpush1.msra.mxu0 0.0
        %942 = vmatprep.subr.mxu0 0.0
        %943 = vmatpush1.msra.mxu0 0.0
        %944 = vmatprep.subr.mxu0 0.0
        %945 = vmatpush1.msra.mxu0 0.0
        %946 = vmatprep.subr.mxu0 0.0
        %947 = vmatpush1.msra.mxu0 0.0
        %948 = vmatprep.subr.mxu0 0.0
        %949 = vmatpush1.msra.mxu0 0.0
        %950 = vmatprep.subr.mxu0 0.0
        %951 = vmatpush1.msra.mxu0 0.0
        %952 = vmatprep.subr.mxu0 0.0
        %953 = vmatpush1.msra.mxu0 0.0
        %954 = vmatprep.subr.mxu0 0.0
        %955 = vmatpush1.msra.mxu0 0.0
        %956 = vmatprep.subr.mxu0 0.0
        %957 = vmatpush1.msra.mxu0 0.0
        %958 = vmatprep.subr.mxu0 0.0
        %959 = vmatpush1.msra.mxu0 0.0
        %960 = vmatprep.subr.mxu0 0.0
        %961 = vmatpush1.msra.mxu0 0.0
        %962 = vmatprep.subr.mxu0 0.0
        %963 = vmatpush1.msra.mxu0 0.0
        %964 = vmatprep.subr.mxu0 0.0
        %965 = vmatpush1.msra.mxu0 0.0
        %966 = vmatprep.subr.mxu0 0.0
        %967 = vmatpush1.msra.mxu0 0.0
        %968 = vmatprep.subr.mxu0 0.0
        %969 = vmatpush1.msra.mxu0 0.0
        %970 = vmatprep.subr.mxu0 0.0
        %971 = vmatpush1.msra.mxu0 0.0
        %972 = vmatprep.subr.mxu0 0.0
        %973 = vmatpush1.msra.mxu0 0.0
        %974 = vmatprep.subr.mxu0 0.0
        %975 = vmatpush1.msra.mxu0 0.0
        %976 = vmatprep.subr.mxu0 0.0
        %977 = vmatpush1.msra.mxu0 0.0
        %978 = vmatprep.subr.mxu0 0.0
        %979 = vmatpush1.msra.mxu0 0.0
        %980 = vmatprep.subr.mxu0 0.0
        %981 = vmatpush1.msra.mxu0 0.0
        %982 = vmatprep.subr.mxu0 0.0
        %983 = vmatpush1.msra.mxu0 0.0
        %984 = vmatprep.subr.mxu0 0.0
        %985 = vmatpush1.msra.mxu0 0.0
        %986 = vmatprep.subr.mxu0 0.0
        %987 = vmatpush1.msra.mxu0 0.0
        %988 = vmatprep.subr.mxu0 0.0
        %989 = vmatpush1.msra.mxu0 0.0
        %990 = vmatprep.subr.mxu0 0.0
        %991 = vmatpush1.msra.mxu0 0.0
        %992 = vmatprep.mubr.f32.mxu0 0.0
        %993 = vmatmul.mubr.f32.gmra.mrb[0].mxu0 %v923
        %v994 = vpop.f32.mrb[0].mxu0
        %v995 = vadd.f32 0.0, %v994
        %v996 = vpop.f32.mrb[0].mxu0
        %997 = vmatprep.mubr.f32.mxu0 0.0
        %998 = vmatmul.mubr.f32.gmra.mrb[0].mxu0 %v926
        %v999 = vpop.f32.mrb[0].mxu0
        %v1000 = vadd.f32 0.0, %v999
        %v1001 = vpop.f32.mrb[0].mxu0
        %1002 = vdwg.mxu0
        %v1003 = vadd.f32 %v822, %v995
        %v1004 = vadd.f32 %v827, %v1000
        %v1005 = vld [vmem:[%s448 + $0x60] sm:$0xff]
        %v1006 = vld [vmem:[%s448 + $0x68] sm:$0xff]
        %v1007 = vld [vmem:[%s448 + $0x70] sm:$0xff]
        %v1008 = vld [vmem:[%s448 + $0x78] sm:$0xff]
        %v1010 = vsel %vm487, %v1006, 0
        %v1013 = vsel %vm487, %v1008, 0
        %1015 = vmatprep.subr.mxu0 0.0
        %1016 = vmatpush1.msra.mxu0 %v452
        %1017 = vmatprep.subr.mxu0 0.0
        %1018 = vmatpush1.msra.mxu0 %v453
        %1019 = vmatprep.subr.mxu0 0.0
        %1020 = vmatpush1.msra.mxu0 %v454
        %1021 = vmatprep.subr.mxu0 0.0
        %1022 = vmatpush1.msra.mxu0 %v455
        %1023 = vmatprep.subr.mxu0 0.0
        %1024 = vmatpush1.msra.mxu0 %v456
        %1025 = vmatprep.subr.mxu0 0.0
        %1026 = vmatpush1.msra.mxu0 %v457
        %1027 = vmatprep.subr.mxu0 0.0
        %1028 = vmatpush1.msra.mxu0 %v458
        %1029 = vmatprep.subr.mxu0 0.0
        %1030 = vmatpush1.msra.mxu0 %v459
        %1031 = vmatprep.subr.mxu0 0.0
        %1032 = vmatpush1.msra.mxu0 %v460
        %1033 = vmatprep.subr.mxu0 0.0
        %1034 = vmatpush1.msra.mxu0 %v461
        %1035 = vmatprep.subr.mxu0 0.0
        %1036 = vmatpush1.msra.mxu0 %v462
        %1037 = vmatprep.subr.mxu0 0.0
        %1038 = vmatpush1.msra.mxu0 %v463
        %1039 = vmatprep.subr.mxu0 0.0
        %1040 = vmatpush1.msra.mxu0 %v464
        %1041 = vmatprep.subr.mxu0 0.0
        %1042 = vmatpush1.msra.mxu0 %v465
        %1043 = vmatprep.subr.mxu0 0.0
        %1044 = vmatpush1.msra.mxu0 %v466
        %1045 = vmatprep.subr.mxu0 0.0
        %1046 = vmatpush1.msra.mxu0 %v467
        %1047 = vmatprep.subr.mxu0 0.0
        %1048 = vmatpush1.msra.mxu0 %v468
        %1049 = vmatprep.subr.mxu0 0.0
        %1050 = vmatpush1.msra.mxu0 %v469
        %1051 = vmatprep.subr.mxu0 0.0
        %1052 = vmatpush1.msra.mxu0 %v470
        %1053 = vmatprep.subr.mxu0 0.0
        %1054 = vmatpush1.msra.mxu0 %v471
        %1055 = vmatprep.subr.mxu0 0.0
        %1056 = vmatpush1.msra.mxu0 %v472
        %1057 = vmatprep.subr.mxu0 0.0
        %1058 = vmatpush1.msra.mxu0 %v473
        %1059 = vmatprep.subr.mxu0 0.0
        %1060 = vmatpush1.msra.mxu0 %v474
        %1061 = vmatprep.subr.mxu0 0.0
        %1062 = vmatpush1.msra.mxu0 %v475
        %1063 = vmatprep.subr.mxu0 0.0
        %1064 = vmatpush1.msra.mxu0 0.0
        %1065 = vmatprep.subr.mxu0 0.0
        %1066 = vmatpush1.msra.mxu0 0.0
        %1067 = vmatprep.subr.mxu0 0.0
        %1068 = vmatpush1.msra.mxu0 0.0
        %1069 = vmatprep.subr.mxu0 0.0
        %1070 = vmatpush1.msra.mxu0 0.0
        %1071 = vmatprep.subr.mxu0 0.0
        %1072 = vmatpush1.msra.mxu0 0.0
        %1073 = vmatprep.subr.mxu0 0.0
        %1074 = vmatpush1.msra.mxu0 0.0
        %1075 = vmatprep.subr.mxu0 0.0
        %1076 = vmatpush1.msra.mxu0 0.0
        %1077 = vmatprep.subr.mxu0 0.0
        %1078 = vmatpush1.msra.mxu0 0.0
        %1079 = vmatprep.mubr.f32.mxu0 %v1010
        %1080 = vmatmul.mubr.f32.gmra.mrb[0].mxu0 %v1005
        %v1081 = vpop.f32.mrb[0].mxu0
        %v1082 = vadd.f32 %v485, %v1081
        %v1083 = vpop.f32.mrb[0].mxu0
        %1084 = vmatprep.mubr.f32.mxu0 %v1013
        %1085 = vmatmul.mubr.f32.gmra.mrb[0].mxu0 %v1007
        %v1086 = vpop.f32.mrb[0].mxu0
        %v1087 = vadd.f32 %v485, %v1086
        %v1088 = vpop.f32.mrb[0].mxu0
        %1089 = vdwg.mxu0
        %v1090 = vmax.f32 %v1082, 0.0
        %v1091 = vmax.f32 %v1087, 0.0
        %s1092 = scalar_lea.vmem %s4, 96
        %v1093 = vld [vmem:[%s1092] sm:$0xff]
        %v1094 = vld [vmem:[%s1092 + $0x8] sm:$0xff]
        %v1095 = vld [vmem:[%s1092 + $0x10] sm:$0xff]
        %v1096 = vld [vmem:[%s1092 + $0x18] sm:$0xff]
        %v1098 = vsel %vm667, %v1090, 0
        %v1101 = vsel %vm667, %v1091, 0
        %1103 = vmatprep.subr.mxu0 0.0
        %1104 = vmatpush1.msra.mxu0 %v1093
        %1105 = vmatprep.subr.mxu0 0.0
        %1106 = vmatpush1.msra.mxu0 %v1094
        %1107 = vmatprep.subr.mxu0 0.0
        %1108 = vmatpush1.msra.mxu0 %v1095
        %1109 = vmatprep.subr.mxu0 0.0
        %1110 = vmatpush1.msra.mxu0 %v1096
        %1111 = vmatprep.subr.mxu0 0.0
        %1112 = vmatpush1.msra.mxu0 0.0
        %1113 = vmatprep.subr.mxu0 0.0
        %1114 = vmatpush1.msra.mxu0 0.0
        %1115 = vmatprep.subr.mxu0 0.0
        %1116 = vmatpush1.msra.mxu0 0.0
        %1117 = vmatprep.subr.mxu0 0.0
        %1118 = vmatpush1.msra.mxu0 0.0
        %1119 = vmatprep.subr.mxu0 0.0
        %1120 = vmatpush1.msra.mxu0 0.0
        %1121 = vmatprep.subr.mxu0 0.0
        %1122 = vmatpush1.msra.mxu0 0.0
        %1123 = vmatprep.subr.mxu0 0.0
        %1124 = vmatpush1.msra.mxu0 0.0
        %1125 = vmatprep.subr.mxu0 0.0
        %1126 = vmatpush1.msra.mxu0 0.0
        %1127 = vmatprep.subr.mxu0 0.0
        %1128 = vmatpush1.msra.mxu0 0.0
        %1129 = vmatprep.subr.mxu0 0.0
        %1130 = vmatpush1.msra.mxu0 0.0
        %1131 = vmatprep.subr.mxu0 0.0
        %1132 = vmatpush1.msra.mxu0 0.0
        %1133 = vmatprep.subr.mxu0 0.0
        %1134 = vmatpush1.msra.mxu0 0.0
        %1135 = vmatprep.subr.mxu0 0.0
        %1136 = vmatpush1.msra.mxu0 0.0
        %1137 = vmatprep.subr.mxu0 0.0
        %1138 = vmatpush1.msra.mxu0 0.0
        %1139 = vmatprep.subr.mxu0 0.0
        %1140 = vmatpush1.msra.mxu0 0.0
        %1141 = vmatprep.subr.mxu0 0.0
        %1142 = vmatpush1.msra.mxu0 0.0
        %1143 = vmatprep.subr.mxu0 0.0
        %1144 = vmatpush1.msra.mxu0 0.0
        %1145 = vmatprep.subr.mxu0 0.0
        %1146 = vmatpush1.msra.mxu0 0.0
        %1147 = vmatprep.subr.mxu0 0.0
        %1148 = vmatpush1.msra.mxu0 0.0
        %1149 = vmatprep.subr.mxu0 0.0
        %1150 = vmatpush1.msra.mxu0 0.0
        %1151 = vmatprep.subr.mxu0 0.0
        %1152 = vmatpush1.msra.mxu0 0.0
        %1153 = vmatprep.subr.mxu0 0.0
        %1154 = vmatpush1.msra.mxu0 0.0
        %1155 = vmatprep.subr.mxu0 0.0
        %1156 = vmatpush1.msra.mxu0 0.0
        %1157 = vmatprep.subr.mxu0 0.0
        %1158 = vmatpush1.msra.mxu0 0.0
        %1159 = vmatprep.subr.mxu0 0.0
        %1160 = vmatpush1.msra.mxu0 0.0
        %1161 = vmatprep.subr.mxu0 0.0
        %1162 = vmatpush1.msra.mxu0 0.0
        %1163 = vmatprep.subr.mxu0 0.0
        %1164 = vmatpush1.msra.mxu0 0.0
        %1165 = vmatprep.subr.mxu0 0.0
        %1166 = vmatpush1.msra.mxu0 0.0
        %1167 = vmatprep.mubr.f32.mxu0 0.0
        %1168 = vmatmul.mubr.f32.gmra.mrb[0].mxu0 %v1098
        %v1169 = vpop.f32.mrb[0].mxu0
        %v1170 = vadd.f32 0.0, %v1169
        %v1171 = vpop.f32.mrb[0].mxu0
        %1172 = vmatprep.mubr.f32.mxu0 0.0
        %1173 = vmatmul.mubr.f32.gmra.mrb[0].mxu0 %v1101
        %v1174 = vpop.f32.mrb[0].mxu0
        %v1175 = vadd.f32 0.0, %v1174
        %v1176 = vpop.f32.mrb[0].mxu0
        %1177 = vdwg.mxu0
        %v1178 = vadd.f32 %v1003, %v1170
        %v1179 = vadd.f32 %v1004, %v1175
        %v1180 = vld [vmem:[%s448 + $0x80] sm:$0xff]
        %v1181 = vld [vmem:[%s448 + $0x88] sm:$0xff]
        %v1182 = vld [vmem:[%s448 + $0x90] sm:$0xff]
        %v1183 = vld [vmem:[%s448 + $0x98] sm:$0xff]
        %v1185 = vsel %vm487, %v1181, 0
        %v1188 = vsel %vm487, %v1183, 0
        %1190 = vmatprep.subr.mxu0 0.0
        %1191 = vmatpush1.msra.mxu0 %v452
        %1192 = vmatprep.subr.mxu0 0.0
        %1193 = vmatpush1.msra.mxu0 %v453
        %1194 = vmatprep.subr.mxu0 0.0
        %1195 = vmatpush1.msra.mxu0 %v454
        %1196 = vmatprep.subr.mxu0 0.0
        %1197 = vmatpush1.msra.mxu0 %v455
        %1198 = vmatprep.subr.mxu0 0.0
        %1199 = vmatpush1.msra.mxu0 %v456
        %1200 = vmatprep.subr.mxu0 0.0
        %1201 = vmatpush1.msra.mxu0 %v457
        %1202 = vmatprep.subr.mxu0 0.0
        %1203 = vmatpush1.msra.mxu0 %v458
        %1204 = vmatprep.subr.mxu0 0.0
        %1205 = vmatpush1.msra.mxu0 %v459
        %1206 = vmatprep.subr.mxu0 0.0
        %1207 = vmatpush1.msra.mxu0 %v460
        %1208 = vmatprep.subr.mxu0 0.0
        %1209 = vmatpush1.msra.mxu0 %v461
        %1210 = vmatprep.subr.mxu0 0.0
        %1211 = vmatpush1.msra.mxu0 %v462
        %1212 = vmatprep.subr.mxu0 0.0
        %1213 = vmatpush1.msra.mxu0 %v463
        %1214 = vmatprep.subr.mxu0 0.0
        %1215 = vmatpush1.msra.mxu0 %v464
        %1216 = vmatprep.subr.mxu0 0.0
        %1217 = vmatpush1.msra.mxu0 %v465
        %1218 = vmatprep.subr.mxu0 0.0
        %1219 = vmatpush1.msra.mxu0 %v466
        %1220 = vmatprep.subr.mxu0 0.0
        %1221 = vmatpush1.msra.mxu0 %v467
        %1222 = vmatprep.subr.mxu0 0.0
        %1223 = vmatpush1.msra.mxu0 %v468
        %1224 = vmatprep.subr.mxu0 0.0
        %1225 = vmatpush1.msra.mxu0 %v469
        %1226 = vmatprep.subr.mxu0 0.0
        %1227 = vmatpush1.msra.mxu0 %v470
        %1228 = vmatprep.subr.mxu0 0.0
        %1229 = vmatpush1.msra.mxu0 %v471
        %1230 = vmatprep.subr.mxu0 0.0
        %1231 = vmatpush1.msra.mxu0 %v472
        %1232 = vmatprep.subr.mxu0 0.0
        %1233 = vmatpush1.msra.mxu0 %v473
        %1234 = vmatprep.subr.mxu0 0.0
        %1235 = vmatpush1.msra.mxu0 %v474
        %1236 = vmatprep.subr.mxu0 0.0
        %1237 = vmatpush1.msra.mxu0 %v475
        %1238 = vmatprep.subr.mxu0 0.0
        %1239 = vmatpush1.msra.mxu0 0.0
        %1240 = vmatprep.subr.mxu0 0.0
        %1241 = vmatpush1.msra.mxu0 0.0
        %1242 = vmatprep.subr.mxu0 0.0
        %1243 = vmatpush1.msra.mxu0 0.0
        %1244 = vmatprep.subr.mxu0 0.0
        %1245 = vmatpush1.msra.mxu0 0.0
        %1246 = vmatprep.subr.mxu0 0.0
        %1247 = vmatpush1.msra.mxu0 0.0
        %1248 = vmatprep.subr.mxu0 0.0
        %1249 = vmatpush1.msra.mxu0 0.0
        %1250 = vmatprep.subr.mxu0 0.0
        %1251 = vmatpush1.msra.mxu0 0.0
        %1252 = vmatprep.subr.mxu0 0.0
        %1253 = vmatpush1.msra.mxu0 0.0
        %1254 = vmatprep.mubr.f32.mxu0 %v1185
        %1255 = vmatmul.mubr.f32.gmra.mrb[0].mxu0 %v1180
        %v1256 = vpop.f32.mrb[0].mxu0
        %v1257 = vadd.f32 %v485, %v1256
        %v1258 = vpop.f32.mrb[0].mxu0
        %1259 = vmatprep.mubr.f32.mxu0 %v1188
        %1260 = vmatmul.mubr.f32.gmra.mrb[0].mxu0 %v1182
        %v1261 = vpop.f32.mrb[0].mxu0
        %v1262 = vadd.f32 %v485, %v1261
        %v1263 = vpop.f32.mrb[0].mxu0
        %1264 = vdwg.mxu0
        %v1265 = vmax.f32 %v1257, 0.0
        %v1266 = vmax.f32 %v1262, 0.0
        %s1267 = scalar_lea.vmem %s4, 128
        %v1268 = vld [vmem:[%s1267] sm:$0xff]
        %v1269 = vld [vmem:[%s1267 + $0x8] sm:$0xff]
        %v1270 = vld [vmem:[%s1267 + $0x10] sm:$0xff]
        %v1271 = vld [vmem:[%s1267 + $0x18] sm:$0xff]
        %v1273 = vsel %vm667, %v1265, 0
        %v1276 = vsel %vm667, %v1266, 0
        %1278 = vmatprep.subr.mxu0 0.0
        %1279 = vmatpush1.msra.mxu0 %v1268
        %1280 = vmatprep.subr.mxu0 0.0
        %1281 = vmatpush1.msra.mxu0 %v1269
        %1282 = vmatprep.subr.mxu0 0.0
        %1283 = vmatpush1.msra.mxu0 %v1270
        %1284 = vmatprep.subr.mxu0 0.0
        %1285 = vmatpush1.msra.mxu0 %v1271
        %1286 = vmatprep.subr.mxu0 0.0
        %1287 = vmatpush1.msra.mxu0 0.0
        %1288 = vmatprep.subr.mxu0 0.0
        %1289 = vmatpush1.msra.mxu0 0.0
        %1290 = vmatprep.subr.mxu0 0.0
        %1291 = vmatpush1.msra.mxu0 0.0
        %1292 = vmatprep.subr.mxu0 0.0
        %1293 = vmatpush1.msra.mxu0 0.0
        %1294 = vmatprep.subr.mxu0 0.0
        %1295 = vmatpush1.msra.mxu0 0.0
        %1296 = vmatprep.subr.mxu0 0.0
        %1297 = vmatpush1.msra.mxu0 0.0
        %1298 = vmatprep.subr.mxu0 0.0
        %1299 = vmatpush1.msra.mxu0 0.0
        %1300 = vmatprep.subr.mxu0 0.0
        %1301 = vmatpush1.msra.mxu0 0.0
        %1302 = vmatprep.subr.mxu0 0.0
        %1303 = vmatpush1.msra.mxu0 0.0
        %1304 = vmatprep.subr.mxu0 0.0
        %1305 = vmatpush1.msra.mxu0 0.0
        %1306 = vmatprep.subr.mxu0 0.0
        %1307 = vmatpush1.msra.mxu0 0.0
        %1308 = vmatprep.subr.mxu0 0.0
        %1309 = vmatpush1.msra.mxu0 0.0
        %1310 = vmatprep.subr.mxu0 0.0
        %1311 = vmatpush1.msra.mxu0 0.0
        %1312 = vmatprep.subr.mxu0 0.0
        %1313 = vmatpush1.msra.mxu0 0.0
        %1314 = vmatprep.subr.mxu0 0.0
        %1315 = vmatpush1.msra.mxu0 0.0
        %1316 = vmatprep.subr.mxu0 0.0
        %1317 = vmatpush1.msra.mxu0 0.0
        %1318 = vmatprep.subr.mxu0 0.0
        %1319 = vmatpush1.msra.mxu0 0.0
        %1320 = vmatprep.subr.mxu0 0.0
        %1321 = vmatpush1.msra.mxu0 0.0
        %1322 = vmatprep.subr.mxu0 0.0
        %1323 = vmatpush1.msra.mxu0 0.0
        %1324 = vmatprep.subr.mxu0 0.0
        %1325 = vmatpush1.msra.mxu0 0.0
        %1326 = vmatprep.subr.mxu0 0.0
        %1327 = vmatpush1.msra.mxu0 0.0
        %1328 = vmatprep.subr.mxu0 0.0
        %1329 = vmatpush1.msra.mxu0 0.0
        %1330 = vmatprep.subr.mxu0 0.0
        %1331 = vmatpush1.msra.mxu0 0.0
        %1332 = vmatprep.subr.mxu0 0.0
        %1333 = vmatpush1.msra.mxu0 0.0
        %1334 = vmatprep.subr.mxu0 0.0
        %1335 = vmatpush1.msra.mxu0 0.0
        %1336 = vmatprep.subr.mxu0 0.0
        %1337 = vmatpush1.msra.mxu0 0.0
        %1338 = vmatprep.subr.mxu0 0.0
        %1339 = vmatpush1.msra.mxu0 0.0
        %1340 = vmatprep.subr.mxu0 0.0
        %1341 = vmatpush1.msra.mxu0 0.0
        %1342 = vmatprep.mubr.f32.mxu0 0.0
        %1343 = vmatmul.mubr.f32.gmra.mrb[0].mxu0 %v1273
        %v1344 = vpop.f32.mrb[0].mxu0
        %v1345 = vadd.f32 0.0, %v1344
        %v1346 = vpop.f32.mrb[0].mxu0
        %1347 = vmatprep.mubr.f32.mxu0 0.0
        %1348 = vmatmul.mubr.f32.gmra.mrb[0].mxu0 %v1276
        %v1349 = vpop.f32.mrb[0].mxu0
        %v1350 = vadd.f32 0.0, %v1349
        %v1351 = vpop.f32.mrb[0].mxu0
        %1352 = vdwg.mxu0
        %v1353 = vadd.f32 %v1178, %v1345
        %v1354 = vadd.f32 %v1179, %v1350
        %v1355 = vld [vmem:[%s448 + $0xa0] sm:$0xff]
        %v1356 = vld [vmem:[%s448 + $0xa8] sm:$0xff]
        %v1357 = vld [vmem:[%s448 + $0xb0] sm:$0xff]
        %v1358 = vld [vmem:[%s448 + $0xb8] sm:$0xff]
        %v1360 = vsel %vm487, %v1356, 0
        %v1363 = vsel %vm487, %v1358, 0
        %1365 = vmatprep.subr.mxu0 0.0
        %1366 = vmatpush1.msra.mxu0 %v452
        %1367 = vmatprep.subr.mxu0 0.0
        %1368 = vmatpush1.msra.mxu0 %v453
        %1369 = vmatprep.subr.mxu0 0.0
        %1370 = vmatpush1.msra.mxu0 %v454
        %1371 = vmatprep.subr.mxu0 0.0
        %1372 = vmatpush1.msra.mxu0 %v455
        %1373 = vmatprep.subr.mxu0 0.0
        %1374 = vmatpush1.msra.mxu0 %v456
        %1375 = vmatprep.subr.mxu0 0.0
        %1376 = vmatpush1.msra.mxu0 %v457
        %1377 = vmatprep.subr.mxu0 0.0
        %1378 = vmatpush1.msra.mxu0 %v458
        %1379 = vmatprep.subr.mxu0 0.0
        %1380 = vmatpush1.msra.mxu0 %v459
        %1381 = vmatprep.subr.mxu0 0.0
        %1382 = vmatpush1.msra.mxu0 %v460
        %1383 = vmatprep.subr.mxu0 0.0
        %1384 = vmatpush1.msra.mxu0 %v461
        %1385 = vmatprep.subr.mxu0 0.0
        %1386 = vmatpush1.msra.mxu0 %v462
        %1387 = vmatprep.subr.mxu0 0.0
        %1388 = vmatpush1.msra.mxu0 %v463
        %1389 = vmatprep.subr.mxu0 0.0
        %1390 = vmatpush1.msra.mxu0 %v464
        %1391 = vmatprep.subr.mxu0 0.0
        %1392 = vmatpush1.msra.mxu0 %v465
        %1393 = vmatprep.subr.mxu0 0.0
        %1394 = vmatpush1.msra.mxu0 %v466
        %1395 = vmatprep.subr.mxu0 0.0
        %1396 = vmatpush1.msra.mxu0 %v467
        %1397 = vmatprep.subr.mxu0 0.0
        %1398 = vmatpush1.msra.mxu0 %v468
        %1399 = vmatprep.subr.mxu0 0.0
        %1400 = vmatpush1.msra.mxu0 %v469
        %1401 = vmatprep.subr.mxu0 0.0
        %1402 = vmatpush1.msra.mxu0 %v470
        %1403 = vmatprep.subr.mxu0 0.0
        %1404 = vmatpush1.msra.mxu0 %v471
        %1405 = vmatprep.subr.mxu0 0.0
        %1406 = vmatpush1.msra.mxu0 %v472
        %1407 = vmatprep.subr.mxu0 0.0
        %1408 = vmatpush1.msra.mxu0 %v473
        %1409 = vmatprep.subr.mxu0 0.0
        %1410 = vmatpush1.msra.mxu0 %v474
        %1411 = vmatprep.subr.mxu0 0.0
        %1412 = vmatpush1.msra.mxu0 %v475
        %1413 = vmatprep.subr.mxu0 0.0
        %1414 = vmatpush1.msra.mxu0 0.0
        %1415 = vmatprep.subr.mxu0 0.0
        %1416 = vmatpush1.msra.mxu0 0.0
        %1417 = vmatprep.subr.mxu0 0.0
        %1418 = vmatpush1.msra.mxu0 0.0
        %1419 = vmatprep.subr.mxu0 0.0
        %1420 = vmatpush1.msra.mxu0 0.0
        %1421 = vmatprep.subr.mxu0 0.0
        %1422 = vmatpush1.msra.mxu0 0.0
        %1423 = vmatprep.subr.mxu0 0.0
        %1424 = vmatpush1.msra.mxu0 0.0
        %1425 = vmatprep.subr.mxu0 0.0
        %1426 = vmatpush1.msra.mxu0 0.0
        %1427 = vmatprep.subr.mxu0 0.0
        %1428 = vmatpush1.msra.mxu0 0.0
        %1429 = vmatprep.mubr.f32.mxu0 %v1360
        %1430 = vmatmul.mubr.f32.gmra.mrb[0].mxu0 %v1355
        %v1431 = vpop.f32.mrb[0].mxu0
        %v1432 = vadd.f32 %v485, %v1431
        %v1433 = vpop.f32.mrb[0].mxu0
        %1434 = vmatprep.mubr.f32.mxu0 %v1363
        %1435 = vmatmul.mubr.f32.gmra.mrb[0].mxu0 %v1357
        %v1436 = vpop.f32.mrb[0].mxu0
        %v1437 = vadd.f32 %v485, %v1436
        %v1438 = vpop.f32.mrb[0].mxu0
        %1439 = vdwg.mxu0
        %v1440 = vmax.f32 %v1432, 0.0
        %v1441 = vmax.f32 %v1437, 0.0
        %s1442 = scalar_lea.vmem %s4, 160
        %v1443 = vld [vmem:[%s1442] sm:$0xff]
        %v1444 = vld [vmem:[%s1442 + $0x8] sm:$0xff]
        %v1445 = vld [vmem:[%s1442 + $0x10] sm:$0xff]
        %v1446 = vld [vmem:[%s1442 + $0x18] sm:$0xff]
        %v1448 = vsel %vm667, %v1440, 0
        %v1451 = vsel %vm667, %v1441, 0
        %1453 = vmatprep.subr.mxu0 0.0
        %1454 = vmatpush1.msra.mxu0 %v1443
        %1455 = vmatprep.subr.mxu0 0.0
        %1456 = vmatpush1.msra.mxu0 %v1444
        %1457 = vmatprep.subr.mxu0 0.0
        %1458 = vmatpush1.msra.mxu0 %v1445
        %1459 = vmatprep.subr.mxu0 0.0
        %1460 = vmatpush1.msra.mxu0 %v1446
        %1461 = vmatprep.subr.mxu0 0.0
        %1462 = vmatpush1.msra.mxu0 0.0
        %1463 = vmatprep.subr.mxu0 0.0
        %1464 = vmatpush1.msra.mxu0 0.0
        %1465 = vmatprep.subr.mxu0 0.0
        %1466 = vmatpush1.msra.mxu0 0.0
        %1467 = vmatprep.subr.mxu0 0.0
        %1468 = vmatpush1.msra.mxu0 0.0
        %1469 = vmatprep.subr.mxu0 0.0
        %1470 = vmatpush1.msra.mxu0 0.0
        %1471 = vmatprep.subr.mxu0 0.0
        %1472 = vmatpush1.msra.mxu0 0.0
        %1473 = vmatprep.subr.mxu0 0.0
        %1474 = vmatpush1.msra.mxu0 0.0
        %1475 = vmatprep.subr.mxu0 0.0
        %1476 = vmatpush1.msra.mxu0 0.0
        %1477 = vmatprep.subr.mxu0 0.0
        %1478 = vmatpush1.msra.mxu0 0.0
        %1479 = vmatprep.subr.mxu0 0.0
        %1480 = vmatpush1.msra.mxu0 0.0
        %1481 = vmatprep.subr.mxu0 0.0
        %1482 = vmatpush1.msra.mxu0 0.0
        %1483 = vmatprep.subr.mxu0 0.0
        %1484 = vmatpush1.msra.mxu0 0.0
        %1485 = vmatprep.subr.mxu0 0.0
        %1486 = vmatpush1.msra.mxu0 0.0
        %1487 = vmatprep.subr.mxu0 0.0
        %1488 = vmatpush1.msra.mxu0 0.0
        %1489 = vmatprep.subr.mxu0 0.0
        %1490 = vmatpush1.msra.mxu0 0.0
        %1491 = vmatprep.subr.mxu0 0.0
        %1492 = vmatpush1.msra.mxu0 0.0
        %1493 = vmatprep.subr.mxu0 0.0
        %1494 = vmatpush1.msra.mxu0 0.0
        %1495 = vmatprep.subr.mxu0 0.0
        %1496 = vmatpush1.msra.mxu0 0.0
        %1497 = vmatprep.subr.mxu0 0.0
        %1498 = vmatpush1.msra.mxu0 0.0
        %1499 = vmatprep.subr.mxu0 0.0
        %1500 = vmatpush1.msra.mxu0 0.0
        %1501 = vmatprep.subr.mxu0 0.0
        %1502 = vmatpush1.msra.mxu0 0.0
        %1503 = vmatprep.subr.mxu0 0.0
        %1504 = vmatpush1.msra.mxu0 0.0
        %1505 = vmatprep.subr.mxu0 0.0
        %1506 = vmatpush1.msra.mxu0 0.0
        %1507 = vmatprep.subr.mxu0 0.0
        %1508 = vmatpush1.msra.mxu0 0.0
        %1509 = vmatprep.subr.mxu0 0.0
        %1510 = vmatpush1.msra.mxu0 0.0
        %1511 = vmatprep.subr.mxu0 0.0
        %1512 = vmatpush1.msra.mxu0 0.0
        %1513 = vmatprep.subr.mxu0 0.0
        %1514 = vmatpush1.msra.mxu0 0.0
        %1515 = vmatprep.subr.mxu0 0.0
        %1516 = vmatpush1.msra.mxu0 0.0
        %1517 = vmatprep.mubr.f32.mxu0 0.0
        %1518 = vmatmul.mubr.f32.gmra.mrb[0].mxu0 %v1448
        %v1519 = vpop.f32.mrb[0].mxu0
        %v1520 = vadd.f32 0.0, %v1519
        %v1521 = vpop.f32.mrb[0].mxu0
        %1522 = vmatprep.mubr.f32.mxu0 0.0
        %1523 = vmatmul.mubr.f32.gmra.mrb[0].mxu0 %v1451
        %v1524 = vpop.f32.mrb[0].mxu0
        %v1525 = vadd.f32 0.0, %v1524
        %v1526 = vpop.f32.mrb[0].mxu0
        %1527 = vdwg.mxu0
        %v1528 = vadd.f32 %v1353, %v1520
        %v1529 = vadd.f32 %v1354, %v1525
        %v1530 = vld [vmem:[%s448 + $0xc0] sm:$0xff]
        %v1531 = vld [vmem:[%s448 + $0xc8] sm:$0xff]
        %v1532 = vld [vmem:[%s448 + $0xd0] sm:$0xff]
        %v1533 = vld [vmem:[%s448 + $0xd8] sm:$0xff]
        %v1535 = vsel %vm487, %v1531, 0
        %v1538 = vsel %vm487, %v1533, 0
        %1540 = vmatprep.subr.mxu0 0.0
        %1541 = vmatpush1.msra.mxu0 %v452
        %1542 = vmatprep.subr.mxu0 0.0
        %1543 = vmatpush1.msra.mxu0 %v453
        %1544 = vmatprep.subr.mxu0 0.0
        %1545 = vmatpush1.msra.mxu0 %v454
        %1546 = vmatprep.subr.mxu0 0.0
        %1547 = vmatpush1.msra.mxu0 %v455
        %1548 = vmatprep.subr.mxu0 0.0
        %1549 = vmatpush1.msra.mxu0 %v456
        %1550 = vmatprep.subr.mxu0 0.0
        %1551 = vmatpush1.msra.mxu0 %v457
        %1552 = vmatprep.subr.mxu0 0.0
        %1553 = vmatpush1.msra.mxu0 %v458
        %1554 = vmatprep.subr.mxu0 0.0
        %1555 = vmatpush1.msra.mxu0 %v459
        %1556 = vmatprep.subr.mxu0 0.0
        %1557 = vmatpush1.msra.mxu0 %v460
        %1558 = vmatprep.subr.mxu0 0.0
        %1559 = vmatpush1.msra.mxu0 %v461
        %1560 = vmatprep.subr.mxu0 0.0
        %1561 = vmatpush1.msra.mxu0 %v462
        %1562 = vmatprep.subr.mxu0 0.0
        %1563 = vmatpush1.msra.mxu0 %v463
        %1564 = vmatprep.subr.mxu0 0.0
        %1565 = vmatpush1.msra.mxu0 %v464
        %1566 = vmatprep.subr.mxu0 0.0
        %1567 = vmatpush1.msra.mxu0 %v465
        %1568 = vmatprep.subr.mxu0 0.0
        %1569 = vmatpush1.msra.mxu0 %v466
        %1570 = vmatprep.subr.mxu0 0.0
        %1571 = vmatpush1.msra.mxu0 %v467
        %1572 = vmatprep.subr.mxu0 0.0
        %1573 = vmatpush1.msra.mxu0 %v468
        %1574 = vmatprep.subr.mxu0 0.0
        %1575 = vmatpush1.msra.mxu0 %v469
        %1576 = vmatprep.subr.mxu0 0.0
        %1577 = vmatpush1.msra.mxu0 %v470
        %1578 = vmatprep.subr.mxu0 0.0
        %1579 = vmatpush1.msra.mxu0 %v471
        %1580 = vmatprep.subr.mxu0 0.0
        %1581 = vmatpush1.msra.mxu0 %v472
        %1582 = vmatprep.subr.mxu0 0.0
        %1583 = vmatpush1.msra.mxu0 %v473
        %1584 = vmatprep.subr.mxu0 0.0
        %1585 = vmatpush1.msra.mxu0 %v474
        %1586 = vmatprep.subr.mxu0 0.0
        %1587 = vmatpush1.msra.mxu0 %v475
        %1588 = vmatprep.subr.mxu0 0.0
        %1589 = vmatpush1.msra.mxu0 0.0
        %1590 = vmatprep.subr.mxu0 0.0
        %1591 = vmatpush1.msra.mxu0 0.0
        %1592 = vmatprep.subr.mxu0 0.0
        %1593 = vmatpush1.msra.mxu0 0.0
        %1594 = vmatprep.subr.mxu0 0.0
        %1595 = vmatpush1.msra.mxu0 0.0
        %1596 = vmatprep.subr.mxu0 0.0
        %1597 = vmatpush1.msra.mxu0 0.0
        %1598 = vmatprep.subr.mxu0 0.0
        %1599 = vmatpush1.msra.mxu0 0.0
        %1600 = vmatprep.subr.mxu0 0.0
        %1601 = vmatpush1.msra.mxu0 0.0
        %1602 = vmatprep.subr.mxu0 0.0
        %1603 = vmatpush1.msra.mxu0 0.0
        %1604 = vmatprep.mubr.f32.mxu0 %v1535
        %1605 = vmatmul.mubr.f32.gmra.mrb[0].mxu0 %v1530
        %v1606 = vpop.f32.mrb[0].mxu0
        %v1607 = vadd.f32 %v485, %v1606
        %v1608 = vpop.f32.mrb[0].mxu0
        %1609 = vmatprep.mubr.f32.mxu0 %v1538
        %1610 = vmatmul.mubr.f32.gmra.mrb[0].mxu0 %v1532
        %v1611 = vpop.f32.mrb[0].mxu0
        %v1612 = vadd.f32 %v485, %v1611
        %v1613 = vpop.f32.mrb[0].mxu0
        %1614 = vdwg.mxu0
        %v1615 = vmax.f32 %v1607, 0.0
        %v1616 = vmax.f32 %v1612, 0.0
        %s1617 = scalar_lea.vmem %s4, 192
        %v1618 = vld [vmem:[%s1617] sm:$0xff]
        %v1619 = vld [vmem:[%s1617 + $0x8] sm:$0xff]
        %v1620 = vld [vmem:[%s1617 + $0x10] sm:$0xff]
        %v1621 = vld [vmem:[%s1617 + $0x18] sm:$0xff]
        %v1623 = vsel %vm667, %v1615, 0
        %v1626 = vsel %vm667, %v1616, 0
        %1628 = vmatprep.subr.mxu0 0.0
        %1629 = vmatpush1.msra.mxu0 %v1618
        %1630 = vmatprep.subr.mxu0 0.0
        %1631 = vmatpush1.msra.mxu0 %v1619
        %1632 = vmatprep.subr.mxu0 0.0
        %1633 = vmatpush1.msra.mxu0 %v1620
        %1634 = vmatprep.subr.mxu0 0.0
        %1635 = vmatpush1.msra.mxu0 %v1621
        %1636 = vmatprep.subr.mxu0 0.0
        %1637 = vmatpush1.msra.mxu0 0.0
        %1638 = vmatprep.subr.mxu0 0.0
        %1639 = vmatpush1.msra.mxu0 0.0
        %1640 = vmatprep.subr.mxu0 0.0
        %1641 = vmatpush1.msra.mxu0 0.0
        %1642 = vmatprep.subr.mxu0 0.0
        %1643 = vmatpush1.msra.mxu0 0.0
        %1644 = vmatprep.subr.mxu0 0.0
        %1645 = vmatpush1.msra.mxu0 0.0
        %1646 = vmatprep.subr.mxu0 0.0
        %1647 = vmatpush1.msra.mxu0 0.0
        %1648 = vmatprep.subr.mxu0 0.0
        %1649 = vmatpush1.msra.mxu0 0.0
        %1650 = vmatprep.subr.mxu0 0.0
        %1651 = vmatpush1.msra.mxu0 0.0
        %1652 = vmatprep.subr.mxu0 0.0
        %1653 = vmatpush1.msra.mxu0 0.0
        %1654 = vmatprep.subr.mxu0 0.0
        %1655 = vmatpush1.msra.mxu0 0.0
        %1656 = vmatprep.subr.mxu0 0.0
        %1657 = vmatpush1.msra.mxu0 0.0
        %1658 = vmatprep.subr.mxu0 0.0
        %1659 = vmatpush1.msra.mxu0 0.0
        %1660 = vmatprep.subr.mxu0 0.0
        %1661 = vmatpush1.msra.mxu0 0.0
        %1662 = vmatprep.subr.mxu0 0.0
        %1663 = vmatpush1.msra.mxu0 0.0
        %1664 = vmatprep.subr.mxu0 0.0
        %1665 = vmatpush1.msra.mxu0 0.0
        %1666 = vmatprep.subr.mxu0 0.0
        %1667 = vmatpush1.msra.mxu0 0.0
        %1668 = vmatprep.subr.mxu0 0.0
        %1669 = vmatpush1.msra.mxu0 0.0
        %1670 = vmatprep.subr.mxu0 0.0
        %1671 = vmatpush1.msra.mxu0 0.0
        %1672 = vmatprep.subr.mxu0 0.0
        %1673 = vmatpush1.msra.mxu0 0.0
        %1674 = vmatprep.subr.mxu0 0.0
        %1675 = vmatpush1.msra.mxu0 0.0
        %1676 = vmatprep.subr.mxu0 0.0
        %1677 = vmatpush1.msra.mxu0 0.0
        %1678 = vmatprep.subr.mxu0 0.0
        %1679 = vmatpush1.msra.mxu0 0.0
        %1680 = vmatprep.subr.mxu0 0.0
        %1681 = vmatpush1.msra.mxu0 0.0
        %1682 = vmatprep.subr.mxu0 0.0
        %1683 = vmatpush1.msra.mxu0 0.0
        %1684 = vmatprep.subr.mxu0 0.0
        %1685 = vmatpush1.msra.mxu0 0.0
        %1686 = vmatprep.subr.mxu0 0.0
        %1687 = vmatpush1.msra.mxu0 0.0
        %1688 = vmatprep.subr.mxu0 0.0
        %1689 = vmatpush1.msra.mxu0 0.0
        %1690 = vmatprep.subr.mxu0 0.0
        %1691 = vmatpush1.msra.mxu0 0.0
        %1692 = vmatprep.mubr.f32.mxu0 0.0
        %1693 = vmatmul.mubr.f32.gmra.mrb[0].mxu0 %v1623
        %v1694 = vpop.f32.mrb[0].mxu0
        %v1695 = vadd.f32 0.0, %v1694
        %v1696 = vpop.f32.mrb[0].mxu0
        %1697 = vmatprep.mubr.f32.mxu0 0.0
        %1698 = vmatmul.mubr.f32.gmra.mrb[0].mxu0 %v1626
        %v1699 = vpop.f32.mrb[0].mxu0
        %v1700 = vadd.f32 0.0, %v1699
        %v1701 = vpop.f32.mrb[0].mxu0
        %1702 = vdwg.mxu0
        %v1703 = vadd.f32 %v1528, %v1695
        %v1704 = vadd.f32 %v1529, %v1700
        %v1705 = vld [vmem:[%s448 + $0xe0] sm:$0xff]
        %v1706 = vld [vmem:[%s448 + $0xe8] sm:$0xff]
        %v1707 = vld [vmem:[%s448 + $0xf0] sm:$0xff]
        %v1708 = vld [vmem:[%s448 + $0xf8] sm:$0xff]
        %v1710 = vsel %vm487, %v1706, 0
        %v1713 = vsel %vm487, %v1708, 0
        %1715 = vmatprep.subr.mxu0 0.0
        %1716 = vmatpush1.msra.mxu0 %v452
        %1717 = vmatprep.subr.mxu0 0.0
        %1718 = vmatpush1.msra.mxu0 %v453
        %1719 = vmatprep.subr.mxu0 0.0
        %1720 = vmatpush1.msra.mxu0 %v454
        %1721 = vmatprep.subr.mxu0 0.0
        %1722 = vmatpush1.msra.mxu0 %v455
        %1723 = vmatprep.subr.mxu0 0.0
        %1724 = vmatpush1.msra.mxu0 %v456
        %1725 = vmatprep.subr.mxu0 0.0
        %1726 = vmatpush1.msra.mxu0 %v457
        %1727 = vmatprep.subr.mxu0 0.0
        %1728 = vmatpush1.msra.mxu0 %v458
        %1729 = vmatprep.subr.mxu0 0.0
        %1730 = vmatpush1.msra.mxu0 %v459
        %1731 = vmatprep.subr.mxu0 0.0
        %1732 = vmatpush1.msra.mxu0 %v460
        %1733 = vmatprep.subr.mxu0 0.0
        %1734 = vmatpush1.msra.mxu0 %v461
        %1735 = vmatprep.subr.mxu0 0.0
        %1736 = vmatpush1.msra.mxu0 %v462
        %1737 = vmatprep.subr.mxu0 0.0
        %1738 = vmatpush1.msra.mxu0 %v463
        %1739 = vmatprep.subr.mxu0 0.0
        %1740 = vmatpush1.msra.mxu0 %v464
        %1741 = vmatprep.subr.mxu0 0.0
        %1742 = vmatpush1.msra.mxu0 %v465
        %1743 = vmatprep.subr.mxu0 0.0
        %1744 = vmatpush1.msra.mxu0 %v466
        %1745 = vmatprep.subr.mxu0 0.0
        %1746 = vmatpush1.msra.mxu0 %v467
        %1747 = vmatprep.subr.mxu0 0.0
        %1748 = vmatpush1.msra.mxu0 %v468
        %1749 = vmatprep.subr.mxu0 0.0
        %1750 = vmatpush1.msra.mxu0 %v469
        %1751 = vmatprep.subr.mxu0 0.0
        %1752 = vmatpush1.msra.mxu0 %v470
        %1753 = vmatprep.subr.mxu0 0.0
        %1754 = vmatpush1.msra.mxu0 %v471
        %1755 = vmatprep.subr.mxu0 0.0
        %1756 = vmatpush1.msra.mxu0 %v472
        %1757 = vmatprep.subr.mxu0 0.0
        %1758 = vmatpush1.msra.mxu0 %v473
        %1759 = vmatprep.subr.mxu0 0.0
        %1760 = vmatpush1.msra.mxu0 %v474
        %1761 = vmatprep.subr.mxu0 0.0
        %1762 = vmatpush1.msra.mxu0 %v475
        %1763 = vmatprep.subr.mxu0 0.0
        %1764 = vmatpush1.msra.mxu0 0.0
        %1765 = vmatprep.subr.mxu0 0.0
        %1766 = vmatpush1.msra.mxu0 0.0
        %1767 = vmatprep.subr.mxu0 0.0
        %1768 = vmatpush1.msra.mxu0 0.0
        %1769 = vmatprep.subr.mxu0 0.0
        %1770 = vmatpush1.msra.mxu0 0.0
        %1771 = vmatprep.subr.mxu0 0.0
        %1772 = vmatpush1.msra.mxu0 0.0
        %1773 = vmatprep.subr.mxu0 0.0
        %1774 = vmatpush1.msra.mxu0 0.0
        %1775 = vmatprep.subr.mxu0 0.0
        %1776 = vmatpush1.msra.mxu0 0.0
        %1777 = vmatprep.subr.mxu0 0.0
        %1778 = vmatpush1.msra.mxu0 0.0
        %1779 = vmatprep.mubr.f32.mxu0 %v1710
        %1780 = vmatmul.mubr.f32.gmra.mrb[0].mxu0 %v1705
        %v1781 = vpop.f32.mrb[0].mxu0
        %v1782 = vadd.f32 %v485, %v1781
        %v1783 = vpop.f32.mrb[0].mxu0
        %1784 = vmatprep.mubr.f32.mxu0 %v1713
        %1785 = vmatmul.mubr.f32.gmra.mrb[0].mxu0 %v1707
        %v1786 = vpop.f32.mrb[0].mxu0
        %v1787 = vadd.f32 %v485, %v1786
        %v1788 = vpop.f32.mrb[0].mxu0
        %1789 = vdwg.mxu0
        %v1790 = vmax.f32 %v1782, 0.0
        %v1791 = vmax.f32 %v1787, 0.0
        %s1792 = scalar_lea.vmem %s4, 224
        %v1793 = vld [vmem:[%s1792] sm:$0xff]
        %v1794 = vld [vmem:[%s1792 + $0x8] sm:$0xff]
        %v1795 = vld [vmem:[%s1792 + $0x10] sm:$0xff]
        %v1796 = vld [vmem:[%s1792 + $0x18] sm:$0xff]
        %v1798 = vsel %vm667, %v1790, 0
        %v1801 = vsel %vm667, %v1791, 0
        %1803 = vmatprep.subr.mxu0 0.0
        %1804 = vmatpush1.msra.mxu0 %v1793
        %1805 = vmatprep.subr.mxu0 0.0
        %1806 = vmatpush1.msra.mxu0 %v1794
        %1807 = vmatprep.subr.mxu0 0.0
        %1808 = vmatpush1.msra.mxu0 %v1795
        %1809 = vmatprep.subr.mxu0 0.0
        %1810 = vmatpush1.msra.mxu0 %v1796
        %1811 = vmatprep.subr.mxu0 0.0
        %1812 = vmatpush1.msra.mxu0 0.0
        %1813 = vmatprep.subr.mxu0 0.0
        %1814 = vmatpush1.msra.mxu0 0.0
        %1815 = vmatprep.subr.mxu0 0.0
        %1816 = vmatpush1.msra.mxu0 0.0
        %1817 = vmatprep.subr.mxu0 0.0
        %1818 = vmatpush1.msra.mxu0 0.0
        %1819 = vmatprep.subr.mxu0 0.0
        %1820 = vmatpush1.msra.mxu0 0.0
        %1821 = vmatprep.subr.mxu0 0.0
        %1822 = vmatpush1.msra.mxu0 0.0
        %1823 = vmatprep.subr.mxu0 0.0
        %1824 = vmatpush1.msra.mxu0 0.0
        %1825 = vmatprep.subr.mxu0 0.0
        %1826 = vmatpush1.msra.mxu0 0.0
        %1827 = vmatprep.subr.mxu0 0.0
        %1828 = vmatpush1.msra.mxu0 0.0
        %1829 = vmatprep.subr.mxu0 0.0
        %1830 = vmatpush1.msra.mxu0 0.0
        %1831 = vmatprep.subr.mxu0 0.0
        %1832 = vmatpush1.msra.mxu0 0.0
        %1833 = vmatprep.subr.mxu0 0.0
        %1834 = vmatpush1.msra.mxu0 0.0
        %1835 = vmatprep.subr.mxu0 0.0
        %1836 = vmatpush1.msra.mxu0 0.0
        %1837 = vmatprep.subr.mxu0 0.0
        %1838 = vmatpush1.msra.mxu0 0.0
        %1839 = vmatprep.subr.mxu0 0.0
        %1840 = vmatpush1.msra.mxu0 0.0
        %1841 = vmatprep.subr.mxu0 0.0
        %1842 = vmatpush1.msra.mxu0 0.0
        %1843 = vmatprep.subr.mxu0 0.0
        %1844 = vmatpush1.msra.mxu0 0.0
        %1845 = vmatprep.subr.mxu0 0.0
        %1846 = vmatpush1.msra.mxu0 0.0
        %1847 = vmatprep.subr.mxu0 0.0
        %1848 = vmatpush1.msra.mxu0 0.0
        %1849 = vmatprep.subr.mxu0 0.0
        %1850 = vmatpush1.msra.mxu0 0.0
        %1851 = vmatprep.subr.mxu0 0.0
        %1852 = vmatpush1.msra.mxu0 0.0
        %1853 = vmatprep.subr.mxu0 0.0
        %1854 = vmatpush1.msra.mxu0 0.0
        %1855 = vmatprep.subr.mxu0 0.0
        %1856 = vmatpush1.msra.mxu0 0.0
        %1857 = vmatprep.subr.mxu0 0.0
        %1858 = vmatpush1.msra.mxu0 0.0
        %1859 = vmatprep.subr.mxu0 0.0
        %1860 = vmatpush1.msra.mxu0 0.0
        %1861 = vmatprep.subr.mxu0 0.0
        %1862 = vmatpush1.msra.mxu0 0.0
        %1863 = vmatprep.subr.mxu0 0.0
        %1864 = vmatpush1.msra.mxu0 0.0
        %1865 = vmatprep.subr.mxu0 0.0
        %1866 = vmatpush1.msra.mxu0 0.0
        %1867 = vmatprep.mubr.f32.mxu0 0.0
        %1868 = vmatmul.mubr.f32.gmra.mrb[0].mxu0 %v1798
        %v1869 = vpop.f32.mrb[0].mxu0
        %v1870 = vadd.f32 0.0, %v1869
        %v1871 = vpop.f32.mrb[0].mxu0
        %1872 = vmatprep.mubr.f32.mxu0 0.0
        %1873 = vmatmul.mubr.f32.gmra.mrb[0].mxu0 %v1801
        %v1874 = vpop.f32.mrb[0].mxu0
        %v1875 = vadd.f32 0.0, %v1874
        %v1876 = vpop.f32.mrb[0].mxu0
        %1877 = vdwg.mxu0
        %v1878 = vadd.f32 %v1703, %v1870
        %v1879 = vadd.f32 %v1704, %v1875
        %v1880 = vld [vmem:[%s448 + $0x100] sm:$0xff]
        %v1881 = vld [vmem:[%s448 + $0x108] sm:$0xff]
        %v1882 = vld [vmem:[%s448 + $0x110] sm:$0xff]
        %v1883 = vld [vmem:[%s448 + $0x118] sm:$0xff]
        %v1885 = vsel %vm487, %v1881, 0
        %v1888 = vsel %vm487, %v1883, 0
        %1890 = vmatprep.subr.mxu0 0.0
        %1891 = vmatpush1.msra.mxu0 %v452
        %1892 = vmatprep.subr.mxu0 0.0
        %1893 = vmatpush1.msra.mxu0 %v453
        %1894 = vmatprep.subr.mxu0 0.0
        %1895 = vmatpush1.msra.mxu0 %v454
        %1896 = vmatprep.subr.mxu0 0.0
        %1897 = vmatpush1.msra.mxu0 %v455
        %1898 = vmatprep.subr.mxu0 0.0
        %1899 = vmatpush1.msra.mxu0 %v456
        %1900 = vmatprep.subr.mxu0 0.0
        %1901 = vmatpush1.msra.mxu0 %v457
        %1902 = vmatprep.subr.mxu0 0.0
        %1903 = vmatpush1.msra.mxu0 %v458
        %1904 = vmatprep.subr.mxu0 0.0
        %1905 = vmatpush1.msra.mxu0 %v459
        %1906 = vmatprep.subr.mxu0 0.0
        %1907 = vmatpush1.msra.mxu0 %v460
        %1908 = vmatprep.subr.mxu0 0.0
        %1909 = vmatpush1.msra.mxu0 %v461
        %1910 = vmatprep.subr.mxu0 0.0
        %1911 = vmatpush1.msra.mxu0 %v462
        %1912 = vmatprep.subr.mxu0 0.0
        %1913 = vmatpush1.msra.mxu0 %v463
        %1914 = vmatprep.subr.mxu0 0.0
        %1915 = vmatpush1.msra.mxu0 %v464
        %1916 = vmatprep.subr.mxu0 0.0
        %1917 = vmatpush1.msra.mxu0 %v465
        %1918 = vmatprep.subr.mxu0 0.0
        %1919 = vmatpush1.msra.mxu0 %v466
        %1920 = vmatprep.subr.mxu0 0.0
        %1921 = vmatpush1.msra.mxu0 %v467
        %1922 = vmatprep.subr.mxu0 0.0
        %1923 = vmatpush1.msra.mxu0 %v468
        %1924 = vmatprep.subr.mxu0 0.0
        %1925 = vmatpush1.msra.mxu0 %v469
        %1926 = vmatprep.subr.mxu0 0.0
        %1927 = vmatpush1.msra.mxu0 %v470
        %1928 = vmatprep.subr.mxu0 0.0
        %1929 = vmatpush1.msra.mxu0 %v471
        %1930 = vmatprep.subr.mxu0 0.0
        %1931 = vmatpush1.msra.mxu0 %v472
        %1932 = vmatprep.subr.mxu0 0.0
        %1933 = vmatpush1.msra.mxu0 %v473
        %1934 = vmatprep.subr.mxu0 0.0
        %1935 = vmatpush1.msra.mxu0 %v474
        %1936 = vmatprep.subr.mxu0 0.0
        %1937 = vmatpush1.msra.mxu0 %v475
        %1938 = vmatprep.subr.mxu0 0.0
        %1939 = vmatpush1.msra.mxu0 0.0
        %1940 = vmatprep.subr.mxu0 0.0
        %1941 = vmatpush1.msra.mxu0 0.0
        %1942 = vmatprep.subr.mxu0 0.0
        %1943 = vmatpush1.msra.mxu0 0.0
        %1944 = vmatprep.subr.mxu0 0.0
        %1945 = vmatpush1.msra.mxu0 0.0
        %1946 = vmatprep.subr.mxu0 0.0
        %1947 = vmatpush1.msra.mxu0 0.0
        %1948 = vmatprep.subr.mxu0 0.0
        %1949 = vmatpush1.msra.mxu0 0.0
        %1950 = vmatprep.subr.mxu0 0.0
        %1951 = vmatpush1.msra.mxu0 0.0
        %1952 = vmatprep.subr.mxu0 0.0
        %1953 = vmatpush1.msra.mxu0 0.0
        %1954 = vmatprep.mubr.f32.mxu0 %v1885
        %1955 = vmatmul.mubr.f32.gmra.mrb[0].mxu0 %v1880
        %v1956 = vpop.f32.mrb[0].mxu0
        %v1957 = vadd.f32 %v485, %v1956
        %v1958 = vpop.f32.mrb[0].mxu0
        %1959 = vmatprep.mubr.f32.mxu0 %v1888
        %1960 = vmatmul.mubr.f32.gmra.mrb[0].mxu0 %v1882
        %v1961 = vpop.f32.mrb[0].mxu0
        %v1962 = vadd.f32 %v485, %v1961
        %v1963 = vpop.f32.mrb[0].mxu0
        %1964 = vdwg.mxu0
        %v1965 = vmax.f32 %v1957, 0.0
        %v1966 = vmax.f32 %v1962, 0.0
        %s1967 = scalar_lea.vmem %s4, 256
        %v1968 = vld [vmem:[%s1967] sm:$0xff]
        %v1969 = vld [vmem:[%s1967 + $0x8] sm:$0xff]
        %v1970 = vld [vmem:[%s1967 + $0x10] sm:$0xff]
        %v1971 = vld [vmem:[%s1967 + $0x18] sm:$0xff]
        %v1973 = vsel %vm667, %v1965, 0
        %v1976 = vsel %vm667, %v1966, 0
        %1978 = vmatprep.subr.mxu0 0.0
        %1979 = vmatpush1.msra.mxu0 %v1968
        %1980 = vmatprep.subr.mxu0 0.0
        %1981 = vmatpush1.msra.mxu0 %v1969
        %1982 = vmatprep.subr.mxu0 0.0
        %1983 = vmatpush1.msra.mxu0 %v1970
        %1984 = vmatprep.subr.mxu0 0.0
        %1985 = vmatpush1.msra.mxu0 %v1971
        %1986 = vmatprep.subr.mxu0 0.0
        %1987 = vmatpush1.msra.mxu0 0.0
        %1988 = vmatprep.subr.mxu0 0.0
        %1989 = vmatpush1.msra.mxu0 0.0
        %1990 = vmatprep.subr.mxu0 0.0
        %1991 = vmatpush1.msra.mxu0 0.0
        %1992 = vmatprep.subr.mxu0 0.0
        %1993 = vmatpush1.msra.mxu0 0.0
        %1994 = vmatprep.subr.mxu0 0.0
        %1995 = vmatpush1.msra.mxu0 0.0
        %1996 = vmatprep.subr.mxu0 0.0
        %1997 = vmatpush1.msra.mxu0 0.0
        %1998 = vmatprep.subr.mxu0 0.0
        %1999 = vmatpush1.msra.mxu0 0.0
        %2000 = vmatprep.subr.mxu0 0.0
        %2001 = vmatpush1.msra.mxu0 0.0
        %2002 = vmatprep.subr.mxu0 0.0
        %2003 = vmatpush1.msra.mxu0 0.0
        %2004 = vmatprep.subr.mxu0 0.0
        %2005 = vmatpush1.msra.mxu0 0.0
        %2006 = vmatprep.subr.mxu0 0.0
        %2007 = vmatpush1.msra.mxu0 0.0
        %2008 = vmatprep.subr.mxu0 0.0
        %2009 = vmatpush1.msra.mxu0 0.0
        %2010 = vmatprep.subr.mxu0 0.0
        %2011 = vmatpush1.msra.mxu0 0.0
        %2012 = vmatprep.subr.mxu0 0.0
        %2013 = vmatpush1.msra.mxu0 0.0
        %2014 = vmatprep.subr.mxu0 0.0
        %2015 = vmatpush1.msra.mxu0 0.0
        %2016 = vmatprep.subr.mxu0 0.0
        %2017 = vmatpush1.msra.mxu0 0.0
        %2018 = vmatprep.subr.mxu0 0.0
        %2019 = vmatpush1.msra.mxu0 0.0
        %2020 = vmatprep.subr.mxu0 0.0
        %2021 = vmatpush1.msra.mxu0 0.0
        %2022 = vmatprep.subr.mxu0 0.0
        %2023 = vmatpush1.msra.mxu0 0.0
        %2024 = vmatprep.subr.mxu0 0.0
        %2025 = vmatpush1.msra.mxu0 0.0
        %2026 = vmatprep.subr.mxu0 0.0
        %2027 = vmatpush1.msra.mxu0 0.0
        %2028 = vmatprep.subr.mxu0 0.0
        %2029 = vmatpush1.msra.mxu0 0.0
        %2030 = vmatprep.subr.mxu0 0.0
        %2031 = vmatpush1.msra.mxu0 0.0
        %2032 = vmatprep.subr.mxu0 0.0
        %2033 = vmatpush1.msra.mxu0 0.0
        %2034 = vmatprep.subr.mxu0 0.0
        %2035 = vmatpush1.msra.mxu0 0.0
        %2036 = vmatprep.subr.mxu0 0.0
        %2037 = vmatpush1.msra.mxu0 0.0
        %2038 = vmatprep.subr.mxu0 0.0
        %2039 = vmatpush1.msra.mxu0 0.0
        %2040 = vmatprep.subr.mxu0 0.0
        %2041 = vmatpush1.msra.mxu0 0.0
        %2042 = vmatprep.mubr.f32.mxu0 0.0
        %2043 = vmatmul.mubr.f32.gmra.mrb[0].mxu0 %v1973
        %v2044 = vpop.f32.mrb[0].mxu0
        %v2045 = vadd.f32 0.0, %v2044
        %v2046 = vpop.f32.mrb[0].mxu0
        %2047 = vmatprep.mubr.f32.mxu0 0.0
        %2048 = vmatmul.mubr.f32.gmra.mrb[0].mxu0 %v1976
        %v2049 = vpop.f32.mrb[0].mxu0
        %v2050 = vadd.f32 0.0, %v2049
        %v2051 = vpop.f32.mrb[0].mxu0
        %2052 = vdwg.mxu0
        %v2053 = vadd.f32 %v1878, %v2045
        %v2054 = vadd.f32 %v1879, %v2050
        %v2055 = vld [vmem:[%s448 + $0x120] sm:$0xff]
        %v2056 = vld [vmem:[%s448 + $0x128] sm:$0xff]
        %v2057 = vld [vmem:[%s448 + $0x130] sm:$0xff]
        %v2058 = vld [vmem:[%s448 + $0x138] sm:$0xff]
        %v2060 = vsel %vm487, %v2056, 0
        %v2063 = vsel %vm487, %v2058, 0
        %2065 = vmatprep.subr.mxu0 0.0
        %2066 = vmatpush1.msra.mxu0 %v452
        %2067 = vmatprep.subr.mxu0 0.0
        %2068 = vmatpush1.msra.mxu0 %v453
        %2069 = vmatprep.subr.mxu0 0.0
        %2070 = vmatpush1.msra.mxu0 %v454
        %2071 = vmatprep.subr.mxu0 0.0
        %2072 = vmatpush1.msra.mxu0 %v455
        %2073 = vmatprep.subr.mxu0 0.0
        %2074 = vmatpush1.msra.mxu0 %v456
        %2075 = vmatprep.subr.mxu0 0.0
        %2076 = vmatpush1.msra.mxu0 %v457
        %2077 = vmatprep.subr.mxu0 0.0
        %2078 = vmatpush1.msra.mxu0 %v458
        %2079 = vmatprep.subr.mxu0 0.0
        %2080 = vmatpush1.msra.mxu0 %v459
        %2081 = vmatprep.subr.mxu0 0.0
        %2082 = vmatpush1.msra.mxu0 %v460
        %2083 = vmatprep.subr.mxu0 0.0
        %2084 = vmatpush1.msra.mxu0 %v461
        %2085 = vmatprep.subr.mxu0 0.0
        %2086 = vmatpush1.msra.mxu0 %v462
        %2087 = vmatprep.subr.mxu0 0.0
        %2088 = vmatpush1.msra.mxu0 %v463
        %2089 = vmatprep.subr.mxu0 0.0
        %2090 = vmatpush1.msra.mxu0 %v464
        %2091 = vmatprep.subr.mxu0 0.0
        %2092 = vmatpush1.msra.mxu0 %v465
        %2093 = vmatprep.subr.mxu0 0.0
        %2094 = vmatpush1.msra.mxu0 %v466
        %2095 = vmatprep.subr.mxu0 0.0
        %2096 = vmatpush1.msra.mxu0 %v467
        %2097 = vmatprep.subr.mxu0 0.0
        %2098 = vmatpush1.msra.mxu0 %v468
        %2099 = vmatprep.subr.mxu0 0.0
        %2100 = vmatpush1.msra.mxu0 %v469
        %2101 = vmatprep.subr.mxu0 0.0
        %2102 = vmatpush1.msra.mxu0 %v470
        %2103 = vmatprep.subr.mxu0 0.0
        %2104 = vmatpush1.msra.mxu0 %v471
        %2105 = vmatprep.subr.mxu0 0.0
        %2106 = vmatpush1.msra.mxu0 %v472
        %2107 = vmatprep.subr.mxu0 0.0
        %2108 = vmatpush1.msra.mxu0 %v473
        %2109 = vmatprep.subr.mxu0 0.0
        %2110 = vmatpush1.msra.mxu0 %v474
        %2111 = vmatprep.subr.mxu0 0.0
        %2112 = vmatpush1.msra.mxu0 %v475
        %2113 = vmatprep.subr.mxu0 0.0
        %2114 = vmatpush1.msra.mxu0 0.0
        %2115 = vmatprep.subr.mxu0 0.0
        %2116 = vmatpush1.msra.mxu0 0.0
        %2117 = vmatprep.subr.mxu0 0.0
        %2118 = vmatpush1.msra.mxu0 0.0
        %2119 = vmatprep.subr.mxu0 0.0
        %2120 = vmatpush1.msra.mxu0 0.0
        %2121 = vmatprep.subr.mxu0 0.0
        %2122 = vmatpush1.msra.mxu0 0.0
        %2123 = vmatprep.subr.mxu0 0.0
        %2124 = vmatpush1.msra.mxu0 0.0
        %2125 = vmatprep.subr.mxu0 0.0
        %2126 = vmatpush1.msra.mxu0 0.0
        %2127 = vmatprep.subr.mxu0 0.0
        %2128 = vmatpush1.msra.mxu0 0.0
        %2129 = vmatprep.mubr.f32.mxu0 %v2060
        %2130 = vmatmul.mubr.f32.gmra.mrb[0].mxu0 %v2055
        %v2131 = vpop.f32.mrb[0].mxu0
        %v2132 = vadd.f32 %v485, %v2131
        %v2133 = vpop.f32.mrb[0].mxu0
        %2134 = vmatprep.mubr.f32.mxu0 %v2063
        %2135 = vmatmul.mubr.f32.gmra.mrb[0].mxu0 %v2057
        %v2136 = vpop.f32.mrb[0].mxu0
        %v2137 = vadd.f32 %v485, %v2136
        %v2138 = vpop.f32.mrb[0].mxu0
        %2139 = vdwg.mxu0
        %v2140 = vmax.f32 %v2132, 0.0
        %v2141 = vmax.f32 %v2137, 0.0
        %s2142 = scalar_lea.vmem %s4, 288
        %v2143 = vld [vmem:[%s2142] sm:$0xff]
        %v2144 = vld [vmem:[%s2142 + $0x8] sm:$0xff]
        %v2145 = vld [vmem:[%s2142 + $0x10] sm:$0xff]
        %v2146 = vld [vmem:[%s2142 + $0x18] sm:$0xff]
        %v2148 = vsel %vm667, %v2140, 0
        %v2151 = vsel %vm667, %v2141, 0
        %2153 = vmatprep.subr.mxu0 0.0
        %2154 = vmatpush1.msra.mxu0 %v2143
        %2155 = vmatprep.subr.mxu0 0.0
        %2156 = vmatpush1.msra.mxu0 %v2144
        %2157 = vmatprep.subr.mxu0 0.0
        %2158 = vmatpush1.msra.mxu0 %v2145
        %2159 = vmatprep.subr.mxu0 0.0
        %2160 = vmatpush1.msra.mxu0 %v2146
        %2161 = vmatprep.subr.mxu0 0.0
        %2162 = vmatpush1.msra.mxu0 0.0
        %2163 = vmatprep.subr.mxu0 0.0
        %2164 = vmatpush1.msra.mxu0 0.0
        %2165 = vmatprep.subr.mxu0 0.0
        %2166 = vmatpush1.msra.mxu0 0.0
        %2167 = vmatprep.subr.mxu0 0.0
        %2168 = vmatpush1.msra.mxu0 0.0
        %2169 = vmatprep.subr.mxu0 0.0
        %2170 = vmatpush1.msra.mxu0 0.0
        %2171 = vmatprep.subr.mxu0 0.0
        %2172 = vmatpush1.msra.mxu0 0.0
        %2173 = vmatprep.subr.mxu0 0.0
        %2174 = vmatpush1.msra.mxu0 0.0
        %2175 = vmatprep.subr.mxu0 0.0
        %2176 = vmatpush1.msra.mxu0 0.0
        %2177 = vmatprep.subr.mxu0 0.0
        %2178 = vmatpush1.msra.mxu0 0.0
        %2179 = vmatprep.subr.mxu0 0.0
        %2180 = vmatpush1.msra.mxu0 0.0
        %2181 = vmatprep.subr.mxu0 0.0
        %2182 = vmatpush1.msra.mxu0 0.0
        %2183 = vmatprep.subr.mxu0 0.0
        %2184 = vmatpush1.msra.mxu0 0.0
        %2185 = vmatprep.subr.mxu0 0.0
        %2186 = vmatpush1.msra.mxu0 0.0
        %2187 = vmatprep.subr.mxu0 0.0
        %2188 = vmatpush1.msra.mxu0 0.0
        %2189 = vmatprep.subr.mxu0 0.0
        %2190 = vmatpush1.msra.mxu0 0.0
        %2191 = vmatprep.subr.mxu0 0.0
        %2192 = vmatpush1.msra.mxu0 0.0
        %2193 = vmatprep.subr.mxu0 0.0
        %2194 = vmatpush1.msra.mxu0 0.0
        %2195 = vmatprep.subr.mxu0 0.0
        %2196 = vmatpush1.msra.mxu0 0.0
        %2197 = vmatprep.subr.mxu0 0.0
        %2198 = vmatpush1.msra.mxu0 0.0
        %2199 = vmatprep.subr.mxu0 0.0
        %2200 = vmatpush1.msra.mxu0 0.0
        %2201 = vmatprep.subr.mxu0 0.0
        %2202 = vmatpush1.msra.mxu0 0.0
        %2203 = vmatprep.subr.mxu0 0.0
        %2204 = vmatpush1.msra.mxu0 0.0
        %2205 = vmatprep.subr.mxu0 0.0
        %2206 = vmatpush1.msra.mxu0 0.0
        %2207 = vmatprep.subr.mxu0 0.0
        %2208 = vmatpush1.msra.mxu0 0.0
        %2209 = vmatprep.subr.mxu0 0.0
        %2210 = vmatpush1.msra.mxu0 0.0
        %2211 = vmatprep.subr.mxu0 0.0
        %2212 = vmatpush1.msra.mxu0 0.0
        %2213 = vmatprep.subr.mxu0 0.0
        %2214 = vmatpush1.msra.mxu0 0.0
        %2215 = vmatprep.subr.mxu0 0.0
        %2216 = vmatpush1.msra.mxu0 0.0
        %2217 = vmatprep.mubr.f32.mxu0 0.0
        %2218 = vmatmul.mubr.f32.gmra.mrb[0].mxu0 %v2148
        %v2219 = vpop.f32.mrb[0].mxu0
        %v2220 = vadd.f32 0.0, %v2219
        %v2221 = vpop.f32.mrb[0].mxu0
        %2222 = vmatprep.mubr.f32.mxu0 0.0
        %2223 = vmatmul.mubr.f32.gmra.mrb[0].mxu0 %v2151
        %v2224 = vpop.f32.mrb[0].mxu0
        %v2225 = vadd.f32 0.0, %v2224
        %v2226 = vpop.f32.mrb[0].mxu0
        %2227 = vdwg.mxu0
        %v2228 = vadd.f32 %v2053, %v2220
        %v2229 = vadd.f32 %v2054, %v2225
        %v2230 = vld [vmem:[%s448 + $0x140] sm:$0xff]
        %v2231 = vld [vmem:[%s448 + $0x148] sm:$0xff]
        %v2232 = vld [vmem:[%s448 + $0x150] sm:$0xff]
        %v2233 = vld [vmem:[%s448 + $0x158] sm:$0xff]
        %v2235 = vsel %vm487, %v2231, 0
        %v2238 = vsel %vm487, %v2233, 0
        %2240 = vmatprep.subr.mxu0 0.0
        %2241 = vmatpush1.msra.mxu0 %v452
        %2242 = vmatprep.subr.mxu0 0.0
        %2243 = vmatpush1.msra.mxu0 %v453
        %2244 = vmatprep.subr.mxu0 0.0
        %2245 = vmatpush1.msra.mxu0 %v454
        %2246 = vmatprep.subr.mxu0 0.0
        %2247 = vmatpush1.msra.mxu0 %v455
        %2248 = vmatprep.subr.mxu0 0.0
        %2249 = vmatpush1.msra.mxu0 %v456
        %2250 = vmatprep.subr.mxu0 0.0
        %2251 = vmatpush1.msra.mxu0 %v457
        %2252 = vmatprep.subr.mxu0 0.0
        %2253 = vmatpush1.msra.mxu0 %v458
        %2254 = vmatprep.subr.mxu0 0.0
        %2255 = vmatpush1.msra.mxu0 %v459
        %2256 = vmatprep.subr.mxu0 0.0
        %2257 = vmatpush1.msra.mxu0 %v460
        %2258 = vmatprep.subr.mxu0 0.0
        %2259 = vmatpush1.msra.mxu0 %v461
        %2260 = vmatprep.subr.mxu0 0.0
        %2261 = vmatpush1.msra.mxu0 %v462
        %2262 = vmatprep.subr.mxu0 0.0
        %2263 = vmatpush1.msra.mxu0 %v463
        %2264 = vmatprep.subr.mxu0 0.0
        %2265 = vmatpush1.msra.mxu0 %v464
        %2266 = vmatprep.subr.mxu0 0.0
        %2267 = vmatpush1.msra.mxu0 %v465
        %2268 = vmatprep.subr.mxu0 0.0
        %2269 = vmatpush1.msra.mxu0 %v466
        %2270 = vmatprep.subr.mxu0 0.0
        %2271 = vmatpush1.msra.mxu0 %v467
        %2272 = vmatprep.subr.mxu0 0.0
        %2273 = vmatpush1.msra.mxu0 %v468
        %2274 = vmatprep.subr.mxu0 0.0
        %2275 = vmatpush1.msra.mxu0 %v469
        %2276 = vmatprep.subr.mxu0 0.0
        %2277 = vmatpush1.msra.mxu0 %v470
        %2278 = vmatprep.subr.mxu0 0.0
        %2279 = vmatpush1.msra.mxu0 %v471
        %2280 = vmatprep.subr.mxu0 0.0
        %2281 = vmatpush1.msra.mxu0 %v472
        %2282 = vmatprep.subr.mxu0 0.0
        %2283 = vmatpush1.msra.mxu0 %v473
        %2284 = vmatprep.subr.mxu0 0.0
        %2285 = vmatpush1.msra.mxu0 %v474
        %2286 = vmatprep.subr.mxu0 0.0
        %2287 = vmatpush1.msra.mxu0 %v475
        %2288 = vmatprep.subr.mxu0 0.0
        %2289 = vmatpush1.msra.mxu0 0.0
        %2290 = vmatprep.subr.mxu0 0.0
        %2291 = vmatpush1.msra.mxu0 0.0
        %2292 = vmatprep.subr.mxu0 0.0
        %2293 = vmatpush1.msra.mxu0 0.0
        %2294 = vmatprep.subr.mxu0 0.0
        %2295 = vmatpush1.msra.mxu0 0.0
        %2296 = vmatprep.subr.mxu0 0.0
        %2297 = vmatpush1.msra.mxu0 0.0
        %2298 = vmatprep.subr.mxu0 0.0
        %2299 = vmatpush1.msra.mxu0 0.0
        %2300 = vmatprep.subr.mxu0 0.0
        %2301 = vmatpush1.msra.mxu0 0.0
        %2302 = vmatprep.subr.mxu0 0.0
        %2303 = vmatpush1.msra.mxu0 0.0
        %2304 = vmatprep.mubr.f32.mxu0 %v2235
        %2305 = vmatmul.mubr.f32.gmra.mrb[0].mxu0 %v2230
        %v2306 = vpop.f32.mrb[0].mxu0
        %v2307 = vadd.f32 %v485, %v2306
        %v2308 = vpop.f32.mrb[0].mxu0
        %2309 = vmatprep.mubr.f32.mxu0 %v2238
        %2310 = vmatmul.mubr.f32.gmra.mrb[0].mxu0 %v2232
        %v2311 = vpop.f32.mrb[0].mxu0
        %v2312 = vadd.f32 %v485, %v2311
        %v2313 = vpop.f32.mrb[0].mxu0
        %2314 = vdwg.mxu0
        %v2315 = vmax.f32 %v2307, 0.0
        %v2316 = vmax.f32 %v2312, 0.0
        %s2317 = scalar_lea.vmem %s4, 320
        %v2318 = vld [vmem:[%s2317] sm:$0xff]
        %v2319 = vld [vmem:[%s2317 + $0x8] sm:$0xff]
        %v2320 = vld [vmem:[%s2317 + $0x10] sm:$0xff]
        %v2321 = vld [vmem:[%s2317 + $0x18] sm:$0xff]
        %v2323 = vsel %vm667, %v2315, 0
        %v2326 = vsel %vm667, %v2316, 0
        %2328 = vmatprep.subr.mxu0 0.0
        %2329 = vmatpush1.msra.mxu0 %v2318
        %2330 = vmatprep.subr.mxu0 0.0
        %2331 = vmatpush1.msra.mxu0 %v2319
        %2332 = vmatprep.subr.mxu0 0.0
        %2333 = vmatpush1.msra.mxu0 %v2320
        %2334 = vmatprep.subr.mxu0 0.0
        %2335 = vmatpush1.msra.mxu0 %v2321
        %2336 = vmatprep.subr.mxu0 0.0
        %2337 = vmatpush1.msra.mxu0 0.0
        %2338 = vmatprep.subr.mxu0 0.0
        %2339 = vmatpush1.msra.mxu0 0.0
        %2340 = vmatprep.subr.mxu0 0.0
        %2341 = vmatpush1.msra.mxu0 0.0
        %2342 = vmatprep.subr.mxu0 0.0
        %2343 = vmatpush1.msra.mxu0 0.0
        %2344 = vmatprep.subr.mxu0 0.0
        %2345 = vmatpush1.msra.mxu0 0.0
        %2346 = vmatprep.subr.mxu0 0.0
        %2347 = vmatpush1.msra.mxu0 0.0
        %2348 = vmatprep.subr.mxu0 0.0
        %2349 = vmatpush1.msra.mxu0 0.0
        %2350 = vmatprep.subr.mxu0 0.0
        %2351 = vmatpush1.msra.mxu0 0.0
        %2352 = vmatprep.subr.mxu0 0.0
        %2353 = vmatpush1.msra.mxu0 0.0
        %2354 = vmatprep.subr.mxu0 0.0
        %2355 = vmatpush1.msra.mxu0 0.0
        %2356 = vmatprep.subr.mxu0 0.0
        %2357 = vmatpush1.msra.mxu0 0.0
        %2358 = vmatprep.subr.mxu0 0.0
        %2359 = vmatpush1.msra.mxu0 0.0
        %2360 = vmatprep.subr.mxu0 0.0
        %2361 = vmatpush1.msra.mxu0 0.0
        %2362 = vmatprep.subr.mxu0 0.0
        %2363 = vmatpush1.msra.mxu0 0.0
        %2364 = vmatprep.subr.mxu0 0.0
        %2365 = vmatpush1.msra.mxu0 0.0
        %2366 = vmatprep.subr.mxu0 0.0
        %2367 = vmatpush1.msra.mxu0 0.0
        %2368 = vmatprep.subr.mxu0 0.0
        %2369 = vmatpush1.msra.mxu0 0.0
        %2370 = vmatprep.subr.mxu0 0.0
        %2371 = vmatpush1.msra.mxu0 0.0
        %2372 = vmatprep.subr.mxu0 0.0
        %2373 = vmatpush1.msra.mxu0 0.0
        %2374 = vmatprep.subr.mxu0 0.0
        %2375 = vmatpush1.msra.mxu0 0.0
        %2376 = vmatprep.subr.mxu0 0.0
        %2377 = vmatpush1.msra.mxu0 0.0
        %2378 = vmatprep.subr.mxu0 0.0
        %2379 = vmatpush1.msra.mxu0 0.0
        %2380 = vmatprep.subr.mxu0 0.0
        %2381 = vmatpush1.msra.mxu0 0.0
        %2382 = vmatprep.subr.mxu0 0.0
        %2383 = vmatpush1.msra.mxu0 0.0
        %2384 = vmatprep.subr.mxu0 0.0
        %2385 = vmatpush1.msra.mxu0 0.0
        %2386 = vmatprep.subr.mxu0 0.0
        %2387 = vmatpush1.msra.mxu0 0.0
        %2388 = vmatprep.subr.mxu0 0.0
        %2389 = vmatpush1.msra.mxu0 0.0
        %2390 = vmatprep.subr.mxu0 0.0
        %2391 = vmatpush1.msra.mxu0 0.0
        %2392 = vmatprep.mubr.f32.mxu0 0.0
        %2393 = vmatmul.mubr.f32.gmra.mrb[0].mxu0 %v2323
        %v2394 = vpop.f32.mrb[0].mxu0
        %v2395 = vadd.f32 0.0, %v2394
        %v2396 = vpop.f32.mrb[0].mxu0
        %2397 = vmatprep.mubr.f32.mxu0 0.0
        %2398 = vmatmul.mubr.f32.gmra.mrb[0].mxu0 %v2326
        %v2399 = vpop.f32.mrb[0].mxu0
        %v2400 = vadd.f32 0.0, %v2399
        %v2401 = vpop.f32.mrb[0].mxu0
        %2402 = vdwg.mxu0
        %v2403 = vadd.f32 %v2228, %v2395
        %v2404 = vadd.f32 %v2229, %v2400
        %v2405 = vld [vmem:[%s448 + $0x160] sm:$0xff]
        %v2406 = vld [vmem:[%s448 + $0x168] sm:$0xff]
        %v2407 = vld [vmem:[%s448 + $0x170] sm:$0xff]
        %v2408 = vld [vmem:[%s448 + $0x178] sm:$0xff]
        %v2410 = vsel %vm487, %v2406, 0
        %v2413 = vsel %vm487, %v2408, 0
        %2415 = vmatprep.subr.mxu0 0.0
        %2416 = vmatpush1.msra.mxu0 %v452
        %2417 = vmatprep.subr.mxu0 0.0
        %2418 = vmatpush1.msra.mxu0 %v453
        %2419 = vmatprep.subr.mxu0 0.0
        %2420 = vmatpush1.msra.mxu0 %v454
        %2421 = vmatprep.subr.mxu0 0.0
        %2422 = vmatpush1.msra.mxu0 %v455
        %2423 = vmatprep.subr.mxu0 0.0
        %2424 = vmatpush1.msra.mxu0 %v456
        %2425 = vmatprep.subr.mxu0 0.0
        %2426 = vmatpush1.msra.mxu0 %v457
        %2427 = vmatprep.subr.mxu0 0.0
        %2428 = vmatpush1.msra.mxu0 %v458
        %2429 = vmatprep.subr.mxu0 0.0
        %2430 = vmatpush1.msra.mxu0 %v459
        %2431 = vmatprep.subr.mxu0 0.0
        %2432 = vmatpush1.msra.mxu0 %v460
        %2433 = vmatprep.subr.mxu0 0.0
        %2434 = vmatpush1.msra.mxu0 %v461
        %2435 = vmatprep.subr.mxu0 0.0
        %2436 = vmatpush1.msra.mxu0 %v462
        %2437 = vmatprep.subr.mxu0 0.0
        %2438 = vmatpush1.msra.mxu0 %v463
        %2439 = vmatprep.subr.mxu0 0.0
        %2440 = vmatpush1.msra.mxu0 %v464
        %2441 = vmatprep.subr.mxu0 0.0
        %2442 = vmatpush1.msra.mxu0 %v465
        %2443 = vmatprep.subr.mxu0 0.0
        %2444 = vmatpush1.msra.mxu0 %v466
        %2445 = vmatprep.subr.mxu0 0.0
        %2446 = vmatpush1.msra.mxu0 %v467
        %2447 = vmatprep.subr.mxu0 0.0
        %2448 = vmatpush1.msra.mxu0 %v468
        %2449 = vmatprep.subr.mxu0 0.0
        %2450 = vmatpush1.msra.mxu0 %v469
        %2451 = vmatprep.subr.mxu0 0.0
        %2452 = vmatpush1.msra.mxu0 %v470
        %2453 = vmatprep.subr.mxu0 0.0
        %2454 = vmatpush1.msra.mxu0 %v471
        %2455 = vmatprep.subr.mxu0 0.0
        %2456 = vmatpush1.msra.mxu0 %v472
        %2457 = vmatprep.subr.mxu0 0.0
        %2458 = vmatpush1.msra.mxu0 %v473
        %2459 = vmatprep.subr.mxu0 0.0
        %2460 = vmatpush1.msra.mxu0 %v474
        %2461 = vmatprep.subr.mxu0 0.0
        %2462 = vmatpush1.msra.mxu0 %v475
        %2463 = vmatprep.subr.mxu0 0.0
        %2464 = vmatpush1.msra.mxu0 0.0
        %2465 = vmatprep.subr.mxu0 0.0
        %2466 = vmatpush1.msra.mxu0 0.0
        %2467 = vmatprep.subr.mxu0 0.0
        %2468 = vmatpush1.msra.mxu0 0.0
        %2469 = vmatprep.subr.mxu0 0.0
        %2470 = vmatpush1.msra.mxu0 0.0
        %2471 = vmatprep.subr.mxu0 0.0
        %2472 = vmatpush1.msra.mxu0 0.0
        %2473 = vmatprep.subr.mxu0 0.0
        %2474 = vmatpush1.msra.mxu0 0.0
        %2475 = vmatprep.subr.mxu0 0.0
        %2476 = vmatpush1.msra.mxu0 0.0
        %2477 = vmatprep.subr.mxu0 0.0
        %2478 = vmatpush1.msra.mxu0 0.0
        %2479 = vmatprep.mubr.f32.mxu0 %v2410
        %2480 = vmatmul.mubr.f32.gmra.mrb[0].mxu0 %v2405
        %v2481 = vpop.f32.mrb[0].mxu0
        %v2482 = vadd.f32 %v485, %v2481
        %v2483 = vpop.f32.mrb[0].mxu0
        %2484 = vmatprep.mubr.f32.mxu0 %v2413
        %2485 = vmatmul.mubr.f32.gmra.mrb[0].mxu0 %v2407
        %v2486 = vpop.f32.mrb[0].mxu0
        %v2487 = vadd.f32 %v485, %v2486
        %v2488 = vpop.f32.mrb[0].mxu0
        %2489 = vdwg.mxu0
        %v2490 = vmax.f32 %v2482, 0.0
        %v2491 = vmax.f32 %v2487, 0.0
        %s2492 = scalar_lea.vmem %s4, 352
        %v2493 = vld [vmem:[%s2492] sm:$0xff]
        %v2494 = vld [vmem:[%s2492 + $0x8] sm:$0xff]
        %v2495 = vld [vmem:[%s2492 + $0x10] sm:$0xff]
        %v2496 = vld [vmem:[%s2492 + $0x18] sm:$0xff]
        %v2498 = vsel %vm667, %v2490, 0
        %v2501 = vsel %vm667, %v2491, 0
        %2503 = vmatprep.subr.mxu0 0.0
        %2504 = vmatpush1.msra.mxu0 %v2493
        %2505 = vmatprep.subr.mxu0 0.0
        %2506 = vmatpush1.msra.mxu0 %v2494
        %2507 = vmatprep.subr.mxu0 0.0
        %2508 = vmatpush1.msra.mxu0 %v2495
        %2509 = vmatprep.subr.mxu0 0.0
        %2510 = vmatpush1.msra.mxu0 %v2496
        %2511 = vmatprep.subr.mxu0 0.0
        %2512 = vmatpush1.msra.mxu0 0.0
        %2513 = vmatprep.subr.mxu0 0.0
        %2514 = vmatpush1.msra.mxu0 0.0
        %2515 = vmatprep.subr.mxu0 0.0
        %2516 = vmatpush1.msra.mxu0 0.0
        %2517 = vmatprep.subr.mxu0 0.0
        %2518 = vmatpush1.msra.mxu0 0.0
        %2519 = vmatprep.subr.mxu0 0.0
        %2520 = vmatpush1.msra.mxu0 0.0
        %2521 = vmatprep.subr.mxu0 0.0
        %2522 = vmatpush1.msra.mxu0 0.0
        %2523 = vmatprep.subr.mxu0 0.0
        %2524 = vmatpush1.msra.mxu0 0.0
        %2525 = vmatprep.subr.mxu0 0.0
        %2526 = vmatpush1.msra.mxu0 0.0
        %2527 = vmatprep.subr.mxu0 0.0
        %2528 = vmatpush1.msra.mxu0 0.0
        %2529 = vmatprep.subr.mxu0 0.0
        %2530 = vmatpush1.msra.mxu0 0.0
        %2531 = vmatprep.subr.mxu0 0.0
        %2532 = vmatpush1.msra.mxu0 0.0
        %2533 = vmatprep.subr.mxu0 0.0
        %2534 = vmatpush1.msra.mxu0 0.0
        %2535 = vmatprep.subr.mxu0 0.0
        %2536 = vmatpush1.msra.mxu0 0.0
        %2537 = vmatprep.subr.mxu0 0.0
        %2538 = vmatpush1.msra.mxu0 0.0
        %2539 = vmatprep.subr.mxu0 0.0
        %2540 = vmatpush1.msra.mxu0 0.0
        %2541 = vmatprep.subr.mxu0 0.0
        %2542 = vmatpush1.msra.mxu0 0.0
        %2543 = vmatprep.subr.mxu0 0.0
        %2544 = vmatpush1.msra.mxu0 0.0
        %2545 = vmatprep.subr.mxu0 0.0
        %2546 = vmatpush1.msra.mxu0 0.0
        %2547 = vmatprep.subr.mxu0 0.0
        %2548 = vmatpush1.msra.mxu0 0.0
        %2549 = vmatprep.subr.mxu0 0.0
        %2550 = vmatpush1.msra.mxu0 0.0
        %2551 = vmatprep.subr.mxu0 0.0
        %2552 = vmatpush1.msra.mxu0 0.0
        %2553 = vmatprep.subr.mxu0 0.0
        %2554 = vmatpush1.msra.mxu0 0.0
        %2555 = vmatprep.subr.mxu0 0.0
        %2556 = vmatpush1.msra.mxu0 0.0
        %2557 = vmatprep.subr.mxu0 0.0
        %2558 = vmatpush1.msra.mxu0 0.0
        %2559 = vmatprep.subr.mxu0 0.0
        %2560 = vmatpush1.msra.mxu0 0.0
        %2561 = vmatprep.subr.mxu0 0.0
        %2562 = vmatpush1.msra.mxu0 0.0
        %2563 = vmatprep.subr.mxu0 0.0
        %2564 = vmatpush1.msra.mxu0 0.0
        %2565 = vmatprep.subr.mxu0 0.0
        %2566 = vmatpush1.msra.mxu0 0.0
        %2567 = vmatprep.mubr.f32.mxu0 0.0
        %2568 = vmatmul.mubr.f32.gmra.mrb[0].mxu0 %v2498
        %v2569 = vpop.f32.mrb[0].mxu0
        %v2570 = vadd.f32 0.0, %v2569
        %v2571 = vpop.f32.mrb[0].mxu0
        %2572 = vmatprep.mubr.f32.mxu0 0.0
        %2573 = vmatmul.mubr.f32.gmra.mrb[0].mxu0 %v2501
        %v2574 = vpop.f32.mrb[0].mxu0
        %v2575 = vadd.f32 0.0, %v2574
        %v2576 = vpop.f32.mrb[0].mxu0
        %2577 = vdwg.mxu0
        %v2578 = vadd.f32 %v2403, %v2570
        %v2579 = vadd.f32 %v2404, %v2575
        %v2580 = vld [vmem:[%s448 + $0x180] sm:$0xff]
        %v2581 = vld [vmem:[%s448 + $0x188] sm:$0xff]
        %v2582 = vld [vmem:[%s448 + $0x190] sm:$0xff]
        %v2583 = vld [vmem:[%s448 + $0x198] sm:$0xff]
        %v2585 = vsel %vm487, %v2581, 0
        %v2588 = vsel %vm487, %v2583, 0
        %2590 = vmatprep.subr.mxu0 0.0
        %2591 = vmatpush1.msra.mxu0 %v452
        %2592 = vmatprep.subr.mxu0 0.0
        %2593 = vmatpush1.msra.mxu0 %v453
        %2594 = vmatprep.subr.mxu0 0.0
        %2595 = vmatpush1.msra.mxu0 %v454
        %2596 = vmatprep.subr.mxu0 0.0
        %2597 = vmatpush1.msra.mxu0 %v455
        %2598 = vmatprep.subr.mxu0 0.0
        %2599 = vmatpush1.msra.mxu0 %v456
        %2600 = vmatprep.subr.mxu0 0.0
        %2601 = vmatpush1.msra.mxu0 %v457
        %2602 = vmatprep.subr.mxu0 0.0
        %2603 = vmatpush1.msra.mxu0 %v458
        %2604 = vmatprep.subr.mxu0 0.0
        %2605 = vmatpush1.msra.mxu0 %v459
        %2606 = vmatprep.subr.mxu0 0.0
        %2607 = vmatpush1.msra.mxu0 %v460
        %2608 = vmatprep.subr.mxu0 0.0
        %2609 = vmatpush1.msra.mxu0 %v461
        %2610 = vmatprep.subr.mxu0 0.0
        %2611 = vmatpush1.msra.mxu0 %v462
        %2612 = vmatprep.subr.mxu0 0.0
        %2613 = vmatpush1.msra.mxu0 %v463
        %2614 = vmatprep.subr.mxu0 0.0
        %2615 = vmatpush1.msra.mxu0 %v464
        %2616 = vmatprep.subr.mxu0 0.0
        %2617 = vmatpush1.msra.mxu0 %v465
        %2618 = vmatprep.subr.mxu0 0.0
        %2619 = vmatpush1.msra.mxu0 %v466
        %2620 = vmatprep.subr.mxu0 0.0
        %2621 = vmatpush1.msra.mxu0 %v467
        %2622 = vmatprep.subr.mxu0 0.0
        %2623 = vmatpush1.msra.mxu0 %v468
        %2624 = vmatprep.subr.mxu0 0.0
        %2625 = vmatpush1.msra.mxu0 %v469
        %2626 = vmatprep.subr.mxu0 0.0
        %2627 = vmatpush1.msra.mxu0 %v470
        %2628 = vmatprep.subr.mxu0 0.0
        %2629 = vmatpush1.msra.mxu0 %v471
        %2630 = vmatprep.subr.mxu0 0.0
        %2631 = vmatpush1.msra.mxu0 %v472
        %2632 = vmatprep.subr.mxu0 0.0
        %2633 = vmatpush1.msra.mxu0 %v473
        %2634 = vmatprep.subr.mxu0 0.0
        %2635 = vmatpush1.msra.mxu0 %v474
        %2636 = vmatprep.subr.mxu0 0.0
        %2637 = vmatpush1.msra.mxu0 %v475
        %2638 = vmatprep.subr.mxu0 0.0
        %2639 = vmatpush1.msra.mxu0 0.0
        %2640 = vmatprep.subr.mxu0 0.0
        %2641 = vmatpush1.msra.mxu0 0.0
        %2642 = vmatprep.subr.mxu0 0.0
        %2643 = vmatpush1.msra.mxu0 0.0
        %2644 = vmatprep.subr.mxu0 0.0
        %2645 = vmatpush1.msra.mxu0 0.0
        %2646 = vmatprep.subr.mxu0 0.0
        %2647 = vmatpush1.msra.mxu0 0.0
        %2648 = vmatprep.subr.mxu0 0.0
        %2649 = vmatpush1.msra.mxu0 0.0
        %2650 = vmatprep.subr.mxu0 0.0
        %2651 = vmatpush1.msra.mxu0 0.0
        %2652 = vmatprep.subr.mxu0 0.0
        %2653 = vmatpush1.msra.mxu0 0.0
        %2654 = vmatprep.mubr.f32.mxu0 %v2585
        %2655 = vmatmul.mubr.f32.gmra.mrb[0].mxu0 %v2580
        %v2656 = vpop.f32.mrb[0].mxu0
        %v2657 = vadd.f32 %v485, %v2656
        %v2658 = vpop.f32.mrb[0].mxu0
        %2659 = vmatprep.mubr.f32.mxu0 %v2588
        %2660 = vmatmul.mubr.f32.gmra.mrb[0].mxu0 %v2582
        %v2661 = vpop.f32.mrb[0].mxu0
        %v2662 = vadd.f32 %v485, %v2661
        %v2663 = vpop.f32.mrb[0].mxu0
        %2664 = vdwg.mxu0
        %v2665 = vmax.f32 %v2657, 0.0
        %v2666 = vmax.f32 %v2662, 0.0
        %s2667 = scalar_lea.vmem %s4, 384
        %v2668 = vld [vmem:[%s2667] sm:$0xff]
        %v2669 = vld [vmem:[%s2667 + $0x8] sm:$0xff]
        %v2670 = vld [vmem:[%s2667 + $0x10] sm:$0xff]
        %v2671 = vld [vmem:[%s2667 + $0x18] sm:$0xff]
        %v2673 = vsel %vm667, %v2665, 0
        %v2676 = vsel %vm667, %v2666, 0
        %2678 = vmatprep.subr.mxu0 0.0
        %2679 = vmatpush1.msra.mxu0 %v2668
        %2680 = vmatprep.subr.mxu0 0.0
        %2681 = vmatpush1.msra.mxu0 %v2669
        %2682 = vmatprep.subr.mxu0 0.0
        %2683 = vmatpush1.msra.mxu0 %v2670
        %2684 = vmatprep.subr.mxu0 0.0
        %2685 = vmatpush1.msra.mxu0 %v2671
        %2686 = vmatprep.subr.mxu0 0.0
        %2687 = vmatpush1.msra.mxu0 0.0
        %2688 = vmatprep.subr.mxu0 0.0
        %2689 = vmatpush1.msra.mxu0 0.0
        %2690 = vmatprep.subr.mxu0 0.0
        %2691 = vmatpush1.msra.mxu0 0.0
        %2692 = vmatprep.subr.mxu0 0.0
        %2693 = vmatpush1.msra.mxu0 0.0
        %2694 = vmatprep.subr.mxu0 0.0
        %2695 = vmatpush1.msra.mxu0 0.0
        %2696 = vmatprep.subr.mxu0 0.0
        %2697 = vmatpush1.msra.mxu0 0.0
        %2698 = vmatprep.subr.mxu0 0.0
        %2699 = vmatpush1.msra.mxu0 0.0
        %2700 = vmatprep.subr.mxu0 0.0
        %2701 = vmatpush1.msra.mxu0 0.0
        %2702 = vmatprep.subr.mxu0 0.0
        %2703 = vmatpush1.msra.mxu0 0.0
        %2704 = vmatprep.subr.mxu0 0.0
        %2705 = vmatpush1.msra.mxu0 0.0
        %2706 = vmatprep.subr.mxu0 0.0
        %2707 = vmatpush1.msra.mxu0 0.0
        %2708 = vmatprep.subr.mxu0 0.0
        %2709 = vmatpush1.msra.mxu0 0.0
        %2710 = vmatprep.subr.mxu0 0.0
        %2711 = vmatpush1.msra.mxu0 0.0
        %2712 = vmatprep.subr.mxu0 0.0
        %2713 = vmatpush1.msra.mxu0 0.0
        %2714 = vmatprep.subr.mxu0 0.0
        %2715 = vmatpush1.msra.mxu0 0.0
        %2716 = vmatprep.subr.mxu0 0.0
        %2717 = vmatpush1.msra.mxu0 0.0
        %2718 = vmatprep.subr.mxu0 0.0
        %2719 = vmatpush1.msra.mxu0 0.0
        %2720 = vmatprep.subr.mxu0 0.0
        %2721 = vmatpush1.msra.mxu0 0.0
        %2722 = vmatprep.subr.mxu0 0.0
        %2723 = vmatpush1.msra.mxu0 0.0
        %2724 = vmatprep.subr.mxu0 0.0
        %2725 = vmatpush1.msra.mxu0 0.0
        %2726 = vmatprep.subr.mxu0 0.0
        %2727 = vmatpush1.msra.mxu0 0.0
        %2728 = vmatprep.subr.mxu0 0.0
        %2729 = vmatpush1.msra.mxu0 0.0
        %2730 = vmatprep.subr.mxu0 0.0
        %2731 = vmatpush1.msra.mxu0 0.0
        %2732 = vmatprep.subr.mxu0 0.0
        %2733 = vmatpush1.msra.mxu0 0.0
        %2734 = vmatprep.subr.mxu0 0.0
        %2735 = vmatpush1.msra.mxu0 0.0
        %2736 = vmatprep.subr.mxu0 0.0
        %2737 = vmatpush1.msra.mxu0 0.0
        %2738 = vmatprep.subr.mxu0 0.0
        %2739 = vmatpush1.msra.mxu0 0.0
        %2740 = vmatprep.subr.mxu0 0.0
        %2741 = vmatpush1.msra.mxu0 0.0
        %2742 = vmatprep.mubr.f32.mxu0 0.0
        %2743 = vmatmul.mubr.f32.gmra.mrb[0].mxu0 %v2673
        %v2744 = vpop.f32.mrb[0].mxu0
        %v2745 = vadd.f32 0.0, %v2744
        %v2746 = vpop.f32.mrb[0].mxu0
        %2747 = vmatprep.mubr.f32.mxu0 0.0
        %2748 = vmatmul.mubr.f32.gmra.mrb[0].mxu0 %v2676
        %v2749 = vpop.f32.mrb[0].mxu0
        %v2750 = vadd.f32 0.0, %v2749
        %v2751 = vpop.f32.mrb[0].mxu0
        %2752 = vdwg.mxu0
        %v2753 = vadd.f32 %v2578, %v2745
        %v2754 = vadd.f32 %v2579, %v2750
        %v2755 = vld [vmem:[%s448 + $0x1a0] sm:$0xff]
        %v2756 = vld [vmem:[%s448 + $0x1a8] sm:$0xff]
        %v2757 = vld [vmem:[%s448 + $0x1b0] sm:$0xff]
        %v2758 = vld [vmem:[%s448 + $0x1b8] sm:$0xff]
        %v2760 = vsel %vm487, %v2756, 0
        %v2763 = vsel %vm487, %v2758, 0
        %2765 = vmatprep.subr.mxu0 0.0
        %2766 = vmatpush1.msra.mxu0 %v452
        %2767 = vmatprep.subr.mxu0 0.0
        %2768 = vmatpush1.msra.mxu0 %v453
        %2769 = vmatprep.subr.mxu0 0.0
        %2770 = vmatpush1.msra.mxu0 %v454
        %2771 = vmatprep.subr.mxu0 0.0
        %2772 = vmatpush1.msra.mxu0 %v455
        %2773 = vmatprep.subr.mxu0 0.0
        %2774 = vmatpush1.msra.mxu0 %v456
        %2775 = vmatprep.subr.mxu0 0.0
        %2776 = vmatpush1.msra.mxu0 %v457
        %2777 = vmatprep.subr.mxu0 0.0
        %2778 = vmatpush1.msra.mxu0 %v458
        %2779 = vmatprep.subr.mxu0 0.0
        %2780 = vmatpush1.msra.mxu0 %v459
        %2781 = vmatprep.subr.mxu0 0.0
        %2782 = vmatpush1.msra.mxu0 %v460
        %2783 = vmatprep.subr.mxu0 0.0
        %2784 = vmatpush1.msra.mxu0 %v461
        %2785 = vmatprep.subr.mxu0 0.0
        %2786 = vmatpush1.msra.mxu0 %v462
        %2787 = vmatprep.subr.mxu0 0.0
        %2788 = vmatpush1.msra.mxu0 %v463
        %2789 = vmatprep.subr.mxu0 0.0
        %2790 = vmatpush1.msra.mxu0 %v464
        %2791 = vmatprep.subr.mxu0 0.0
        %2792 = vmatpush1.msra.mxu0 %v465
        %2793 = vmatprep.subr.mxu0 0.0
        %2794 = vmatpush1.msra.mxu0 %v466
        %2795 = vmatprep.subr.mxu0 0.0
        %2796 = vmatpush1.msra.mxu0 %v467
        %2797 = vmatprep.subr.mxu0 0.0
        %2798 = vmatpush1.msra.mxu0 %v468
        %2799 = vmatprep.subr.mxu0 0.0
        %2800 = vmatpush1.msra.mxu0 %v469
        %2801 = vmatprep.subr.mxu0 0.0
        %2802 = vmatpush1.msra.mxu0 %v470
        %2803 = vmatprep.subr.mxu0 0.0
        %2804 = vmatpush1.msra.mxu0 %v471
        %2805 = vmatprep.subr.mxu0 0.0
        %2806 = vmatpush1.msra.mxu0 %v472
        %2807 = vmatprep.subr.mxu0 0.0
        %2808 = vmatpush1.msra.mxu0 %v473
        %2809 = vmatprep.subr.mxu0 0.0
        %2810 = vmatpush1.msra.mxu0 %v474
        %2811 = vmatprep.subr.mxu0 0.0
        %2812 = vmatpush1.msra.mxu0 %v475
        %2813 = vmatprep.subr.mxu0 0.0
        %2814 = vmatpush1.msra.mxu0 0.0
        %2815 = vmatprep.subr.mxu0 0.0
        %2816 = vmatpush1.msra.mxu0 0.0
        %2817 = vmatprep.subr.mxu0 0.0
        %2818 = vmatpush1.msra.mxu0 0.0
        %2819 = vmatprep.subr.mxu0 0.0
        %2820 = vmatpush1.msra.mxu0 0.0
        %2821 = vmatprep.subr.mxu0 0.0
        %2822 = vmatpush1.msra.mxu0 0.0
        %2823 = vmatprep.subr.mxu0 0.0
        %2824 = vmatpush1.msra.mxu0 0.0
        %2825 = vmatprep.subr.mxu0 0.0
        %2826 = vmatpush1.msra.mxu0 0.0
        %2827 = vmatprep.subr.mxu0 0.0
        %2828 = vmatpush1.msra.mxu0 0.0
        %2829 = vmatprep.mubr.f32.mxu0 %v2760
        %2830 = vmatmul.mubr.f32.gmra.mrb[0].mxu0 %v2755
        %v2831 = vpop.f32.mrb[0].mxu0
        %v2832 = vadd.f32 %v485, %v2831
        %v2833 = vpop.f32.mrb[0].mxu0
        %2834 = vmatprep.mubr.f32.mxu0 %v2763
        %2835 = vmatmul.mubr.f32.gmra.mrb[0].mxu0 %v2757
        %v2836 = vpop.f32.mrb[0].mxu0
        %v2837 = vadd.f32 %v485, %v2836
        %v2838 = vpop.f32.mrb[0].mxu0
        %2839 = vdwg.mxu0
        %v2840 = vmax.f32 %v2832, 0.0
        %v2841 = vmax.f32 %v2837, 0.0
        %s2842 = scalar_lea.vmem %s4, 416
        %v2843 = vld [vmem:[%s2842] sm:$0xff]
        %v2844 = vld [vmem:[%s2842 + $0x8] sm:$0xff]
        %v2845 = vld [vmem:[%s2842 + $0x10] sm:$0xff]
        %v2846 = vld [vmem:[%s2842 + $0x18] sm:$0xff]
        %v2848 = vsel %vm667, %v2840, 0
        %v2851 = vsel %vm667, %v2841, 0
        %2853 = vmatprep.subr.mxu0 0.0
        %2854 = vmatpush1.msra.mxu0 %v2843
        %2855 = vmatprep.subr.mxu0 0.0
        %2856 = vmatpush1.msra.mxu0 %v2844
        %2857 = vmatprep.subr.mxu0 0.0
        %2858 = vmatpush1.msra.mxu0 %v2845
        %2859 = vmatprep.subr.mxu0 0.0
        %2860 = vmatpush1.msra.mxu0 %v2846
        %2861 = vmatprep.subr.mxu0 0.0
        %2862 = vmatpush1.msra.mxu0 0.0
        %2863 = vmatprep.subr.mxu0 0.0
        %2864 = vmatpush1.msra.mxu0 0.0
        %2865 = vmatprep.subr.mxu0 0.0
        %2866 = vmatpush1.msra.mxu0 0.0
        %2867 = vmatprep.subr.mxu0 0.0
        %2868 = vmatpush1.msra.mxu0 0.0
        %2869 = vmatprep.subr.mxu0 0.0
        %2870 = vmatpush1.msra.mxu0 0.0
        %2871 = vmatprep.subr.mxu0 0.0
        %2872 = vmatpush1.msra.mxu0 0.0
        %2873 = vmatprep.subr.mxu0 0.0
        %2874 = vmatpush1.msra.mxu0 0.0
        %2875 = vmatprep.subr.mxu0 0.0
        %2876 = vmatpush1.msra.mxu0 0.0
        %2877 = vmatprep.subr.mxu0 0.0
        %2878 = vmatpush1.msra.mxu0 0.0
        %2879 = vmatprep.subr.mxu0 0.0
        %2880 = vmatpush1.msra.mxu0 0.0
        %2881 = vmatprep.subr.mxu0 0.0
        %2882 = vmatpush1.msra.mxu0 0.0
        %2883 = vmatprep.subr.mxu0 0.0
        %2884 = vmatpush1.msra.mxu0 0.0
        %2885 = vmatprep.subr.mxu0 0.0
        %2886 = vmatpush1.msra.mxu0 0.0
        %2887 = vmatprep.subr.mxu0 0.0
        %2888 = vmatpush1.msra.mxu0 0.0
        %2889 = vmatprep.subr.mxu0 0.0
        %2890 = vmatpush1.msra.mxu0 0.0
        %2891 = vmatprep.subr.mxu0 0.0
        %2892 = vmatpush1.msra.mxu0 0.0
        %2893 = vmatprep.subr.mxu0 0.0
        %2894 = vmatpush1.msra.mxu0 0.0
        %2895 = vmatprep.subr.mxu0 0.0
        %2896 = vmatpush1.msra.mxu0 0.0
        %2897 = vmatprep.subr.mxu0 0.0
        %2898 = vmatpush1.msra.mxu0 0.0
        %2899 = vmatprep.subr.mxu0 0.0
        %2900 = vmatpush1.msra.mxu0 0.0
        %2901 = vmatprep.subr.mxu0 0.0
        %2902 = vmatpush1.msra.mxu0 0.0
        %2903 = vmatprep.subr.mxu0 0.0
        %2904 = vmatpush1.msra.mxu0 0.0
        %2905 = vmatprep.subr.mxu0 0.0
        %2906 = vmatpush1.msra.mxu0 0.0
        %2907 = vmatprep.subr.mxu0 0.0
        %2908 = vmatpush1.msra.mxu0 0.0
        %2909 = vmatprep.subr.mxu0 0.0
        %2910 = vmatpush1.msra.mxu0 0.0
        %2911 = vmatprep.subr.mxu0 0.0
        %2912 = vmatpush1.msra.mxu0 0.0
        %2913 = vmatprep.subr.mxu0 0.0
        %2914 = vmatpush1.msra.mxu0 0.0
        %2915 = vmatprep.subr.mxu0 0.0
        %2916 = vmatpush1.msra.mxu0 0.0
        %2917 = vmatprep.mubr.f32.mxu0 0.0
        %2918 = vmatmul.mubr.f32.gmra.mrb[0].mxu0 %v2848
        %v2919 = vpop.f32.mrb[0].mxu0
        %v2920 = vadd.f32 0.0, %v2919
        %v2921 = vpop.f32.mrb[0].mxu0
        %2922 = vmatprep.mubr.f32.mxu0 0.0
        %2923 = vmatmul.mubr.f32.gmra.mrb[0].mxu0 %v2851
        %v2924 = vpop.f32.mrb[0].mxu0
        %v2925 = vadd.f32 0.0, %v2924
        %v2926 = vpop.f32.mrb[0].mxu0
        %2927 = vdwg.mxu0
        %v2928 = vadd.f32 %v2753, %v2920
        %v2929 = vadd.f32 %v2754, %v2925
        %v2930 = vld [vmem:[%s448 + $0x1c0] sm:$0xff]
        %v2931 = vld [vmem:[%s448 + $0x1c8] sm:$0xff]
        %v2932 = vld [vmem:[%s448 + $0x1d0] sm:$0xff]
        %v2933 = vld [vmem:[%s448 + $0x1d8] sm:$0xff]
        %v2935 = vsel %vm487, %v2931, 0
        %v2938 = vsel %vm487, %v2933, 0
        %2940 = vmatprep.subr.mxu0 0.0
        %2941 = vmatpush1.msra.mxu0 %v452
        %2942 = vmatprep.subr.mxu0 0.0
        %2943 = vmatpush1.msra.mxu0 %v453
        %2944 = vmatprep.subr.mxu0 0.0
        %2945 = vmatpush1.msra.mxu0 %v454
        %2946 = vmatprep.subr.mxu0 0.0
        %2947 = vmatpush1.msra.mxu0 %v455
        %2948 = vmatprep.subr.mxu0 0.0
        %2949 = vmatpush1.msra.mxu0 %v456
        %2950 = vmatprep.subr.mxu0 0.0
        %2951 = vmatpush1.msra.mxu0 %v457
        %2952 = vmatprep.subr.mxu0 0.0
        %2953 = vmatpush1.msra.mxu0 %v458
        %2954 = vmatprep.subr.mxu0 0.0
        %2955 = vmatpush1.msra.mxu0 %v459
        %2956 = vmatprep.subr.mxu0 0.0
        %2957 = vmatpush1.msra.mxu0 %v460
        %2958 = vmatprep.subr.mxu0 0.0
        %2959 = vmatpush1.msra.mxu0 %v461
        %2960 = vmatprep.subr.mxu0 0.0
        %2961 = vmatpush1.msra.mxu0 %v462
        %2962 = vmatprep.subr.mxu0 0.0
        %2963 = vmatpush1.msra.mxu0 %v463
        %2964 = vmatprep.subr.mxu0 0.0
        %2965 = vmatpush1.msra.mxu0 %v464
        %2966 = vmatprep.subr.mxu0 0.0
        %2967 = vmatpush1.msra.mxu0 %v465
        %2968 = vmatprep.subr.mxu0 0.0
        %2969 = vmatpush1.msra.mxu0 %v466
        %2970 = vmatprep.subr.mxu0 0.0
        %2971 = vmatpush1.msra.mxu0 %v467
        %2972 = vmatprep.subr.mxu0 0.0
        %2973 = vmatpush1.msra.mxu0 %v468
        %2974 = vmatprep.subr.mxu0 0.0
        %2975 = vmatpush1.msra.mxu0 %v469
        %2976 = vmatprep.subr.mxu0 0.0
        %2977 = vmatpush1.msra.mxu0 %v470
        %2978 = vmatprep.subr.mxu0 0.0
        %2979 = vmatpush1.msra.mxu0 %v471
        %2980 = vmatprep.subr.mxu0 0.0
        %2981 = vmatpush1.msra.mxu0 %v472
        %2982 = vmatprep.subr.mxu0 0.0
        %2983 = vmatpush1.msra.mxu0 %v473
        %2984 = vmatprep.subr.mxu0 0.0
        %2985 = vmatpush1.msra.mxu0 %v474
        %2986 = vmatprep.subr.mxu0 0.0
        %2987 = vmatpush1.msra.mxu0 %v475
        %2988 = vmatprep.subr.mxu0 0.0
        %2989 = vmatpush1.msra.mxu0 0.0
        %2990 = vmatprep.subr.mxu0 0.0
        %2991 = vmatpush1.msra.mxu0 0.0
        %2992 = vmatprep.subr.mxu0 0.0
        %2993 = vmatpush1.msra.mxu0 0.0
        %2994 = vmatprep.subr.mxu0 0.0
        %2995 = vmatpush1.msra.mxu0 0.0
        %2996 = vmatprep.subr.mxu0 0.0
        %2997 = vmatpush1.msra.mxu0 0.0
        %2998 = vmatprep.subr.mxu0 0.0
        %2999 = vmatpush1.msra.mxu0 0.0
        %3000 = vmatprep.subr.mxu0 0.0
        %3001 = vmatpush1.msra.mxu0 0.0
        %3002 = vmatprep.subr.mxu0 0.0
        %3003 = vmatpush1.msra.mxu0 0.0
        %3004 = vmatprep.mubr.f32.mxu0 %v2935
        %3005 = vmatmul.mubr.f32.gmra.mrb[0].mxu0 %v2930
        %v3006 = vpop.f32.mrb[0].mxu0
        %v3007 = vadd.f32 %v485, %v3006
        %v3008 = vpop.f32.mrb[0].mxu0
        %3009 = vmatprep.mubr.f32.mxu0 %v2938
        %3010 = vmatmul.mubr.f32.gmra.mrb[0].mxu0 %v2932
        %v3011 = vpop.f32.mrb[0].mxu0
        %v3012 = vadd.f32 %v485, %v3011
        %v3013 = vpop.f32.mrb[0].mxu0
        %3014 = vdwg.mxu0
        %v3015 = vmax.f32 %v3007, 0.0
        %v3016 = vmax.f32 %v3012, 0.0
        %s3017 = scalar_lea.vmem %s4, 448
        %v3018 = vld [vmem:[%s3017] sm:$0xff]
        %v3019 = vld [vmem:[%s3017 + $0x8] sm:$0xff]
        %v3020 = vld [vmem:[%s3017 + $0x10] sm:$0xff]
        %v3021 = vld [vmem:[%s3017 + $0x18] sm:$0xff]
        %v3023 = vsel %vm667, %v3015, 0
        %v3026 = vsel %vm667, %v3016, 0
        %3028 = vmatprep.subr.mxu0 0.0
        %3029 = vmatpush1.msra.mxu0 %v3018
        %3030 = vmatprep.subr.mxu0 0.0
        %3031 = vmatpush1.msra.mxu0 %v3019
        %3032 = vmatprep.subr.mxu0 0.0
        %3033 = vmatpush1.msra.mxu0 %v3020
        %3034 = vmatprep.subr.mxu0 0.0
        %3035 = vmatpush1.msra.mxu0 %v3021
        %3036 = vmatprep.subr.mxu0 0.0
        %3037 = vmatpush1.msra.mxu0 0.0
        %3038 = vmatprep.subr.mxu0 0.0
        %3039 = vmatpush1.msra.mxu0 0.0
        %3040 = vmatprep.subr.mxu0 0.0
        %3041 = vmatpush1.msra.mxu0 0.0
        %3042 = vmatprep.subr.mxu0 0.0
        %3043 = vmatpush1.msra.mxu0 0.0
        %3044 = vmatprep.subr.mxu0 0.0
        %3045 = vmatpush1.msra.mxu0 0.0
        %3046 = vmatprep.subr.mxu0 0.0
        %3047 = vmatpush1.msra.mxu0 0.0
        %3048 = vmatprep.subr.mxu0 0.0
        %3049 = vmatpush1.msra.mxu0 0.0
        %3050 = vmatprep.subr.mxu0 0.0
        %3051 = vmatpush1.msra.mxu0 0.0
        %3052 = vmatprep.subr.mxu0 0.0
        %3053 = vmatpush1.msra.mxu0 0.0
        %3054 = vmatprep.subr.mxu0 0.0
        %3055 = vmatpush1.msra.mxu0 0.0
        %3056 = vmatprep.subr.mxu0 0.0
        %3057 = vmatpush1.msra.mxu0 0.0
        %3058 = vmatprep.subr.mxu0 0.0
        %3059 = vmatpush1.msra.mxu0 0.0
        %3060 = vmatprep.subr.mxu0 0.0
        %3061 = vmatpush1.msra.mxu0 0.0
        %3062 = vmatprep.subr.mxu0 0.0
        %3063 = vmatpush1.msra.mxu0 0.0
        %3064 = vmatprep.subr.mxu0 0.0
        %3065 = vmatpush1.msra.mxu0 0.0
        %3066 = vmatprep.subr.mxu0 0.0
        %3067 = vmatpush1.msra.mxu0 0.0
        %3068 = vmatprep.subr.mxu0 0.0
        %3069 = vmatpush1.msra.mxu0 0.0
        %3070 = vmatprep.subr.mxu0 0.0
        %3071 = vmatpush1.msra.mxu0 0.0
        %3072 = vmatprep.subr.mxu0 0.0
        %3073 = vmatpush1.msra.mxu0 0.0
        %3074 = vmatprep.subr.mxu0 0.0
        %3075 = vmatpush1.msra.mxu0 0.0
        %3076 = vmatprep.subr.mxu0 0.0
        %3077 = vmatpush1.msra.mxu0 0.0
        %3078 = vmatprep.subr.mxu0 0.0
        %3079 = vmatpush1.msra.mxu0 0.0
        %3080 = vmatprep.subr.mxu0 0.0
        %3081 = vmatpush1.msra.mxu0 0.0
        %3082 = vmatprep.subr.mxu0 0.0
        %3083 = vmatpush1.msra.mxu0 0.0
        %3084 = vmatprep.subr.mxu0 0.0
        %3085 = vmatpush1.msra.mxu0 0.0
        %3086 = vmatprep.subr.mxu0 0.0
        %3087 = vmatpush1.msra.mxu0 0.0
        %3088 = vmatprep.subr.mxu0 0.0
        %3089 = vmatpush1.msra.mxu0 0.0
        %3090 = vmatprep.subr.mxu0 0.0
        %3091 = vmatpush1.msra.mxu0 0.0
        %3092 = vmatprep.mubr.f32.mxu0 0.0
        %3093 = vmatmul.mubr.f32.gmra.mrb[0].mxu0 %v3023
        %v3094 = vpop.f32.mrb[0].mxu0
        %v3095 = vadd.f32 0.0, %v3094
        %v3096 = vpop.f32.mrb[0].mxu0
        %3097 = vmatprep.mubr.f32.mxu0 0.0
        %3098 = vmatmul.mubr.f32.gmra.mrb[0].mxu0 %v3026
        %v3099 = vpop.f32.mrb[0].mxu0
        %v3100 = vadd.f32 0.0, %v3099
        %v3101 = vpop.f32.mrb[0].mxu0
        %3102 = vdwg.mxu0
        %v3103 = vadd.f32 %v2928, %v3095
        %v3104 = vadd.f32 %v2929, %v3100
        %v3105 = vld [vmem:[%s448 + $0x1e0] sm:$0xff]
        %v3106 = vld [vmem:[%s448 + $0x1e8] sm:$0xff]
        %v3107 = vld [vmem:[%s448 + $0x1f0] sm:$0xff]
        %v3108 = vld [vmem:[%s448 + $0x1f8] sm:$0xff]
        %v3110 = vsel %vm487, %v3106, 0
        %v3113 = vsel %vm487, %v3108, 0
        %3115 = vmatprep.subr.mxu0 0.0
        %3116 = vmatpush1.msra.mxu0 %v452
        %3117 = vmatprep.subr.mxu0 0.0
        %3118 = vmatpush1.msra.mxu0 %v453
        %3119 = vmatprep.subr.mxu0 0.0
        %3120 = vmatpush1.msra.mxu0 %v454
        %3121 = vmatprep.subr.mxu0 0.0
        %3122 = vmatpush1.msra.mxu0 %v455
        %3123 = vmatprep.subr.mxu0 0.0
        %3124 = vmatpush1.msra.mxu0 %v456
        %3125 = vmatprep.subr.mxu0 0.0
        %3126 = vmatpush1.msra.mxu0 %v457
        %3127 = vmatprep.subr.mxu0 0.0
        %3128 = vmatpush1.msra.mxu0 %v458
        %3129 = vmatprep.subr.mxu0 0.0
        %3130 = vmatpush1.msra.mxu0 %v459
        %3131 = vmatprep.subr.mxu0 0.0
        %3132 = vmatpush1.msra.mxu0 %v460
        %3133 = vmatprep.subr.mxu0 0.0
        %3134 = vmatpush1.msra.mxu0 %v461
        %3135 = vmatprep.subr.mxu0 0.0
        %3136 = vmatpush1.msra.mxu0 %v462
        %3137 = vmatprep.subr.mxu0 0.0
        %3138 = vmatpush1.msra.mxu0 %v463
        %3139 = vmatprep.subr.mxu0 0.0
        %3140 = vmatpush1.msra.mxu0 %v464
        %3141 = vmatprep.subr.mxu0 0.0
        %3142 = vmatpush1.msra.mxu0 %v465
        %3143 = vmatprep.subr.mxu0 0.0
        %3144 = vmatpush1.msra.mxu0 %v466
        %3145 = vmatprep.subr.mxu0 0.0
        %3146 = vmatpush1.msra.mxu0 %v467
        %3147 = vmatprep.subr.mxu0 0.0
        %3148 = vmatpush1.msra.mxu0 %v468
        %3149 = vmatprep.subr.mxu0 0.0
        %3150 = vmatpush1.msra.mxu0 %v469
        %3151 = vmatprep.subr.mxu0 0.0
        %3152 = vmatpush1.msra.mxu0 %v470
        %3153 = vmatprep.subr.mxu0 0.0
        %3154 = vmatpush1.msra.mxu0 %v471
        %3155 = vmatprep.subr.mxu0 0.0
        %3156 = vmatpush1.msra.mxu0 %v472
        %3157 = vmatprep.subr.mxu0 0.0
        %3158 = vmatpush1.msra.mxu0 %v473
        %3159 = vmatprep.subr.mxu0 0.0
        %3160 = vmatpush1.msra.mxu0 %v474
        %3161 = vmatprep.subr.mxu0 0.0
        %3162 = vmatpush1.msra.mxu0 %v475
        %3163 = vmatprep.subr.mxu0 0.0
        %3164 = vmatpush1.msra.mxu0 0.0
        %3165 = vmatprep.subr.mxu0 0.0
        %3166 = vmatpush1.msra.mxu0 0.0
        %3167 = vmatprep.subr.mxu0 0.0
        %3168 = vmatpush1.msra.mxu0 0.0
        %3169 = vmatprep.subr.mxu0 0.0
        %3170 = vmatpush1.msra.mxu0 0.0
        %3171 = vmatprep.subr.mxu0 0.0
        %3172 = vmatpush1.msra.mxu0 0.0
        %3173 = vmatprep.subr.mxu0 0.0
        %3174 = vmatpush1.msra.mxu0 0.0
        %3175 = vmatprep.subr.mxu0 0.0
        %3176 = vmatpush1.msra.mxu0 0.0
        %3177 = vmatprep.subr.mxu0 0.0
        %3178 = vmatpush1.msra.mxu0 0.0
        %3179 = vmatprep.mubr.f32.mxu0 %v3110
        %3180 = vmatmul.mubr.f32.gmra.mrb[0].mxu0 %v3105
        %v3181 = vpop.f32.mrb[0].mxu0
        %v3182 = vadd.f32 %v485, %v3181
        %v3183 = vpop.f32.mrb[0].mxu0
        %3184 = vmatprep.mubr.f32.mxu0 %v3113
        %3185 = vmatmul.mubr.f32.gmra.mrb[0].mxu0 %v3107
        %v3186 = vpop.f32.mrb[0].mxu0
        %v3187 = vadd.f32 %v485, %v3186
        %v3188 = vpop.f32.mrb[0].mxu0
        %3189 = vdwg.mxu0
        %v3190 = vmax.f32 %v3182, 0.0
        %v3191 = vmax.f32 %v3187, 0.0
        %s3192 = scalar_lea.vmem %s4, 480
        %v3193 = vld [vmem:[%s3192] sm:$0xff]
        %v3194 = vld [vmem:[%s3192 + $0x8] sm:$0xff]
        %v3195 = vld [vmem:[%s3192 + $0x10] sm:$0xff]
        %v3196 = vld [vmem:[%s3192 + $0x18] sm:$0xff]
        %v3198 = vsel %vm667, %v3190, 0
        %v3201 = vsel %vm667, %v3191, 0
        %3203 = vmatprep.subr.mxu0 0.0
        %3204 = vmatpush1.msra.mxu0 %v3193
        %3205 = vmatprep.subr.mxu0 0.0
        %3206 = vmatpush1.msra.mxu0 %v3194
        %3207 = vmatprep.subr.mxu0 0.0
        %3208 = vmatpush1.msra.mxu0 %v3195
        %3209 = vmatprep.subr.mxu0 0.0
        %3210 = vmatpush1.msra.mxu0 %v3196
        %3211 = vmatprep.subr.mxu0 0.0
        %3212 = vmatpush1.msra.mxu0 0.0
        %3213 = vmatprep.subr.mxu0 0.0
        %3214 = vmatpush1.msra.mxu0 0.0
        %3215 = vmatprep.subr.mxu0 0.0
        %3216 = vmatpush1.msra.mxu0 0.0
        %3217 = vmatprep.subr.mxu0 0.0
        %3218 = vmatpush1.msra.mxu0 0.0
        %3219 = vmatprep.subr.mxu0 0.0
        %3220 = vmatpush1.msra.mxu0 0.0
        %3221 = vmatprep.subr.mxu0 0.0
        %3222 = vmatpush1.msra.mxu0 0.0
        %3223 = vmatprep.subr.mxu0 0.0
        %3224 = vmatpush1.msra.mxu0 0.0
        %3225 = vmatprep.subr.mxu0 0.0
        %3226 = vmatpush1.msra.mxu0 0.0
        %3227 = vmatprep.subr.mxu0 0.0
        %3228 = vmatpush1.msra.mxu0 0.0
        %3229 = vmatprep.subr.mxu0 0.0
        %3230 = vmatpush1.msra.mxu0 0.0
        %3231 = vmatprep.subr.mxu0 0.0
        %3232 = vmatpush1.msra.mxu0 0.0
        %3233 = vmatprep.subr.mxu0 0.0
        %3234 = vmatpush1.msra.mxu0 0.0
        %3235 = vmatprep.subr.mxu0 0.0
        %3236 = vmatpush1.msra.mxu0 0.0
        %3237 = vmatprep.subr.mxu0 0.0
        %3238 = vmatpush1.msra.mxu0 0.0
        %3239 = vmatprep.subr.mxu0 0.0
        %3240 = vmatpush1.msra.mxu0 0.0
        %3241 = vmatprep.subr.mxu0 0.0
        %3242 = vmatpush1.msra.mxu0 0.0
        %3243 = vmatprep.subr.mxu0 0.0
        %3244 = vmatpush1.msra.mxu0 0.0
        %3245 = vmatprep.subr.mxu0 0.0
        %3246 = vmatpush1.msra.mxu0 0.0
        %3247 = vmatprep.subr.mxu0 0.0
        %3248 = vmatpush1.msra.mxu0 0.0
        %3249 = vmatprep.subr.mxu0 0.0
        %3250 = vmatpush1.msra.mxu0 0.0
        %3251 = vmatprep.subr.mxu0 0.0
        %3252 = vmatpush1.msra.mxu0 0.0
        %3253 = vmatprep.subr.mxu0 0.0
        %3254 = vmatpush1.msra.mxu0 0.0
        %3255 = vmatprep.subr.mxu0 0.0
        %3256 = vmatpush1.msra.mxu0 0.0
        %3257 = vmatprep.subr.mxu0 0.0
        %3258 = vmatpush1.msra.mxu0 0.0
        %3259 = vmatprep.subr.mxu0 0.0
        %3260 = vmatpush1.msra.mxu0 0.0
        %3261 = vmatprep.subr.mxu0 0.0
        %3262 = vmatpush1.msra.mxu0 0.0
        %3263 = vmatprep.subr.mxu0 0.0
        %3264 = vmatpush1.msra.mxu0 0.0
        %3265 = vmatprep.subr.mxu0 0.0
        %3266 = vmatpush1.msra.mxu0 0.0
        %3267 = vmatprep.mubr.f32.mxu0 0.0
        %3268 = vmatmul.mubr.f32.gmra.mrb[0].mxu0 %v3198
        %v3269 = vpop.f32.mrb[0].mxu0
        %v3270 = vadd.f32 0.0, %v3269
        %v3271 = vpop.f32.mrb[0].mxu0
        %3272 = vmatprep.mubr.f32.mxu0 0.0
        %3273 = vmatmul.mubr.f32.gmra.mrb[0].mxu0 %v3201
        %v3274 = vpop.f32.mrb[0].mxu0
        %v3275 = vadd.f32 0.0, %v3274
        %v3276 = vpop.f32.mrb[0].mxu0
        %3277 = vdwg.mxu0
        %v3278 = vadd.f32 %v3103, %v3270
        %v3279 = vadd.f32 %v3104, %v3275
        %v3280 = vld [vmem:[%s5] sm:$0x1]
        %v3282 = vlaneseq
        %v3283 = vshrl.u32 %v3282, 7
        %v3284 = vsub.s32 0, %v3283
        %v3285 = vrot.slane %v3280, %v3284
        %v3287 = vadd.f32 %v3278, %v3285
        %v3288 = vadd.f32 %v3279, %v3285
        %v3289 = vmax.f32 %v3287, 0.0
        %v3290 = vmax.f32 %v3288, 0.0
        %v3291 = vld [vmem:[%s6] sm:$0xff]
        %v3292 = vld [vmem:[%s6 + $0x8] sm:$0xff]
        %v3293 = vld [vmem:[%s6 + $0x10] sm:$0xff]
        %v3294 = vld [vmem:[%s6 + $0x18] sm:$0xff]
        %v3295 = vld [vmem:[%s6 + $0x20] sm:$0xff]
        %v3296 = vld [vmem:[%s6 + $0x28] sm:$0xff]
        %v3297 = vld [vmem:[%s6 + $0x30] sm:$0xff]
        %v3298 = vld [vmem:[%s6 + $0x38] sm:$0xff]
        %s3299 = scalar_lea.vmem %s6, 64
        %v3300 = vld [vmem:[%s3299] sm:$0xff]
        %v3301 = vld [vmem:[%s3299 + $0x8] sm:$0xff]
        %v3302 = vld [vmem:[%s3299 + $0x10] sm:$0xff]
        %v3303 = vld [vmem:[%s3299 + $0x18] sm:$0xff]
        %v3304 = vld [vmem:[%s3299 + $0x20] sm:$0xff]
        %v3305 = vld [vmem:[%s3299 + $0x28] sm:$0xff]
        %v3306 = vld [vmem:[%s3299 + $0x30] sm:$0xff]
        %v3307 = vld [vmem:[%s3299 + $0x38] sm:$0xff]
        %v3309 = vrot.slane %v3289, 1
        %v3310 = vsel %vm487, %v3309, 0
        %3312 = vmatprep.subr.mxu0 0.0
        %3313 = vmatpush1.msra.mxu0 %v3300
        %3314 = vmatprep.subr.mxu0 0.0
        %3315 = vmatpush1.msra.mxu0 %v3301
        %3316 = vmatprep.subr.mxu0 0.0
        %3317 = vmatpush1.msra.mxu0 %v3302
        %3318 = vmatprep.subr.mxu0 0.0
        %3319 = vmatpush1.msra.mxu0 %v3303
        %3320 = vmatprep.subr.mxu0 0.0
        %3321 = vmatpush1.msra.mxu0 %v3304
        %3322 = vmatprep.subr.mxu0 0.0
        %3323 = vmatpush1.msra.mxu0 %v3305
        %3324 = vmatprep.subr.mxu0 0.0
        %3325 = vmatpush1.msra.mxu0 %v3306
        %3326 = vmatprep.subr.mxu0 0.0
        %3327 = vmatpush1.msra.mxu0 %v3307
        %3328 = vmatprep.subr.mxu0 0.0
        %3329 = vmatpush1.msra.mxu0 0.0
        %3330 = vmatprep.subr.mxu0 0.0
        %3331 = vmatpush1.msra.mxu0 0.0
        %3332 = vmatprep.subr.mxu0 0.0
        %3333 = vmatpush1.msra.mxu0 0.0
        %3334 = vmatprep.subr.mxu0 0.0
        %3335 = vmatpush1.msra.mxu0 0.0
        %3336 = vmatprep.subr.mxu0 0.0
        %3337 = vmatpush1.msra.mxu0 0.0
        %3338 = vmatprep.subr.mxu0 0.0
        %3339 = vmatpush1.msra.mxu0 0.0
        %3340 = vmatprep.subr.mxu0 0.0
        %3341 = vmatpush1.msra.mxu0 0.0
        %3342 = vmatprep.subr.mxu0 0.0
        %3343 = vmatpush1.msra.mxu0 0.0
        %3344 = vmatprep.subr.mxu0 0.0
        %3345 = vmatpush1.msra.mxu0 0.0
        %3346 = vmatprep.subr.mxu0 0.0
        %3347 = vmatpush1.msra.mxu0 0.0
        %3348 = vmatprep.subr.mxu0 0.0
        %3349 = vmatpush1.msra.mxu0 0.0
        %3350 = vmatprep.subr.mxu0 0.0
        %3351 = vmatpush1.msra.mxu0 0.0
        %3352 = vmatprep.subr.mxu0 0.0
        %3353 = vmatpush1.msra.mxu0 0.0
        %3354 = vmatprep.subr.mxu0 0.0
        %3355 = vmatpush1.msra.mxu0 0.0
        %3356 = vmatprep.subr.mxu0 0.0
        %3357 = vmatpush1.msra.mxu0 0.0
        %3358 = vmatprep.subr.mxu0 0.0
        %3359 = vmatpush1.msra.mxu0 0.0
        %3360 = vmatprep.subr.mxu0 0.0
        %3361 = vmatpush1.msra.mxu0 0.0
        %3362 = vmatprep.subr.mxu0 0.0
        %3363 = vmatpush1.msra.mxu0 0.0
        %3364 = vmatprep.subr.mxu0 0.0
        %3365 = vmatpush1.msra.mxu0 0.0
        %3366 = vmatprep.subr.mxu0 0.0
        %3367 = vmatpush1.msra.mxu0 0.0
        %3368 = vmatprep.subr.mxu0 0.0
        %3369 = vmatpush1.msra.mxu0 0.0
        %3370 = vmatprep.subr.mxu0 0.0
        %3371 = vmatpush1.msra.mxu0 0.0
        %3372 = vmatprep.subr.mxu0 0.0
        %3373 = vmatpush1.msra.mxu0 0.0
        %3374 = vmatprep.subr.mxu0 0.0
        %3375 = vmatpush1.msra.mxu0 0.0
        %3376 = vmatprep.mubr.f32.mxu0 0.0
        %3377 = vmatmul.mubr.f32.gmra.mrb[0].mxu0 %v3310
        %v3378 = vpop.f32.mrb[0].mxu0
        %v3379 = vadd.f32 0.0, %v3378
        %v3380 = vpop.f32.mrb[0].mxu0
        %3381 = vdwg.mxu0
        %v3382 = vsel %vm487, %v3289, 0
        %3384 = vmatprep.subr.mxu0 0.0
        %3385 = vmatpush1.msra.mxu0 %v3291
        %3386 = vmatprep.subr.mxu0 0.0
        %3387 = vmatpush1.msra.mxu0 %v3292
        %3388 = vmatprep.subr.mxu0 0.0
        %3389 = vmatpush1.msra.mxu0 %v3293
        %3390 = vmatprep.subr.mxu0 0.0
        %3391 = vmatpush1.msra.mxu0 %v3294
        %3392 = vmatprep.subr.mxu0 0.0
        %3393 = vmatpush1.msra.mxu0 %v3295
        %3394 = vmatprep.subr.mxu0 0.0
        %3395 = vmatpush1.msra.mxu0 %v3296
        %3396 = vmatprep.subr.mxu0 0.0
        %3397 = vmatpush1.msra.mxu0 %v3297
        %3398 = vmatprep.subr.mxu0 0.0
        %3399 = vmatpush1.msra.mxu0 %v3298
        %3400 = vmatprep.subr.mxu0 0.0
        %3401 = vmatpush1.msra.mxu0 0.0
        %3402 = vmatprep.subr.mxu0 0.0
        %3403 = vmatpush1.msra.mxu0 0.0
        %3404 = vmatprep.subr.mxu0 0.0
        %3405 = vmatpush1.msra.mxu0 0.0
        %3406 = vmatprep.subr.mxu0 0.0
        %3407 = vmatpush1.msra.mxu0 0.0
        %3408 = vmatprep.subr.mxu0 0.0
        %3409 = vmatpush1.msra.mxu0 0.0
        %3410 = vmatprep.subr.mxu0 0.0
        %3411 = vmatpush1.msra.mxu0 0.0
        %3412 = vmatprep.subr.mxu0 0.0
        %3413 = vmatpush1.msra.mxu0 0.0
        %3414 = vmatprep.subr.mxu0 0.0
        %3415 = vmatpush1.msra.mxu0 0.0
        %3416 = vmatprep.subr.mxu0 0.0
        %3417 = vmatpush1.msra.mxu0 0.0
        %3418 = vmatprep.subr.mxu0 0.0
        %3419 = vmatpush1.msra.mxu0 0.0
        %3420 = vmatprep.subr.mxu0 0.0
        %3421 = vmatpush1.msra.mxu0 0.0
        %3422 = vmatprep.subr.mxu0 0.0
        %3423 = vmatpush1.msra.mxu0 0.0
        %3424 = vmatprep.subr.mxu0 0.0
        %3425 = vmatpush1.msra.mxu0 0.0
        %3426 = vmatprep.subr.mxu0 0.0
        %3427 = vmatpush1.msra.mxu0 0.0
        %3428 = vmatprep.subr.mxu0 0.0
        %3429 = vmatpush1.msra.mxu0 0.0
        %3430 = vmatprep.subr.mxu0 0.0
        %3431 = vmatpush1.msra.mxu0 0.0
        %3432 = vmatprep.subr.mxu0 0.0
        %3433 = vmatpush1.msra.mxu0 0.0
        %3434 = vmatprep.subr.mxu0 0.0
        %3435 = vmatpush1.msra.mxu0 0.0
        %3436 = vmatprep.subr.mxu0 0.0
        %3437 = vmatpush1.msra.mxu0 0.0
        %3438 = vmatprep.subr.mxu0 0.0
        %3439 = vmatpush1.msra.mxu0 0.0
        %3440 = vmatprep.subr.mxu0 0.0
        %3441 = vmatpush1.msra.mxu0 0.0
        %3442 = vmatprep.subr.mxu0 0.0
        %3443 = vmatpush1.msra.mxu0 0.0
        %3444 = vmatprep.subr.mxu0 0.0
        %3445 = vmatpush1.msra.mxu0 0.0
        %3446 = vmatprep.subr.mxu0 0.0
        %3447 = vmatpush1.msra.mxu0 0.0
        %3448 = vmatprep.mubr.f32.mxu0 0.0
        %3449 = vmatmul.mubr.f32.gmra.mrb[0].mxu0 %v3382
        %v3450 = vpop.f32.mrb[0].mxu0
        %v3451 = vadd.f32 %v3379, %v3450
        %v3452 = vpop.f32.mrb[0].mxu0
        %3453 = vdwg.mxu0
        %s3454 = scalar_lea.vmem %s6, 128
        %v3455 = vld [vmem:[%s3454] sm:$0xff]
        %v3456 = vld [vmem:[%s3454 + $0x8] sm:$0xff]
        %v3457 = vld [vmem:[%s3454 + $0x10] sm:$0xff]
        %v3458 = vld [vmem:[%s3454 + $0x18] sm:$0xff]
        %v3459 = vld [vmem:[%s3454 + $0x20] sm:$0xff]
        %v3460 = vld [vmem:[%s3454 + $0x28] sm:$0xff]
        %v3461 = vld [vmem:[%s3454 + $0x30] sm:$0xff]
        %v3462 = vld [vmem:[%s3454 + $0x38] sm:$0xff]
        %v3463 = vrot.slane %v3289, 2
        %v3464 = vsel %vm487, %v3463, 0
        %3466 = vmatprep.subr.mxu0 0.0
        %3467 = vmatpush1.msra.mxu0 %v3455
        %3468 = vmatprep.subr.mxu0 0.0
        %3469 = vmatpush1.msra.mxu0 %v3456
        %3470 = vmatprep.subr.mxu0 0.0
        %3471 = vmatpush1.msra.mxu0 %v3457
        %3472 = vmatprep.subr.mxu0 0.0
        %3473 = vmatpush1.msra.mxu0 %v3458
        %3474 = vmatprep.subr.mxu0 0.0
        %3475 = vmatpush1.msra.mxu0 %v3459
        %3476 = vmatprep.subr.mxu0 0.0
        %3477 = vmatpush1.msra.mxu0 %v3460
        %3478 = vmatprep.subr.mxu0 0.0
        %3479 = vmatpush1.msra.mxu0 %v3461
        %3480 = vmatprep.subr.mxu0 0.0
        %3481 = vmatpush1.msra.mxu0 %v3462
        %3482 = vmatprep.subr.mxu0 0.0
        %3483 = vmatpush1.msra.mxu0 0.0
        %3484 = vmatprep.subr.mxu0 0.0
        %3485 = vmatpush1.msra.mxu0 0.0
        %3486 = vmatprep.subr.mxu0 0.0
        %3487 = vmatpush1.msra.mxu0 0.0
        %3488 = vmatprep.subr.mxu0 0.0
        %3489 = vmatpush1.msra.mxu0 0.0
        %3490 = vmatprep.subr.mxu0 0.0
        %3491 = vmatpush1.msra.mxu0 0.0
        %3492 = vmatprep.subr.mxu0 0.0
        %3493 = vmatpush1.msra.mxu0 0.0
        %3494 = vmatprep.subr.mxu0 0.0
        %3495 = vmatpush1.msra.mxu0 0.0
        %3496 = vmatprep.subr.mxu0 0.0
        %3497 = vmatpush1.msra.mxu0 0.0
        %3498 = vmatprep.subr.mxu0 0.0
        %3499 = vmatpush1.msra.mxu0 0.0
        %3500 = vmatprep.subr.mxu0 0.0
        %3501 = vmatpush1.msra.mxu0 0.0
        %3502 = vmatprep.subr.mxu0 0.0
        %3503 = vmatpush1.msra.mxu0 0.0
        %3504 = vmatprep.subr.mxu0 0.0
        %3505 = vmatpush1.msra.mxu0 0.0
        %3506 = vmatprep.subr.mxu0 0.0
        %3507 = vmatpush1.msra.mxu0 0.0
        %3508 = vmatprep.subr.mxu0 0.0
        %3509 = vmatpush1.msra.mxu0 0.0
        %3510 = vmatprep.subr.mxu0 0.0
        %3511 = vmatpush1.msra.mxu0 0.0
        %3512 = vmatprep.subr.mxu0 0.0
        %3513 = vmatpush1.msra.mxu0 0.0
        %3514 = vmatprep.subr.mxu0 0.0
        %3515 = vmatpush1.msra.mxu0 0.0
        %3516 = vmatprep.subr.mxu0 0.0
        %3517 = vmatpush1.msra.mxu0 0.0
        %3518 = vmatprep.subr.mxu0 0.0
        %3519 = vmatpush1.msra.mxu0 0.0
        %3520 = vmatprep.subr.mxu0 0.0
        %3521 = vmatpush1.msra.mxu0 0.0
        %3522 = vmatprep.subr.mxu0 0.0
        %3523 = vmatpush1.msra.mxu0 0.0
        %3524 = vmatprep.subr.mxu0 0.0
        %3525 = vmatpush1.msra.mxu0 0.0
        %3526 = vmatprep.subr.mxu0 0.0
        %3527 = vmatpush1.msra.mxu0 0.0
        %3528 = vmatprep.subr.mxu0 0.0
        %3529 = vmatpush1.msra.mxu0 0.0
        %3530 = vmatprep.mubr.f32.mxu0 0.0
        %3531 = vmatmul.mubr.f32.gmra.mrb[0].mxu0 %v3464
        %v3532 = vpop.f32.mrb[0].mxu0
        %v3533 = vadd.f32 0.0, %v3532
        %v3534 = vpop.f32.mrb[0].mxu0
        %3535 = vdwg.mxu0
        %v3536 = vadd.f32 %v3451, %v3533
        %s3537 = scalar_lea.vmem %s6, 192
        %v3538 = vld [vmem:[%s3537] sm:$0xff]
        %v3539 = vld [vmem:[%s3537 + $0x8] sm:$0xff]
        %v3540 = vld [vmem:[%s3537 + $0x10] sm:$0xff]
        %v3541 = vld [vmem:[%s3537 + $0x18] sm:$0xff]
        %v3542 = vld [vmem:[%s3537 + $0x20] sm:$0xff]
        %v3543 = vld [vmem:[%s3537 + $0x28] sm:$0xff]
        %v3544 = vld [vmem:[%s3537 + $0x30] sm:$0xff]
        %v3545 = vld [vmem:[%s3537 + $0x38] sm:$0xff]
        %v3546 = vrot.slane %v3289, 3
        %v3547 = vsel %vm487, %v3546, 0
        %3549 = vmatprep.subr.mxu0 0.0
        %3550 = vmatpush1.msra.mxu0 %v3538
        %3551 = vmatprep.subr.mxu0 0.0
        %3552 = vmatpush1.msra.mxu0 %v3539
        %3553 = vmatprep.subr.mxu0 0.0
        %3554 = vmatpush1.msra.mxu0 %v3540
        %3555 = vmatprep.subr.mxu0 0.0
        %3556 = vmatpush1.msra.mxu0 %v3541
        %3557 = vmatprep.subr.mxu0 0.0
        %3558 = vmatpush1.msra.mxu0 %v3542
        %3559 = vmatprep.subr.mxu0 0.0
        %3560 = vmatpush1.msra.mxu0 %v3543
        %3561 = vmatprep.subr.mxu0 0.0
        %3562 = vmatpush1.msra.mxu0 %v3544
        %3563 = vmatprep.subr.mxu0 0.0
        %3564 = vmatpush1.msra.mxu0 %v3545
        %3565 = vmatprep.subr.mxu0 0.0
        %3566 = vmatpush1.msra.mxu0 0.0
        %3567 = vmatprep.subr.mxu0 0.0
        %3568 = vmatpush1.msra.mxu0 0.0
        %3569 = vmatprep.subr.mxu0 0.0
        %3570 = vmatpush1.msra.mxu0 0.0
        %3571 = vmatprep.subr.mxu0 0.0
        %3572 = vmatpush1.msra.mxu0 0.0
        %3573 = vmatprep.subr.mxu0 0.0
        %3574 = vmatpush1.msra.mxu0 0.0
        %3575 = vmatprep.subr.mxu0 0.0
        %3576 = vmatpush1.msra.mxu0 0.0
        %3577 = vmatprep.subr.mxu0 0.0
        %3578 = vmatpush1.msra.mxu0 0.0
        %3579 = vmatprep.subr.mxu0 0.0
        %3580 = vmatpush1.msra.mxu0 0.0
        %3581 = vmatprep.subr.mxu0 0.0
        %3582 = vmatpush1.msra.mxu0 0.0
        %3583 = vmatprep.subr.mxu0 0.0
        %3584 = vmatpush1.msra.mxu0 0.0
        %3585 = vmatprep.subr.mxu0 0.0
        %3586 = vmatpush1.msra.mxu0 0.0
        %3587 = vmatprep.subr.mxu0 0.0
        %3588 = vmatpush1.msra.mxu0 0.0
        %3589 = vmatprep.subr.mxu0 0.0
        %3590 = vmatpush1.msra.mxu0 0.0
        %3591 = vmatprep.subr.mxu0 0.0
        %3592 = vmatpush1.msra.mxu0 0.0
        %3593 = vmatprep.subr.mxu0 0.0
        %3594 = vmatpush1.msra.mxu0 0.0
        %3595 = vmatprep.subr.mxu0 0.0
        %3596 = vmatpush1.msra.mxu0 0.0
        %3597 = vmatprep.subr.mxu0 0.0
        %3598 = vmatpush1.msra.mxu0 0.0
        %3599 = vmatprep.subr.mxu0 0.0
        %3600 = vmatpush1.msra.mxu0 0.0
        %3601 = vmatprep.subr.mxu0 0.0
        %3602 = vmatpush1.msra.mxu0 0.0
        %3603 = vmatprep.subr.mxu0 0.0
        %3604 = vmatpush1.msra.mxu0 0.0
        %3605 = vmatprep.subr.mxu0 0.0
        %3606 = vmatpush1.msra.mxu0 0.0
        %3607 = vmatprep.subr.mxu0 0.0
        %3608 = vmatpush1.msra.mxu0 0.0
        %3609 = vmatprep.subr.mxu0 0.0
        %3610 = vmatpush1.msra.mxu0 0.0
        %3611 = vmatprep.subr.mxu0 0.0
        %3612 = vmatpush1.msra.mxu0 0.0
        %3613 = vmatprep.mubr.f32.mxu0 0.0
        %3614 = vmatmul.mubr.f32.gmra.mrb[0].mxu0 %v3547
        %v3615 = vpop.f32.mrb[0].mxu0
        %v3616 = vadd.f32 0.0, %v3615
        %v3617 = vpop.f32.mrb[0].mxu0
        %3618 = vdwg.mxu0
        %v3619 = vadd.f32 %v3536, %v3616
        %s3620 = scalar_lea.vmem %s6, 256
        %v3621 = vld [vmem:[%s3620] sm:$0xff]
        %v3622 = vld [vmem:[%s3620 + $0x8] sm:$0xff]
        %v3623 = vld [vmem:[%s3620 + $0x10] sm:$0xff]
        %v3624 = vld [vmem:[%s3620 + $0x18] sm:$0xff]
        %v3625 = vld [vmem:[%s3620 + $0x20] sm:$0xff]
        %v3626 = vld [vmem:[%s3620 + $0x28] sm:$0xff]
        %v3627 = vld [vmem:[%s3620 + $0x30] sm:$0xff]
        %v3628 = vld [vmem:[%s3620 + $0x38] sm:$0xff]
        %v3629 = vrot.slane %v3289, 4
        %v3630 = vsel %vm487, %v3629, 0
        %3632 = vmatprep.subr.mxu0 0.0
        %3633 = vmatpush1.msra.mxu0 %v3621
        %3634 = vmatprep.subr.mxu0 0.0
        %3635 = vmatpush1.msra.mxu0 %v3622
        %3636 = vmatprep.subr.mxu0 0.0
        %3637 = vmatpush1.msra.mxu0 %v3623
        %3638 = vmatprep.subr.mxu0 0.0
        %3639 = vmatpush1.msra.mxu0 %v3624
        %3640 = vmatprep.subr.mxu0 0.0
        %3641 = vmatpush1.msra.mxu0 %v3625
        %3642 = vmatprep.subr.mxu0 0.0
        %3643 = vmatpush1.msra.mxu0 %v3626
        %3644 = vmatprep.subr.mxu0 0.0
        %3645 = vmatpush1.msra.mxu0 %v3627
        %3646 = vmatprep.subr.mxu0 0.0
        %3647 = vmatpush1.msra.mxu0 %v3628
        %3648 = vmatprep.subr.mxu0 0.0
        %3649 = vmatpush1.msra.mxu0 0.0
        %3650 = vmatprep.subr.mxu0 0.0
        %3651 = vmatpush1.msra.mxu0 0.0
        %3652 = vmatprep.subr.mxu0 0.0
        %3653 = vmatpush1.msra.mxu0 0.0
        %3654 = vmatprep.subr.mxu0 0.0
        %3655 = vmatpush1.msra.mxu0 0.0
        %3656 = vmatprep.subr.mxu0 0.0
        %3657 = vmatpush1.msra.mxu0 0.0
        %3658 = vmatprep.subr.mxu0 0.0
        %3659 = vmatpush1.msra.mxu0 0.0
        %3660 = vmatprep.subr.mxu0 0.0
        %3661 = vmatpush1.msra.mxu0 0.0
        %3662 = vmatprep.subr.mxu0 0.0
        %3663 = vmatpush1.msra.mxu0 0.0
        %3664 = vmatprep.subr.mxu0 0.0
        %3665 = vmatpush1.msra.mxu0 0.0
        %3666 = vmatprep.subr.mxu0 0.0
        %3667 = vmatpush1.msra.mxu0 0.0
        %3668 = vmatprep.subr.mxu0 0.0
        %3669 = vmatpush1.msra.mxu0 0.0
        %3670 = vmatprep.subr.mxu0 0.0
        %3671 = vmatpush1.msra.mxu0 0.0
        %3672 = vmatprep.subr.mxu0 0.0
        %3673 = vmatpush1.msra.mxu0 0.0
        %3674 = vmatprep.subr.mxu0 0.0
        %3675 = vmatpush1.msra.mxu0 0.0
        %3676 = vmatprep.subr.mxu0 0.0
        %3677 = vmatpush1.msra.mxu0 0.0
        %3678 = vmatprep.subr.mxu0 0.0
        %3679 = vmatpush1.msra.mxu0 0.0
        %3680 = vmatprep.subr.mxu0 0.0
        %3681 = vmatpush1.msra.mxu0 0.0
        %3682 = vmatprep.subr.mxu0 0.0
        %3683 = vmatpush1.msra.mxu0 0.0
        %3684 = vmatprep.subr.mxu0 0.0
        %3685 = vmatpush1.msra.mxu0 0.0
        %3686 = vmatprep.subr.mxu0 0.0
        %3687 = vmatpush1.msra.mxu0 0.0
        %3688 = vmatprep.subr.mxu0 0.0
        %3689 = vmatpush1.msra.mxu0 0.0
        %3690 = vmatprep.subr.mxu0 0.0
        %3691 = vmatpush1.msra.mxu0 0.0
        %3692 = vmatprep.subr.mxu0 0.0
        %3693 = vmatpush1.msra.mxu0 0.0
        %3694 = vmatprep.subr.mxu0 0.0
        %3695 = vmatpush1.msra.mxu0 0.0
        %3696 = vmatprep.mubr.f32.mxu0 0.0
        %3697 = vmatmul.mubr.f32.gmra.mrb[0].mxu0 %v3630
        %v3698 = vpop.f32.mrb[0].mxu0
        %v3699 = vadd.f32 0.0, %v3698
        %v3700 = vpop.f32.mrb[0].mxu0
        %3701 = vdwg.mxu0
        %v3702 = vadd.f32 %v3619, %v3699
        %s3703 = scalar_lea.vmem %s6, 320
        %v3704 = vld [vmem:[%s3703] sm:$0xff]
        %v3705 = vld [vmem:[%s3703 + $0x8] sm:$0xff]
        %v3706 = vld [vmem:[%s3703 + $0x10] sm:$0xff]
        %v3707 = vld [vmem:[%s3703 + $0x18] sm:$0xff]
        %v3708 = vld [vmem:[%s3703 + $0x20] sm:$0xff]
        %v3709 = vld [vmem:[%s3703 + $0x28] sm:$0xff]
        %v3710 = vld [vmem:[%s3703 + $0x30] sm:$0xff]
        %v3711 = vld [vmem:[%s3703 + $0x38] sm:$0xff]
        %v3712 = vrot.slane %v3289, 5
        %v3713 = vsel %vm487, %v3712, 0
        %3715 = vmatprep.subr.mxu0 0.0
        %3716 = vmatpush1.msra.mxu0 %v3704
        %3717 = vmatprep.subr.mxu0 0.0
        %3718 = vmatpush1.msra.mxu0 %v3705
        %3719 = vmatprep.subr.mxu0 0.0
        %3720 = vmatpush1.msra.mxu0 %v3706
        %3721 = vmatprep.subr.mxu0 0.0
        %3722 = vmatpush1.msra.mxu0 %v3707
        %3723 = vmatprep.subr.mxu0 0.0
        %3724 = vmatpush1.msra.mxu0 %v3708
        %3725 = vmatprep.subr.mxu0 0.0
        %3726 = vmatpush1.msra.mxu0 %v3709
        %3727 = vmatprep.subr.mxu0 0.0
        %3728 = vmatpush1.msra.mxu0 %v3710
        %3729 = vmatprep.subr.mxu0 0.0
        %3730 = vmatpush1.msra.mxu0 %v3711
        %3731 = vmatprep.subr.mxu0 0.0
        %3732 = vmatpush1.msra.mxu0 0.0
        %3733 = vmatprep.subr.mxu0 0.0
        %3734 = vmatpush1.msra.mxu0 0.0
        %3735 = vmatprep.subr.mxu0 0.0
        %3736 = vmatpush1.msra.mxu0 0.0
        %3737 = vmatprep.subr.mxu0 0.0
        %3738 = vmatpush1.msra.mxu0 0.0
        %3739 = vmatprep.subr.mxu0 0.0
        %3740 = vmatpush1.msra.mxu0 0.0
        %3741 = vmatprep.subr.mxu0 0.0
        %3742 = vmatpush1.msra.mxu0 0.0
        %3743 = vmatprep.subr.mxu0 0.0
        %3744 = vmatpush1.msra.mxu0 0.0
        %3745 = vmatprep.subr.mxu0 0.0
        %3746 = vmatpush1.msra.mxu0 0.0
        %3747 = vmatprep.subr.mxu0 0.0
        %3748 = vmatpush1.msra.mxu0 0.0
        %3749 = vmatprep.subr.mxu0 0.0
        %3750 = vmatpush1.msra.mxu0 0.0
        %3751 = vmatprep.subr.mxu0 0.0
        %3752 = vmatpush1.msra.mxu0 0.0
        %3753 = vmatprep.subr.mxu0 0.0
        %3754 = vmatpush1.msra.mxu0 0.0
        %3755 = vmatprep.subr.mxu0 0.0
        %3756 = vmatpush1.msra.mxu0 0.0
        %3757 = vmatprep.subr.mxu0 0.0
        %3758 = vmatpush1.msra.mxu0 0.0
        %3759 = vmatprep.subr.mxu0 0.0
        %3760 = vmatpush1.msra.mxu0 0.0
        %3761 = vmatprep.subr.mxu0 0.0
        %3762 = vmatpush1.msra.mxu0 0.0
        %3763 = vmatprep.subr.mxu0 0.0
        %3764 = vmatpush1.msra.mxu0 0.0
        %3765 = vmatprep.subr.mxu0 0.0
        %3766 = vmatpush1.msra.mxu0 0.0
        %3767 = vmatprep.subr.mxu0 0.0
        %3768 = vmatpush1.msra.mxu0 0.0
        %3769 = vmatprep.subr.mxu0 0.0
        %3770 = vmatpush1.msra.mxu0 0.0
        %3771 = vmatprep.subr.mxu0 0.0
        %3772 = vmatpush1.msra.mxu0 0.0
        %3773 = vmatprep.subr.mxu0 0.0
        %3774 = vmatpush1.msra.mxu0 0.0
        %3775 = vmatprep.subr.mxu0 0.0
        %3776 = vmatpush1.msra.mxu0 0.0
        %3777 = vmatprep.subr.mxu0 0.0
        %3778 = vmatpush1.msra.mxu0 0.0
        %3779 = vmatprep.mubr.f32.mxu0 0.0
        %3780 = vmatmul.mubr.f32.gmra.mrb[0].mxu0 %v3713
        %v3781 = vpop.f32.mrb[0].mxu0
        %v3782 = vadd.f32 0.0, %v3781
        %v3783 = vpop.f32.mrb[0].mxu0
        %3784 = vdwg.mxu0
        %v3785 = vadd.f32 %v3702, %v3782
        %s3786 = scalar_lea.vmem %s6, 384
        %v3787 = vld [vmem:[%s3786] sm:$0xff]
        %v3788 = vld [vmem:[%s3786 + $0x8] sm:$0xff]
        %v3789 = vld [vmem:[%s3786 + $0x10] sm:$0xff]
        %v3790 = vld [vmem:[%s3786 + $0x18] sm:$0xff]
        %v3791 = vld [vmem:[%s3786 + $0x20] sm:$0xff]
        %v3792 = vld [vmem:[%s3786 + $0x28] sm:$0xff]
        %v3793 = vld [vmem:[%s3786 + $0x30] sm:$0xff]
        %v3794 = vld [vmem:[%s3786 + $0x38] sm:$0xff]
        %v3795 = vrot.slane %v3289, 6
        %v3796 = vsel %vm487, %v3795, 0
        %3798 = vmatprep.subr.mxu0 0.0
        %3799 = vmatpush1.msra.mxu0 %v3787
        %3800 = vmatprep.subr.mxu0 0.0
        %3801 = vmatpush1.msra.mxu0 %v3788
        %3802 = vmatprep.subr.mxu0 0.0
        %3803 = vmatpush1.msra.mxu0 %v3789
        %3804 = vmatprep.subr.mxu0 0.0
        %3805 = vmatpush1.msra.mxu0 %v3790
        %3806 = vmatprep.subr.mxu0 0.0
        %3807 = vmatpush1.msra.mxu0 %v3791
        %3808 = vmatprep.subr.mxu0 0.0
        %3809 = vmatpush1.msra.mxu0 %v3792
        %3810 = vmatprep.subr.mxu0 0.0
        %3811 = vmatpush1.msra.mxu0 %v3793
        %3812 = vmatprep.subr.mxu0 0.0
        %3813 = vmatpush1.msra.mxu0 %v3794
        %3814 = vmatprep.subr.mxu0 0.0
        %3815 = vmatpush1.msra.mxu0 0.0
        %3816 = vmatprep.subr.mxu0 0.0
        %3817 = vmatpush1.msra.mxu0 0.0
        %3818 = vmatprep.subr.mxu0 0.0
        %3819 = vmatpush1.msra.mxu0 0.0
        %3820 = vmatprep.subr.mxu0 0.0
        %3821 = vmatpush1.msra.mxu0 0.0
        %3822 = vmatprep.subr.mxu0 0.0
        %3823 = vmatpush1.msra.mxu0 0.0
        %3824 = vmatprep.subr.mxu0 0.0
        %3825 = vmatpush1.msra.mxu0 0.0
        %3826 = vmatprep.subr.mxu0 0.0
        %3827 = vmatpush1.msra.mxu0 0.0
        %3828 = vmatprep.subr.mxu0 0.0
        %3829 = vmatpush1.msra.mxu0 0.0
        %3830 = vmatprep.subr.mxu0 0.0
        %3831 = vmatpush1.msra.mxu0 0.0
        %3832 = vmatprep.subr.mxu0 0.0
        %3833 = vmatpush1.msra.mxu0 0.0
        %3834 = vmatprep.subr.mxu0 0.0
        %3835 = vmatpush1.msra.mxu0 0.0
        %3836 = vmatprep.subr.mxu0 0.0
        %3837 = vmatpush1.msra.mxu0 0.0
        %3838 = vmatprep.subr.mxu0 0.0
        %3839 = vmatpush1.msra.mxu0 0.0
        %3840 = vmatprep.subr.mxu0 0.0
        %3841 = vmatpush1.msra.mxu0 0.0
        %3842 = vmatprep.subr.mxu0 0.0
        %3843 = vmatpush1.msra.mxu0 0.0
        %3844 = vmatprep.subr.mxu0 0.0
        %3845 = vmatpush1.msra.mxu0 0.0
        %3846 = vmatprep.subr.mxu0 0.0
        %3847 = vmatpush1.msra.mxu0 0.0
        %3848 = vmatprep.subr.mxu0 0.0
        %3849 = vmatpush1.msra.mxu0 0.0
        %3850 = vmatprep.subr.mxu0 0.0
        %3851 = vmatpush1.msra.mxu0 0.0
        %3852 = vmatprep.subr.mxu0 0.0
        %3853 = vmatpush1.msra.mxu0 0.0
        %3854 = vmatprep.subr.mxu0 0.0
        %3855 = vmatpush1.msra.mxu0 0.0
        %3856 = vmatprep.subr.mxu0 0.0
        %3857 = vmatpush1.msra.mxu0 0.0
        %3858 = vmatprep.subr.mxu0 0.0
        %3859 = vmatpush1.msra.mxu0 0.0
        %3860 = vmatprep.subr.mxu0 0.0
        %3861 = vmatpush1.msra.mxu0 0.0
        %3862 = vmatprep.mubr.f32.mxu0 0.0
        %3863 = vmatmul.mubr.f32.gmra.mrb[0].mxu0 %v3796
        %v3864 = vpop.f32.mrb[0].mxu0
        %v3865 = vadd.f32 0.0, %v3864
        %v3866 = vpop.f32.mrb[0].mxu0
        %3867 = vdwg.mxu0
        %v3868 = vadd.f32 %v3785, %v3865
        %s3869 = scalar_lea.vmem %s6, 448
        %v3870 = vld [vmem:[%s3869] sm:$0xff]
        %v3871 = vld [vmem:[%s3869 + $0x8] sm:$0xff]
        %v3872 = vld [vmem:[%s3869 + $0x10] sm:$0xff]
        %v3873 = vld [vmem:[%s3869 + $0x18] sm:$0xff]
        %v3874 = vld [vmem:[%s3869 + $0x20] sm:$0xff]
        %v3875 = vld [vmem:[%s3869 + $0x28] sm:$0xff]
        %v3876 = vld [vmem:[%s3869 + $0x30] sm:$0xff]
        %v3877 = vld [vmem:[%s3869 + $0x38] sm:$0xff]
        %v3878 = vrot.slane %v3289, 7
        %v3879 = vsel %vm487, %v3878, 0
        %3881 = vmatprep.subr.mxu0 0.0
        %3882 = vmatpush1.msra.mxu0 %v3870
        %3883 = vmatprep.subr.mxu0 0.0
        %3884 = vmatpush1.msra.mxu0 %v3871
        %3885 = vmatprep.subr.mxu0 0.0
        %3886 = vmatpush1.msra.mxu0 %v3872
        %3887 = vmatprep.subr.mxu0 0.0
        %3888 = vmatpush1.msra.mxu0 %v3873
        %3889 = vmatprep.subr.mxu0 0.0
        %3890 = vmatpush1.msra.mxu0 %v3874
        %3891 = vmatprep.subr.mxu0 0.0
        %3892 = vmatpush1.msra.mxu0 %v3875
        %3893 = vmatprep.subr.mxu0 0.0
        %3894 = vmatpush1.msra.mxu0 %v3876
        %3895 = vmatprep.subr.mxu0 0.0
        %3896 = vmatpush1.msra.mxu0 %v3877
        %3897 = vmatprep.subr.mxu0 0.0
        %3898 = vmatpush1.msra.mxu0 0.0
        %3899 = vmatprep.subr.mxu0 0.0
        %3900 = vmatpush1.msra.mxu0 0.0
        %3901 = vmatprep.subr.mxu0 0.0
        %3902 = vmatpush1.msra.mxu0 0.0
        %3903 = vmatprep.subr.mxu0 0.0
        %3904 = vmatpush1.msra.mxu0 0.0
        %3905 = vmatprep.subr.mxu0 0.0
        %3906 = vmatpush1.msra.mxu0 0.0
        %3907 = vmatprep.subr.mxu0 0.0
        %3908 = vmatpush1.msra.mxu0 0.0
        %3909 = vmatprep.subr.mxu0 0.0
        %3910 = vmatpush1.msra.mxu0 0.0
        %3911 = vmatprep.subr.mxu0 0.0
        %3912 = vmatpush1.msra.mxu0 0.0
        %3913 = vmatprep.subr.mxu0 0.0
        %3914 = vmatpush1.msra.mxu0 0.0
        %3915 = vmatprep.subr.mxu0 0.0
        %3916 = vmatpush1.msra.mxu0 0.0
        %3917 = vmatprep.subr.mxu0 0.0
        %3918 = vmatpush1.msra.mxu0 0.0
        %3919 = vmatprep.subr.mxu0 0.0
        %3920 = vmatpush1.msra.mxu0 0.0
        %3921 = vmatprep.subr.mxu0 0.0
        %3922 = vmatpush1.msra.mxu0 0.0
        %3923 = vmatprep.subr.mxu0 0.0
        %3924 = vmatpush1.msra.mxu0 0.0
        %3925 = vmatprep.subr.mxu0 0.0
        %3926 = vmatpush1.msra.mxu0 0.0
        %3927 = vmatprep.subr.mxu0 0.0
        %3928 = vmatpush1.msra.mxu0 0.0
        %3929 = vmatprep.subr.mxu0 0.0
        %3930 = vmatpush1.msra.mxu0 0.0
        %3931 = vmatprep.subr.mxu0 0.0
        %3932 = vmatpush1.msra.mxu0 0.0
        %3933 = vmatprep.subr.mxu0 0.0
        %3934 = vmatpush1.msra.mxu0 0.0
        %3935 = vmatprep.subr.mxu0 0.0
        %3936 = vmatpush1.msra.mxu0 0.0
        %3937 = vmatprep.subr.mxu0 0.0
        %3938 = vmatpush1.msra.mxu0 0.0
        %3939 = vmatprep.subr.mxu0 0.0
        %3940 = vmatpush1.msra.mxu0 0.0
        %3941 = vmatprep.subr.mxu0 0.0
        %3942 = vmatpush1.msra.mxu0 0.0
        %3943 = vmatprep.subr.mxu0 0.0
        %3944 = vmatpush1.msra.mxu0 0.0
        %3945 = vmatprep.mubr.f32.mxu0 0.0
        %3946 = vmatmul.mubr.f32.gmra.mrb[0].mxu0 %v3879
        %v3947 = vpop.f32.mrb[0].mxu0
        %v3948 = vadd.f32 0.0, %v3947
        %v3949 = vpop.f32.mrb[0].mxu0
        %3950 = vdwg.mxu0
        %v3951 = vadd.f32 %v3868, %v3948
        %s3952 = scalar_lea.vmem %s6, 512
        %v3953 = vld [vmem:[%s3952] sm:$0xff]
        %v3954 = vld [vmem:[%s3952 + $0x8] sm:$0xff]
        %v3955 = vld [vmem:[%s3952 + $0x10] sm:$0xff]
        %v3956 = vld [vmem:[%s3952 + $0x18] sm:$0xff]
        %v3957 = vld [vmem:[%s3952 + $0x20] sm:$0xff]
        %v3958 = vld [vmem:[%s3952 + $0x28] sm:$0xff]
        %v3959 = vld [vmem:[%s3952 + $0x30] sm:$0xff]
        %v3960 = vld [vmem:[%s3952 + $0x38] sm:$0xff]
        %v3962 = vsel %vm487, %v3290, 0
        %3964 = vmatprep.subr.mxu0 0.0
        %3965 = vmatpush1.msra.mxu0 %v3953
        %3966 = vmatprep.subr.mxu0 0.0
        %3967 = vmatpush1.msra.mxu0 %v3954
        %3968 = vmatprep.subr.mxu0 0.0
        %3969 = vmatpush1.msra.mxu0 %v3955
        %3970 = vmatprep.subr.mxu0 0.0
        %3971 = vmatpush1.msra.mxu0 %v3956
        %3972 = vmatprep.subr.mxu0 0.0
        %3973 = vmatpush1.msra.mxu0 %v3957
        %3974 = vmatprep.subr.mxu0 0.0
        %3975 = vmatpush1.msra.mxu0 %v3958
        %3976 = vmatprep.subr.mxu0 0.0
        %3977 = vmatpush1.msra.mxu0 %v3959
        %3978 = vmatprep.subr.mxu0 0.0
        %3979 = vmatpush1.msra.mxu0 %v3960
        %3980 = vmatprep.subr.mxu0 0.0
        %3981 = vmatpush1.msra.mxu0 0.0
        %3982 = vmatprep.subr.mxu0 0.0
        %3983 = vmatpush1.msra.mxu0 0.0
        %3984 = vmatprep.subr.mxu0 0.0
        %3985 = vmatpush1.msra.mxu0 0.0
        %3986 = vmatprep.subr.mxu0 0.0
        %3987 = vmatpush1.msra.mxu0 0.0
        %3988 = vmatprep.subr.mxu0 0.0
        %3989 = vmatpush1.msra.mxu0 0.0
        %3990 = vmatprep.subr.mxu0 0.0
        %3991 = vmatpush1.msra.mxu0 0.0
        %3992 = vmatprep.subr.mxu0 0.0
        %3993 = vmatpush1.msra.mxu0 0.0
        %3994 = vmatprep.subr.mxu0 0.0
        %3995 = vmatpush1.msra.mxu0 0.0
        %3996 = vmatprep.subr.mxu0 0.0
        %3997 = vmatpush1.msra.mxu0 0.0
        %3998 = vmatprep.subr.mxu0 0.0
        %3999 = vmatpush1.msra.mxu0 0.0
        %4000 = vmatprep.subr.mxu0 0.0
        %4001 = vmatpush1.msra.mxu0 0.0
        %4002 = vmatprep.subr.mxu0 0.0
        %4003 = vmatpush1.msra.mxu0 0.0
        %4004 = vmatprep.subr.mxu0 0.0
        %4005 = vmatpush1.msra.mxu0 0.0
        %4006 = vmatprep.subr.mxu0 0.0
        %4007 = vmatpush1.msra.mxu0 0.0
        %4008 = vmatprep.subr.mxu0 0.0
        %4009 = vmatpush1.msra.mxu0 0.0
        %4010 = vmatprep.subr.mxu0 0.0
        %4011 = vmatpush1.msra.mxu0 0.0
        %4012 = vmatprep.subr.mxu0 0.0
        %4013 = vmatpush1.msra.mxu0 0.0
        %4014 = vmatprep.subr.mxu0 0.0
        %4015 = vmatpush1.msra.mxu0 0.0
        %4016 = vmatprep.subr.mxu0 0.0
        %4017 = vmatpush1.msra.mxu0 0.0
        %4018 = vmatprep.subr.mxu0 0.0
        %4019 = vmatpush1.msra.mxu0 0.0
        %4020 = vmatprep.subr.mxu0 0.0
        %4021 = vmatpush1.msra.mxu0 0.0
        %4022 = vmatprep.subr.mxu0 0.0
        %4023 = vmatpush1.msra.mxu0 0.0
        %4024 = vmatprep.subr.mxu0 0.0
        %4025 = vmatpush1.msra.mxu0 0.0
        %4026 = vmatprep.subr.mxu0 0.0
        %4027 = vmatpush1.msra.mxu0 0.0
        %4028 = vmatprep.mubr.f32.mxu0 0.0
        %4029 = vmatmul.mubr.f32.gmra.mrb[0].mxu0 %v3962
        %v4030 = vpop.f32.mrb[0].mxu0
        %v4031 = vadd.f32 0.0, %v4030
        %v4032 = vpop.f32.mrb[0].mxu0
        %4033 = vdwg.mxu0
        %v4034 = vadd.f32 %v3951, %v4031
        %v4035 = vld [vmem:[%s7] sm:$0x1]
        %v4036 = vadd.f32 %v4034, %v4035
        %v4037 = vmax.f32 %v4036, 0.0
        %v4038 = vld [vmem:[%s451] sm:$0x1]
        %v4039 = vld [vmem:[%s9] sm:$0xff]
        %v4040 = vld [vmem:[%s9 + $0x8] sm:$0xff]
        %v4041 = vld [vmem:[%s9 + $0x10] sm:$0xff]
        %v4042 = vld [vmem:[%s9 + $0x18] sm:$0xff]
        %v4043 = vld [vmem:[%s8] sm:$0xff]
        %v4044 = vld [vmem:[%s8 + $0x8] sm:$0xff]
        %v4045 = vld [vmem:[%s8 + $0x10] sm:$0xff]
        %v4046 = vld [vmem:[%s8 + $0x18] sm:$0xff]
        %v4047 = vld [vmem:[%s8 + $0x20] sm:$0xff]
        %v4048 = vld [vmem:[%s8 + $0x28] sm:$0xff]
        %v4049 = vld [vmem:[%s8 + $0x30] sm:$0xff]
        %v4050 = vld [vmem:[%s8 + $0x38] sm:$0xff]
        %v4051 = vld [vmem:[%s8 + $0x40] sm:$0xff]
        %v4052 = vld [vmem:[%s8 + $0x48] sm:$0xff]
        %v4053 = vld [vmem:[%s8 + $0x50] sm:$0xff]
        %v4054 = vld [vmem:[%s8 + $0x58] sm:$0xff]
        %v4055 = vld [vmem:[%s8 + $0x60] sm:$0xff]
        %v4056 = vld [vmem:[%s8 + $0x68] sm:$0xff]
        %v4057 = vld [vmem:[%s8 + $0x70] sm:$0xff]
        %v4058 = vld [vmem:[%s8 + $0x78] sm:$0xff]
        %v4059 = vld [vmem:[%s8 + $0x80] sm:$0xff]
        %v4060 = vld [vmem:[%s8 + $0x88] sm:$0xff]
        %v4061 = vld [vmem:[%s8 + $0x90] sm:$0xff]
        %v4062 = vld [vmem:[%s8 + $0x98] sm:$0xff]
        %v4063 = vld [vmem:[%s8 + $0xa0] sm:$0xff]
        %v4064 = vld [vmem:[%s8 + $0xa8] sm:$0xff]
        %v4065 = vld [vmem:[%s8 + $0xb0] sm:$0xff]
        %v4066 = vld [vmem:[%s8 + $0xb8] sm:$0xff]
        %v4067 = vld [vmem:[%s8 + $0xc0] sm:$0xff]
        %v4068 = vld [vmem:[%s8 + $0xc8] sm:$0xff]
        %v4069 = vld [vmem:[%s8 + $0xd0] sm:$0xff]
        %v4070 = vld [vmem:[%s8 + $0xd8] sm:$0xff]
        %v4071 = vld [vmem:[%s8 + $0xe0] sm:$0xff]
        %v4072 = vld [vmem:[%s8 + $0xe8] sm:$0xff]
        %v4073 = vld [vmem:[%s8 + $0xf0] sm:$0xff]
        %v4074 = vld [vmem:[%s8 + $0xf8] sm:$0xff]
        %v4076 = vsel %vm487, %v4037, 0
        %4078 = vmatprep.subr.mxu0 %v4044
        %4079 = vmatpush1.msra.mxu0 %v4043
        %4080 = vmatprep.subr.mxu0 %v4048
        %4081 = vmatpush1.msra.mxu0 %v4047
        %4082 = vmatprep.subr.mxu0 %v4052
        %4083 = vmatpush1.msra.mxu0 %v4051
        %4084 = vmatprep.subr.mxu0 %v4056
        %4085 = vmatpush1.msra.mxu0 %v4055
        %4086 = vmatprep.subr.mxu0 %v4060
        %4087 = vmatpush1.msra.mxu0 %v4059
        %4088 = vmatprep.subr.mxu0 %v4064
        %4089 = vmatpush1.msra.mxu0 %v4063
        %4090 = vmatprep.subr.mxu0 %v4068
        %4091 = vmatpush1.msra.mxu0 %v4067
        %4092 = vmatprep.subr.mxu0 %v4072
        %4093 = vmatpush1.msra.mxu0 %v4071
        %4094 = vmatprep.subr.mxu0 0.0
        %4095 = vmatpush1.msra.mxu0 0.0
        %4096 = vmatprep.subr.mxu0 0.0
        %4097 = vmatpush1.msra.mxu0 0.0
        %4098 = vmatprep.subr.mxu0 0.0
        %4099 = vmatpush1.msra.mxu0 0.0
        %4100 = vmatprep.subr.mxu0 0.0
        %4101 = vmatpush1.msra.mxu0 0.0
        %4102 = vmatprep.subr.mxu0 0.0
        %4103 = vmatpush1.msra.mxu0 0.0
        %4104 = vmatprep.subr.mxu0 0.0
        %4105 = vmatpush1.msra.mxu0 0.0
        %4106 = vmatprep.subr.mxu0 0.0
        %4107 = vmatpush1.msra.mxu0 0.0
        %4108 = vmatprep.subr.mxu0 0.0
        %4109 = vmatpush1.msra.mxu0 0.0
        %4110 = vmatprep.subr.mxu0 0.0
        %4111 = vmatpush1.msra.mxu0 0.0
        %4112 = vmatprep.subr.mxu0 0.0
        %4113 = vmatpush1.msra.mxu0 0.0
        %4114 = vmatprep.subr.mxu0 0.0
        %4115 = vmatpush1.msra.mxu0 0.0
        %4116 = vmatprep.subr.mxu0 0.0
        %4117 = vmatpush1.msra.mxu0 0.0
        %4118 = vmatprep.subr.mxu0 0.0
        %4119 = vmatpush1.msra.mxu0 0.0
        %4120 = vmatprep.subr.mxu0 0.0
        %4121 = vmatpush1.msra.mxu0 0.0
        %4122 = vmatprep.subr.mxu0 0.0
        %4123 = vmatpush1.msra.mxu0 0.0
        %4124 = vmatprep.subr.mxu0 0.0
        %4125 = vmatpush1.msra.mxu0 0.0
        %4126 = vmatprep.subr.mxu0 0.0
        %4127 = vmatpush1.msra.mxu0 0.0
        %4128 = vmatprep.subr.mxu0 0.0
        %4129 = vmatpush1.msra.mxu0 0.0
        %4130 = vmatprep.subr.mxu0 0.0
        %4131 = vmatpush1.msra.mxu0 0.0
        %4132 = vmatprep.subr.mxu0 0.0
        %4133 = vmatpush1.msra.mxu0 0.0
        %4134 = vmatprep.subr.mxu0 0.0
        %4135 = vmatpush1.msra.mxu0 0.0
        %4136 = vmatprep.subr.mxu0 0.0
        %4137 = vmatpush1.msra.mxu0 0.0
        %4138 = vmatprep.subr.mxu0 0.0
        %4139 = vmatpush1.msra.mxu0 0.0
        %4140 = vmatprep.subr.mxu0 0.0
        %4141 = vmatpush1.msra.mxu0 0.0
        %4142 = vmatprep.mubr.f32.mxu0 0.0
        %4143 = vmatmul.mubr.f32.gmra.mrb[0].mxu0 %v4076
        %v4144 = vpop.f32.mrb[0].mxu0
        %v4145 = vadd.f32 0.0, %v4144
        %v4146 = vpop.f32.mrb[0].mxu0
        %v4147 = vadd.f32 0.0, %v4146
        %4148 = vdwg.mxu0
        %4149 = vmatprep.subr.mxu0 %v4046
        %4150 = vmatpush1.msra.mxu0 %v4045
        %4151 = vmatprep.subr.mxu0 %v4050
        %4152 = vmatpush1.msra.mxu0 %v4049
        %4153 = vmatprep.subr.mxu0 %v4054
        %4154 = vmatpush1.msra.mxu0 %v4053
        %4155 = vmatprep.subr.mxu0 %v4058
        %4156 = vmatpush1.msra.mxu0 %v4057
        %4157 = vmatprep.subr.mxu0 %v4062
        %4158 = vmatpush1.msra.mxu0 %v4061
        %4159 = vmatprep.subr.mxu0 %v4066
        %4160 = vmatpush1.msra.mxu0 %v4065
        %4161 = vmatprep.subr.mxu0 %v4070
        %4162 = vmatpush1.msra.mxu0 %v4069
        %4163 = vmatprep.subr.mxu0 %v4074
        %4164 = vmatpush1.msra.mxu0 %v4073
        %4165 = vmatprep.subr.mxu0 0.0
        %4166 = vmatpush1.msra.mxu0 0.0
        %4167 = vmatprep.subr.mxu0 0.0
        %4168 = vmatpush1.msra.mxu0 0.0
        %4169 = vmatprep.subr.mxu0 0.0
        %4170 = vmatpush1.msra.mxu0 0.0
        %4171 = vmatprep.subr.mxu0 0.0
        %4172 = vmatpush1.msra.mxu0 0.0
        %4173 = vmatprep.subr.mxu0 0.0
        %4174 = vmatpush1.msra.mxu0 0.0
        %4175 = vmatprep.subr.mxu0 0.0
        %4176 = vmatpush1.msra.mxu0 0.0
        %4177 = vmatprep.subr.mxu0 0.0
        %4178 = vmatpush1.msra.mxu0 0.0
        %4179 = vmatprep.subr.mxu0 0.0
        %4180 = vmatpush1.msra.mxu0 0.0
        %4181 = vmatprep.subr.mxu0 0.0
        %4182 = vmatpush1.msra.mxu0 0.0
        %4183 = vmatprep.subr.mxu0 0.0
        %4184 = vmatpush1.msra.mxu0 0.0
        %4185 = vmatprep.subr.mxu0 0.0
        %4186 = vmatpush1.msra.mxu0 0.0
        %4187 = vmatprep.subr.mxu0 0.0
        %4188 = vmatpush1.msra.mxu0 0.0
        %4189 = vmatprep.subr.mxu0 0.0
        %4190 = vmatpush1.msra.mxu0 0.0
        %4191 = vmatprep.subr.mxu0 0.0
        %4192 = vmatpush1.msra.mxu0 0.0
        %4193 = vmatprep.subr.mxu0 0.0
        %4194 = vmatpush1.msra.mxu0 0.0
        %4195 = vmatprep.subr.mxu0 0.0
        %4196 = vmatpush1.msra.mxu0 0.0
        %4197 = vmatprep.subr.mxu0 0.0
        %4198 = vmatpush1.msra.mxu0 0.0
        %4199 = vmatprep.subr.mxu0 0.0
        %4200 = vmatpush1.msra.mxu0 0.0
        %4201 = vmatprep.subr.mxu0 0.0
        %4202 = vmatpush1.msra.mxu0 0.0
        %4203 = vmatprep.subr.mxu0 0.0
        %4204 = vmatpush1.msra.mxu0 0.0
        %4205 = vmatprep.subr.mxu0 0.0
        %4206 = vmatpush1.msra.mxu0 0.0
        %4207 = vmatprep.subr.mxu0 0.0
        %4208 = vmatpush1.msra.mxu0 0.0
        %4209 = vmatprep.subr.mxu0 0.0
        %4210 = vmatpush1.msra.mxu0 0.0
        %4211 = vmatprep.subr.mxu0 0.0
        %4212 = vmatpush1.msra.mxu0 0.0
        %4213 = vmatprep.mubr.f32.mxu0 0.0
        %4214 = vmatmul.mubr.f32.gmra.mrb[0].mxu0 %v4076
        %v4215 = vpop.f32.mrb[0].mxu0
        %v4216 = vadd.f32 0.0, %v4215
        %v4217 = vpop.f32.mrb[0].mxu0
        %v4218 = vadd.f32 0.0, %v4217
        %4219 = vdwg.mxu0
        %vm4220 = vcmask 64512
        %v4222 = vsel %vm4220, %v4038, 0
        %4224 = vmatprep.subr.mxu0 %v4040
        %4225 = vmatpush1.msra.mxu0 %v4039
        %4226 = vmatprep.subr.mxu0 0.0
        %4227 = vmatpush1.msra.mxu0 0.0
        %4228 = vmatprep.subr.mxu0 0.0
        %4229 = vmatpush1.msra.mxu0 0.0
        %4230 = vmatprep.subr.mxu0 0.0
        %4231 = vmatpush1.msra.mxu0 0.0
        %4232 = vmatprep.subr.mxu0 0.0
        %4233 = vmatpush1.msra.mxu0 0.0
        %4234 = vmatprep.subr.mxu0 0.0
        %4235 = vmatpush1.msra.mxu0 0.0
        %4236 = vmatprep.subr.mxu0 0.0
        %4237 = vmatpush1.msra.mxu0 0.0
        %4238 = vmatprep.subr.mxu0 0.0
        %4239 = vmatpush1.msra.mxu0 0.0
        %4240 = vmatprep.subr.mxu0 0.0
        %4241 = vmatpush1.msra.mxu0 0.0
        %4242 = vmatprep.subr.mxu0 0.0
        %4243 = vmatpush1.msra.mxu0 0.0
        %4244 = vmatprep.subr.mxu0 0.0
        %4245 = vmatpush1.msra.mxu0 0.0
        %4246 = vmatprep.subr.mxu0 0.0
        %4247 = vmatpush1.msra.mxu0 0.0
        %4248 = vmatprep.subr.mxu0 0.0
        %4249 = vmatpush1.msra.mxu0 0.0
        %4250 = vmatprep.subr.mxu0 0.0
        %4251 = vmatpush1.msra.mxu0 0.0
        %4252 = vmatprep.subr.mxu0 0.0
        %4253 = vmatpush1.msra.mxu0 0.0
        %4254 = vmatprep.subr.mxu0 0.0
        %4255 = vmatpush1.msra.mxu0 0.0
        %4256 = vmatprep.subr.mxu0 0.0
        %4257 = vmatpush1.msra.mxu0 0.0
        %4258 = vmatprep.subr.mxu0 0.0
        %4259 = vmatpush1.msra.mxu0 0.0
        %4260 = vmatprep.subr.mxu0 0.0
        %4261 = vmatpush1.msra.mxu0 0.0
        %4262 = vmatprep.subr.mxu0 0.0
        %4263 = vmatpush1.msra.mxu0 0.0
        %4264 = vmatprep.subr.mxu0 0.0
        %4265 = vmatpush1.msra.mxu0 0.0
        %4266 = vmatprep.subr.mxu0 0.0
        %4267 = vmatpush1.msra.mxu0 0.0
        %4268 = vmatprep.subr.mxu0 0.0
        %4269 = vmatpush1.msra.mxu0 0.0
        %4270 = vmatprep.subr.mxu0 0.0
        %4271 = vmatpush1.msra.mxu0 0.0
        %4272 = vmatprep.subr.mxu0 0.0
        %4273 = vmatpush1.msra.mxu0 0.0
        %4274 = vmatprep.subr.mxu0 0.0
        %4275 = vmatpush1.msra.mxu0 0.0
        %4276 = vmatprep.subr.mxu0 0.0
        %4277 = vmatpush1.msra.mxu0 0.0
        %4278 = vmatprep.subr.mxu0 0.0
        %4279 = vmatpush1.msra.mxu0 0.0
        %4280 = vmatprep.subr.mxu0 0.0
        %4281 = vmatpush1.msra.mxu0 0.0
        %4282 = vmatprep.subr.mxu0 0.0
        %4283 = vmatpush1.msra.mxu0 0.0
        %4284 = vmatprep.subr.mxu0 0.0
        %4285 = vmatpush1.msra.mxu0 0.0
        %4286 = vmatprep.subr.mxu0 0.0
        %4287 = vmatpush1.msra.mxu0 0.0
        %4288 = vmatprep.mubr.f32.mxu0 0.0
        %4289 = vmatmul.mubr.f32.gmra.mrb[0].mxu0 %v4222
        %v4290 = vpop.f32.mrb[0].mxu0
        %v4291 = vadd.f32 %v4145, %v4290
        %v4292 = vpop.f32.mrb[0].mxu0
        %v4293 = vadd.f32 %v4147, %v4292
        %4294 = vdwg.mxu0
        %4295 = vmatprep.subr.mxu0 %v4042
        %4296 = vmatpush1.msra.mxu0 %v4041
        %4297 = vmatprep.subr.mxu0 0.0
        %4298 = vmatpush1.msra.mxu0 0.0
        %4299 = vmatprep.subr.mxu0 0.0
        %4300 = vmatpush1.msra.mxu0 0.0
        %4301 = vmatprep.subr.mxu0 0.0
        %4302 = vmatpush1.msra.mxu0 0.0
        %4303 = vmatprep.subr.mxu0 0.0
        %4304 = vmatpush1.msra.mxu0 0.0
        %4305 = vmatprep.subr.mxu0 0.0
        %4306 = vmatpush1.msra.mxu0 0.0
        %4307 = vmatprep.subr.mxu0 0.0
        %4308 = vmatpush1.msra.mxu0 0.0
        %4309 = vmatprep.subr.mxu0 0.0
        %4310 = vmatpush1.msra.mxu0 0.0
        %4311 = vmatprep.subr.mxu0 0.0
        %4312 = vmatpush1.msra.mxu0 0.0
        %4313 = vmatprep.subr.mxu0 0.0
        %4314 = vmatpush1.msra.mxu0 0.0
        %4315 = vmatprep.subr.mxu0 0.0
        %4316 = vmatpush1.msra.mxu0 0.0
        %4317 = vmatprep.subr.mxu0 0.0
        %4318 = vmatpush1.msra.mxu0 0.0
        %4319 = vmatprep.subr.mxu0 0.0
        %4320 = vmatpush1.msra.mxu0 0.0
        %4321 = vmatprep.subr.mxu0 0.0
        %4322 = vmatpush1.msra.mxu0 0.0
        %4323 = vmatprep.subr.mxu0 0.0
        %4324 = vmatpush1.msra.mxu0 0.0
        %4325 = vmatprep.subr.mxu0 0.0
        %4326 = vmatpush1.msra.mxu0 0.0
        %4327 = vmatprep.subr.mxu0 0.0
        %4328 = vmatpush1.msra.mxu0 0.0
        %4329 = vmatprep.subr.mxu0 0.0
        %4330 = vmatpush1.msra.mxu0 0.0
        %4331 = vmatprep.subr.mxu0 0.0
        %4332 = vmatpush1.msra.mxu0 0.0
        %4333 = vmatprep.subr.mxu0 0.0
        %4334 = vmatpush1.msra.mxu0 0.0
        %4335 = vmatprep.subr.mxu0 0.0
        %4336 = vmatpush1.msra.mxu0 0.0
        %4337 = vmatprep.subr.mxu0 0.0
        %4338 = vmatpush1.msra.mxu0 0.0
        %4339 = vmatprep.subr.mxu0 0.0
        %4340 = vmatpush1.msra.mxu0 0.0
        %4341 = vmatprep.subr.mxu0 0.0
        %4342 = vmatpush1.msra.mxu0 0.0
        %4343 = vmatprep.subr.mxu0 0.0
        %4344 = vmatpush1.msra.mxu0 0.0
        %4345 = vmatprep.subr.mxu0 0.0
        %4346 = vmatpush1.msra.mxu0 0.0
        %4347 = vmatprep.subr.mxu0 0.0
        %4348 = vmatpush1.msra.mxu0 0.0
        %4349 = vmatprep.subr.mxu0 0.0
        %4350 = vmatpush1.msra.mxu0 0.0
        %4351 = vmatprep.subr.mxu0 0.0
        %4352 = vmatpush1.msra.mxu0 0.0
        %4353 = vmatprep.subr.mxu0 0.0
        %4354 = vmatpush1.msra.mxu0 0.0
        %4355 = vmatprep.subr.mxu0 0.0
        %4356 = vmatpush1.msra.mxu0 0.0
        %4357 = vmatprep.subr.mxu0 0.0
        %4358 = vmatpush1.msra.mxu0 0.0
        %4359 = vmatprep.mubr.f32.mxu0 0.0
        %4360 = vmatmul.mubr.f32.gmra.mrb[0].mxu0 %v4222
        %v4361 = vpop.f32.mrb[0].mxu0
        %v4362 = vadd.f32 %v4216, %v4361
        %v4363 = vpop.f32.mrb[0].mxu0
        %v4364 = vadd.f32 %v4218, %v4363
        %4365 = vdwg.mxu0
        %v4366 = vld [vmem:[%s10] sm:$0xf]
        %v4368 = vlaneseq
        %v4369 = vshrl.u32 %v4368, 7
        %v4370 = vsub.s32 0, %v4369
        %v4371 = vrot.slane %v4366, %v4370
        %v4372 = vlaneseq
        %v4373 = vshrl.u32 %v4372, 7
        %v4374 = vsub.s32 1, %v4373
        %v4375 = vrot.slane %v4366, %v4374
        %v4376 = vlaneseq
        %v4377 = vshrl.u32 %v4376, 7
        %v4378 = vsub.s32 2, %v4377
        %v4379 = vrot.slane %v4366, %v4378
        %v4380 = vlaneseq
        %v4381 = vshrl.u32 %v4380, 7
        %v4382 = vsub.s32 3, %v4381
        %v4383 = vrot.slane %v4366, %v4382
        %v4388 = vadd.f32 %v4291, %v4371
        %v4389 = vadd.f32 %v4293, %v4375
        %v4390 = vadd.f32 %v4362, %v4379
        %v4391 = vadd.f32 %v4364, %v4383
        %v4392 = vmax.f32 %v4388, 0.0
        %v4393 = vmax.f32 %v4389, 0.0
        %v4394 = vmax.f32 %v4390, 0.0
        %v4395 = vmax.f32 %v4391, 0.0
        %v4396 = vld [vmem:[%s11] sm:$0xff]
        %v4397 = vld [vmem:[%s11 + $0x8] sm:$0xff]
        %v4398 = vld [vmem:[%s11 + $0x10] sm:$0xff]
        %v4399 = vld [vmem:[%s11 + $0x18] sm:$0xff]
        %v4400 = vld [vmem:[%s11 + $0x20] sm:$0xff]
        %v4401 = vld [vmem:[%s11 + $0x28] sm:$0xff]
        %v4402 = vld [vmem:[%s11 + $0x30] sm:$0xff]
        %v4403 = vld [vmem:[%s11 + $0x38] sm:$0xff]
        %v4404 = vld [vmem:[%s11 + $0x40] sm:$0xff]
        %v4405 = vld [vmem:[%s11 + $0x48] sm:$0xff]
        %v4406 = vld [vmem:[%s11 + $0x50] sm:$0xff]
        %v4407 = vld [vmem:[%s11 + $0x58] sm:$0xff]
        %v4408 = vld [vmem:[%s11 + $0x60] sm:$0xff]
        %v4409 = vld [vmem:[%s11 + $0x68] sm:$0xff]
        %v4410 = vld [vmem:[%s11 + $0x70] sm:$0xff]
        %v4411 = vld [vmem:[%s11 + $0x78] sm:$0xff]
        %v4412 = vld [vmem:[%s11 + $0x80] sm:$0xff]
        %v4413 = vld [vmem:[%s11 + $0x88] sm:$0xff]
        %v4414 = vld [vmem:[%s11 + $0x90] sm:$0xff]
        %v4415 = vld [vmem:[%s11 + $0x98] sm:$0xff]
        %v4416 = vld [vmem:[%s11 + $0xa0] sm:$0xff]
        %v4417 = vld [vmem:[%s11 + $0xa8] sm:$0xff]
        %v4418 = vld [vmem:[%s11 + $0xb0] sm:$0xff]
        %v4419 = vld [vmem:[%s11 + $0xb8] sm:$0xff]
        %v4420 = vld [vmem:[%s11 + $0xc0] sm:$0xff]
        %v4421 = vld [vmem:[%s11 + $0xc8] sm:$0xff]
        %v4422 = vld [vmem:[%s11 + $0xd0] sm:$0xff]
        %v4423 = vld [vmem:[%s11 + $0xd8] sm:$0xff]
        %v4424 = vld [vmem:[%s11 + $0xe0] sm:$0xff]
        %v4425 = vld [vmem:[%s11 + $0xe8] sm:$0xff]
        %v4426 = vld [vmem:[%s11 + $0xf0] sm:$0xff]
        %v4427 = vld [vmem:[%s11 + $0xf8] sm:$0xff]
        %v4428 = vld [vmem:[%s11 + $0x100] sm:$0xff]
        %v4429 = vld [vmem:[%s11 + $0x108] sm:$0xff]
        %v4430 = vld [vmem:[%s11 + $0x110] sm:$0xff]
        %v4431 = vld [vmem:[%s11 + $0x118] sm:$0xff]
        %v4432 = vld [vmem:[%s11 + $0x120] sm:$0xff]
        %v4433 = vld [vmem:[%s11 + $0x128] sm:$0xff]
        %v4434 = vld [vmem:[%s11 + $0x130] sm:$0xff]
        %v4435 = vld [vmem:[%s11 + $0x138] sm:$0xff]
        %v4436 = vld [vmem:[%s11 + $0x140] sm:$0xff]
        %v4437 = vld [vmem:[%s11 + $0x148] sm:$0xff]
        %v4438 = vld [vmem:[%s11 + $0x150] sm:$0xff]
        %v4439 = vld [vmem:[%s11 + $0x158] sm:$0xff]
        %v4440 = vld [vmem:[%s11 + $0x160] sm:$0xff]
        %v4441 = vld [vmem:[%s11 + $0x168] sm:$0xff]
        %v4442 = vld [vmem:[%s11 + $0x170] sm:$0xff]
        %v4443 = vld [vmem:[%s11 + $0x178] sm:$0xff]
        %v4444 = vld [vmem:[%s11 + $0x180] sm:$0xff]
        %v4445 = vld [vmem:[%s11 + $0x188] sm:$0xff]
        %v4446 = vld [vmem:[%s11 + $0x190] sm:$0xff]
        %v4447 = vld [vmem:[%s11 + $0x198] sm:$0xff]
        %v4448 = vld [vmem:[%s11 + $0x1a0] sm:$0xff]
        %v4449 = vld [vmem:[%s11 + $0x1a8] sm:$0xff]
        %v4450 = vld [vmem:[%s11 + $0x1b0] sm:$0xff]
        %v4451 = vld [vmem:[%s11 + $0x1b8] sm:$0xff]
        %v4452 = vld [vmem:[%s11 + $0x1c0] sm:$0xff]
        %v4453 = vld [vmem:[%s11 + $0x1c8] sm:$0xff]
        %v4454 = vld [vmem:[%s11 + $0x1d0] sm:$0xff]
        %v4455 = vld [vmem:[%s11 + $0x1d8] sm:$0xff]
        %v4456 = vld [vmem:[%s11 + $0x1e0] sm:$0xff]
        %v4457 = vld [vmem:[%s11 + $0x1e8] sm:$0xff]
        %v4458 = vld [vmem:[%s11 + $0x1f0] sm:$0xff]
        %v4459 = vld [vmem:[%s11 + $0x1f8] sm:$0xff]
        %v4460 = vld [vmem:[%s12] sm:$0x1]
        %4461 = vmatprep.subr.mxu0 0.0
        %4462 = vmatpush1.msra.mxu0 %v4396
        %4463 = vmatprep.subr.mxu0 0.0
        %4464 = vmatpush1.msra.mxu0 %v4397
        %4465 = vmatprep.subr.mxu0 0.0
        %4466 = vmatpush1.msra.mxu0 %v4398
        %4467 = vmatprep.subr.mxu0 0.0
        %4468 = vmatpush1.msra.mxu0 %v4399
        %4469 = vmatprep.subr.mxu0 0.0
        %4470 = vmatpush1.msra.mxu0 %v4400
        %4471 = vmatprep.subr.mxu0 0.0
        %4472 = vmatpush1.msra.mxu0 %v4401
        %4473 = vmatprep.subr.mxu0 0.0
        %4474 = vmatpush1.msra.mxu0 %v4402
        %4475 = vmatprep.subr.mxu0 0.0
        %4476 = vmatpush1.msra.mxu0 %v4403
        %4477 = vmatprep.subr.mxu0 0.0
        %4478 = vmatpush1.msra.mxu0 %v4404
        %4479 = vmatprep.subr.mxu0 0.0
        %4480 = vmatpush1.msra.mxu0 %v4405
        %4481 = vmatprep.subr.mxu0 0.0
        %4482 = vmatpush1.msra.mxu0 %v4406
        %4483 = vmatprep.subr.mxu0 0.0
        %4484 = vmatpush1.msra.mxu0 %v4407
        %4485 = vmatprep.subr.mxu0 0.0
        %4486 = vmatpush1.msra.mxu0 %v4408
        %4487 = vmatprep.subr.mxu0 0.0
        %4488 = vmatpush1.msra.mxu0 %v4409
        %4489 = vmatprep.subr.mxu0 0.0
        %4490 = vmatpush1.msra.mxu0 %v4410
        %4491 = vmatprep.subr.mxu0 0.0
        %4492 = vmatpush1.msra.mxu0 %v4411
        %4493 = vmatprep.subr.mxu0 0.0
        %4494 = vmatpush1.msra.mxu0 %v4412
        %4495 = vmatprep.subr.mxu0 0.0
        %4496 = vmatpush1.msra.mxu0 %v4413
        %4497 = vmatprep.subr.mxu0 0.0
        %4498 = vmatpush1.msra.mxu0 %v4414
        %4499 = vmatprep.subr.mxu0 0.0
        %4500 = vmatpush1.msra.mxu0 %v4415
        %4501 = vmatprep.subr.mxu0 0.0
        %4502 = vmatpush1.msra.mxu0 %v4416
        %4503 = vmatprep.subr.mxu0 0.0
        %4504 = vmatpush1.msra.mxu0 %v4417
        %4505 = vmatprep.subr.mxu0 0.0
        %4506 = vmatpush1.msra.mxu0 %v4418
        %4507 = vmatprep.subr.mxu0 0.0
        %4508 = vmatpush1.msra.mxu0 %v4419
        %4509 = vmatprep.subr.mxu0 0.0
        %4510 = vmatpush1.msra.mxu0 %v4420
        %4511 = vmatprep.subr.mxu0 0.0
        %4512 = vmatpush1.msra.mxu0 %v4421
        %4513 = vmatprep.subr.mxu0 0.0
        %4514 = vmatpush1.msra.mxu0 %v4422
        %4515 = vmatprep.subr.mxu0 0.0
        %4516 = vmatpush1.msra.mxu0 %v4423
        %4517 = vmatprep.subr.mxu0 0.0
        %4518 = vmatpush1.msra.mxu0 %v4424
        %4519 = vmatprep.subr.mxu0 0.0
        %4520 = vmatpush1.msra.mxu0 %v4425
        %4521 = vmatprep.subr.mxu0 0.0
        %4522 = vmatpush1.msra.mxu0 %v4426
        %4523 = vmatprep.subr.mxu0 0.0
        %4524 = vmatpush1.msra.mxu0 %v4427
        %4525 = vmatprep.mubr.f32.mxu0 %v4393
        %4526 = vmatmul.mubr.f32.gmra.mrb[0].mxu0 %v4392
        %v4527 = vpop.f32.mrb[0].mxu0
        %v4528 = vadd.f32 %v4460, %v4527
        %v4529 = vpop.f32.mrb[0].mxu0
        %4530 = vdwg.mxu0
        %4531 = vmatprep.subr.mxu0 0.0
        %4532 = vmatpush1.msra.mxu0 %v4428
        %4533 = vmatprep.subr.mxu0 0.0
        %4534 = vmatpush1.msra.mxu0 %v4429
        %4535 = vmatprep.subr.mxu0 0.0
        %4536 = vmatpush1.msra.mxu0 %v4430
        %4537 = vmatprep.subr.mxu0 0.0
        %4538 = vmatpush1.msra.mxu0 %v4431
        %4539 = vmatprep.subr.mxu0 0.0
        %4540 = vmatpush1.msra.mxu0 %v4432
        %4541 = vmatprep.subr.mxu0 0.0
        %4542 = vmatpush1.msra.mxu0 %v4433
        %4543 = vmatprep.subr.mxu0 0.0
        %4544 = vmatpush1.msra.mxu0 %v4434
        %4545 = vmatprep.subr.mxu0 0.0
        %4546 = vmatpush1.msra.mxu0 %v4435
        %4547 = vmatprep.subr.mxu0 0.0
        %4548 = vmatpush1.msra.mxu0 %v4436
        %4549 = vmatprep.subr.mxu0 0.0
        %4550 = vmatpush1.msra.mxu0 %v4437
        %4551 = vmatprep.subr.mxu0 0.0
        %4552 = vmatpush1.msra.mxu0 %v4438
        %4553 = vmatprep.subr.mxu0 0.0
        %4554 = vmatpush1.msra.mxu0 %v4439
        %4555 = vmatprep.subr.mxu0 0.0
        %4556 = vmatpush1.msra.mxu0 %v4440
        %4557 = vmatprep.subr.mxu0 0.0
        %4558 = vmatpush1.msra.mxu0 %v4441
        %4559 = vmatprep.subr.mxu0 0.0
        %4560 = vmatpush1.msra.mxu0 %v4442
        %4561 = vmatprep.subr.mxu0 0.0
        %4562 = vmatpush1.msra.mxu0 %v4443
        %4563 = vmatprep.subr.mxu0 0.0
        %4564 = vmatpush1.msra.mxu0 %v4444
        %4565 = vmatprep.subr.mxu0 0.0
        %4566 = vmatpush1.msra.mxu0 %v4445
        %4567 = vmatprep.subr.mxu0 0.0
        %4568 = vmatpush1.msra.mxu0 %v4446
        %4569 = vmatprep.subr.mxu0 0.0
        %4570 = vmatpush1.msra.mxu0 %v4447
        %4571 = vmatprep.subr.mxu0 0.0
        %4572 = vmatpush1.msra.mxu0 %v4448
        %4573 = vmatprep.subr.mxu0 0.0
        %4574 = vmatpush1.msra.mxu0 %v4449
        %4575 = vmatprep.subr.mxu0 0.0
        %4576 = vmatpush1.msra.mxu0 %v4450
        %4577 = vmatprep.subr.mxu0 0.0
        %4578 = vmatpush1.msra.mxu0 %v4451
        %4579 = vmatprep.subr.mxu0 0.0
        %4580 = vmatpush1.msra.mxu0 %v4452
        %4581 = vmatprep.subr.mxu0 0.0
        %4582 = vmatpush1.msra.mxu0 %v4453
        %4583 = vmatprep.subr.mxu0 0.0
        %4584 = vmatpush1.msra.mxu0 %v4454
        %4585 = vmatprep.subr.mxu0 0.0
        %4586 = vmatpush1.msra.mxu0 %v4455
        %4587 = vmatprep.subr.mxu0 0.0
        %4588 = vmatpush1.msra.mxu0 %v4456
        %4589 = vmatprep.subr.mxu0 0.0
        %4590 = vmatpush1.msra.mxu0 %v4457
        %4591 = vmatprep.subr.mxu0 0.0
        %4592 = vmatpush1.msra.mxu0 %v4458
        %4593 = vmatprep.subr.mxu0 0.0
        %4594 = vmatpush1.msra.mxu0 %v4459
        %4595 = vmatprep.mubr.f32.mxu0 %v4395
        %4596 = vmatmul.mubr.f32.gmra.mrb[0].mxu0 %v4394
        %v4597 = vpop.f32.mrb[0].mxu0
        %v4598 = vadd.f32 %v4528, %v4597
        %v4599 = vpop.f32.mrb[0].mxu0
        %4600 = vdwg.mxu0
        %4601 = vst [vmem:[%s443] sm:$0x1] %v4598
        %s4602 = sand.u32 %s318, 1
        %s4603 = scalar_lea.sflag [#allocation3], %s4602
        %s4604 = sand.u32 %s318, 1
        %s4605 = scalar_lea.vmem [#allocation2], %s4604
        // Predicated region
        $region73: #{dqn_forward.1} parent=71 // pred_check
          %p4606 = pneg %p328
        $region74: #{dqn_forward.1} parent=71 // pred_check_branch
          %4608 = sbr.rel (%p4606) target = $region76
        $region75: #{dqn_forward.1} parent=71 // pred_region
          %s4610 = ssub.s32 16, 16
          %4611 = vsyncadd %s4603, %s4610
          %s4612 = smul.addr %s27, 16
          %s4613 = scalar_lea.hbm %s13, %s4612
          %s4615 = sshll.u32 %s4605, 4
          %s4616 = int_to_ptr.vmem [resolvable:$true] %s4615
          %4618 = dma.vmem_to_hbm [thread:$0]  %s4616, 16, %s4613, %s4603
        $region76: #{dqn_forward.1} parent=71 // pred_fallthru
          _
      $region72: #{dqn_forward.1} parent=5 // pred_fallthru
        _
      %p4619 = scmp.le.s32.totalorder 2, %s22
      // Predicated region
      $region77: #{dqn_forward.1} parent=5 // pred_check
        %p4620 = pneg %p4619
      $region78: #{dqn_forward.1} parent=5 // pred_check_branch
        %4622 = sbr.rel (%p4620) target = $region80
      $region79: #{dqn_forward.1} parent=5 // pred_region
        %s4623 = ssub.s32 %s22, 2
        // Predicated region
        $region81: #{dqn_forward.1} parent=79 // pred_check
          %p4624 = pneg %p334
        $region82: #{dqn_forward.1} parent=79 // pred_check_branch
          %4626 = sbr.rel (%p4624) target = $region84
        $region83: #{dqn_forward.1} parent=79 // pred_region
          %s4627 = sand.u32 %s319, 1
          %s4628 = scalar_lea.sflag [#allocation3], %s4627
          %s4629 = sand.u32 %s319, 1
          %s4630 = scalar_lea.vmem [#allocation2], %s4629
          %4631 = dma.done %s4628, 16
        $region84: #{dqn_forward.1} parent=79 // pred_fallthru
          _
      $region80: #{dqn_forward.1} parent=5 // pred_fallthru
        _
    $region6: #{dqn_forward.1} parent=1 // loop_footer
      %s26 = sadd.s32 1, %s22
    $region7: #{dqn_forward.1} parent=1 // loop_footer_branch
      %21 = sbr.rel target = $region3
    $region8: #{dqn_forward.1} parent=1 // loop_exit
      _
    %4632 = vsyncpa [#allocation3], 1
    %s4633 = scalar_lea.sflag [#allocation3], 1
    %4634 = vsyncpa %s4633, 1

</llo_original>
